<compile_context>
chip_gen: v6e
topology: v6e:2x2x1
jax: 0.10.0
libtpu: 0.0.40
codegen_flags: <defaults>
</compile_context>

<pallas_src>
import jax
import jax.numpy as jnp
from jax import lax
from jax.experimental import pallas as pl
from jax.experimental.pallas import tpu as pltpu

NUM_HEADS = 8
NEG_BIG = -1e30   # additive key-padding bias; masking math stays in f32.


def _bert_heads_kernel(
    seq_ref, amask_ref, s1_ref, s2_ref, dvalid_ref, emask_ref, kbias_ref,
    hasev_ref,
    clsW_ref, clsb_ref,
    maxW_ref, maxb_ref,
    feW1_ref, feb1_ref, feg_ref, febt_ref, feW2_ref, feb2_ref,
    diffW_ref, diffb_ref,
    wqkvh_ref, bqkvh_ref, woh_ref, bo_ref,
    evW_ref, evb_ref,
    c1Wa_ref, c1Wb_ref, c1Wc_ref, c1Wd_ref, c1We_ref, c1b_ref,
    c2W_ref, c2b_ref, c3W_ref, c3b_ref,
    out_ref,
):
    f32 = jnp.float32
    seq = seq_ref[...]                         # [tb, S, H]  (bf16)
    tb, S, H = seq.shape
    cdt = seq.dtype                            # MXU input dtype (bf16)
    NH = wqkvh_ref.shape[0]
    hdp = woh_ref.shape[1]                     # lane-padded head dim (multiple of 128)
    hd = H // NH                               # real head dim (for the softmax scale)

    amask = amask_ref[...]                     # [tb, S, 1] f32, 1 = real token
    emask = emask_ref[...]                     # [tb, S, 1] f32, 1 = event token

    # ---- pooled_output = sequence_output[:, 0] --------------------------------
    pooled = seq[:, 0, :]                      # [tb, H] bf16

    # ---- cls_projector: Linear(H,128) + Tanh -----------------------------------
    cls_rep = jnp.tanh(
        jnp.dot(pooled, clsW_ref[...], preferred_element_type=f32) + clsb_ref[...])

    # ---- masked max pooling + max_projector (mask math in f32, v5e-friendly) ---
    seq_f32 = seq.astype(f32)
    max_pool = jnp.max(jnp.where(amask == 0.0, -1e9, seq_f32), axis=1)      # [tb, H] f32
    max_rep = jnp.tanh(
        jnp.dot(max_pool.astype(cdt), maxW_ref[...], preferred_element_type=f32)
        + maxb_ref[...])

    # ---- feature_extractor: Linear(H,512)+ReLU+LayerNorm(512)+Dropout+Linear(512,128)
    h1 = jnp.dot(pooled, feW1_ref[...], preferred_element_type=f32) + feb1_ref[...]
    h1 = jnp.maximum(h1, 0.0)
    mu = jnp.mean(h1, axis=-1, keepdims=True)
    var = jnp.mean(jnp.square(h1 - mu), axis=-1, keepdims=True)
    h1 = (h1 - mu) * lax.rsqrt(var + 1e-5)
    h1 = h1 * feg_ref[...] + febt_ref[...]
    feat_rep = (jnp.dot(h1.astype(cdt), feW2_ref[...], preferred_element_type=f32)
                + feb2_ref[...])

    # ---- compute_sentence_diff (SEP masks precomputed) + diff_projector --------
    s1m = s1_ref[...]                          # [tb, S, 1]  tokens 1 .. first_SEP-1
    s2m = s2_ref[...]                          # [tb, S, 1]  first_SEP+1 .. second_SEP-1
    d1 = jnp.maximum(jnp.sum(s1m, axis=1, keepdims=True), 1.0)              # [tb,1,1]
    d2 = jnp.maximum(jnp.sum(s2m, axis=1, keepdims=True), 1.0)
    wdiff = s1m / d1 - s2m / d2                # exact divide: tiny, projector-input path
    sent_diff = jnp.abs(jnp.sum(seq_f32 * wdiff, axis=1)) * dvalid_ref[:, :, 0]  # [tb,H]
    diff_rep = jnp.tanh(
        jnp.dot(sent_diff.astype(cdt), diffW_ref[...], preferred_element_type=f32)
        + diffb_ref[...])

    # ---- event attention: MultiheadAttention(embed=H, heads=8, key_padding_mask) ---
    # key_padding_mask = ~event_mask (exactly as in apply_textrank_attention); the
    # additive f32 bias kbias_ref is precomputed per batch tile in the wrapper.
    # Per-head weights are pre-split + lane-padded to hdp (multiple of 128) in the
    # wrapper, so there are no non-128-aligned lane slices here; the head loop is a
    # fori_loop so the [tb,S,S] score/prob temporaries never outlive one head.
    x2d = seq.reshape(tb * S, H)               # bf16
    kbias = kbias_ref[...]                     # [tb, 1, S] f32 additive bias
    scale = 1.0 / (hd ** 0.5)

    def head_body(h, acc):
        qkv = (jnp.dot(x2d, wqkvh_ref[h], preferred_element_type=f32)
               + bqkvh_ref[h])                               # [tb*S, 3*hdp] f32
        q = (qkv[:, :hdp] * scale).astype(cdt).reshape(tb, S, hdp)   # scale folded in q
        k = qkv[:, hdp:2 * hdp].astype(cdt).reshape(tb, S, hdp)
        v = qkv[:, 2 * hdp:].astype(cdt).reshape(tb, S, hdp)
        s = jnp.einsum('bqd,bkd->bqk', q, k, preferred_element_type=f32) + kbias
        s = s - jnp.max(s, axis=-1, keepdims=True)
        p = jnp.exp(s)
        p = p * pl.reciprocal(jnp.sum(p, axis=-1, keepdims=True), approx=True)
        ctx = jnp.einsum('bqk,bkd->bqd', p.astype(cdt), v,
                         preferred_element_type=f32)          # [tb, S, hdp]
        part = jnp.dot(ctx.reshape(tb * S, hdp).astype(cdt), woh_ref[h],
                       preferred_element_type=f32)            # [tb*S, H]
        return acc + part

    attn2d = lax.fori_loop(0, NH, head_body, jnp.zeros((tb * S, H), f32))
    attn3 = (attn2d + bo_ref[...]).reshape(tb, S, H)          # f32

    # ---- event-masked mean pooling + event_projector ---------------------------
    # NOTE: matching the reference, `if event_mask.sum() > 0` is a *global* (whole
    # batch) switch, not per-row.  Fully-masked query rows fall back to a uniform
    # softmax here instead of PyTorch's NaNs.
    ev_cnt = jnp.sum(emask, axis=1)                           # [tb, 1]
    ev_masked = jnp.sum(attn3 * emask, axis=1) / (ev_cnt + 1e-8)
    ev_plain = jnp.mean(attn3, axis=1)
    event_feat = jnp.where(hasev_ref[...] > 0.0, ev_masked, ev_plain)     # [tb, H]
    event_rep = jnp.tanh(
        jnp.dot(event_feat.astype(cdt), evW_ref[...], preferred_element_type=f32)
        + evb_ref[...])

    # ---- classifier over concat [cls|max|feature|diff|event] (5*128 = 640) -----
    # The concat is folded into 5 partial matmuls against 128-row slices of c1_W.
    z = (jnp.dot(cls_rep.astype(cdt), c1Wa_ref[...], preferred_element_type=f32)
         + jnp.dot(max_rep.astype(cdt), c1Wb_ref[...], preferred_element_type=f32)
         + jnp.dot(feat_rep.astype(cdt), c1Wc_ref[...], preferred_element_type=f32)
         + jnp.dot(diff_rep.astype(cdt), c1Wd_ref[...], preferred_element_type=f32)
         + jnp.dot(event_rep.astype(cdt), c1We_ref[...], preferred_element_type=f32)
         + c1b_ref[...])
    z = jnp.maximum(z, 0.0)
    z = jnp.maximum(
        jnp.dot(z.astype(cdt), c2W_ref[...], preferred_element_type=f32) + c2b_ref[...],
        0.0)
    # c3 is zero-padded to 128 output lanes outside the kernel -> lane-dense store.
    logits_pad = (jnp.dot(z.astype(cdt), c3W_ref[...], preferred_element_type=f32)
                  + c3b_ref[...])
    out_ref[...] = logits_pad.reshape(out_ref.shape)


def make_sentence_masks(input_ids, sep_token_id=102):
    """Float masks reproducing compute_sentence_diff's SEP-based spans."""
    B, S = input_ids.shape
    idx = jnp.arange(S)[None, :]
    is_sep = (input_ids == sep_token_id)
    any_sep = is_sep.any(axis=1)
    first = jnp.where(any_sep, jnp.argmax(is_sep, axis=1), S)
    after_first = is_sep & (idx > first[:, None])
    any_second = after_first.any(axis=1)
    second = jnp.where(any_second, jnp.argmax(after_first, axis=1), S)
    valid = (is_sep.sum(axis=1) >= 2).astype(jnp.float32)[:, None]        # [B, 1]
    s1 = ((idx >= 1) & (idx < first[:, None])).astype(jnp.float32)        # [B, S]
    s2 = ((idx > first[:, None]) & (idx < second[:, None])).astype(jnp.float32)
    return s1, s2, valid


def init_params(key, H):
    """Deterministic synthetic parameter init (shapes from the module __init__)."""
    keys = jax.random.split(key, 16)

    def lin(k, fi, fo):
        k1, k2 = jax.random.split(k)
        return (jax.random.normal(k1, (fi, fo), jnp.float32) * 0.05,
                jax.random.normal(k2, (1, fo), jnp.float32) * 0.05)

    p = {}
    p["cls_W"], p["cls_b"] = lin(keys[0], H, 128)
    p["max_W"], p["max_b"] = lin(keys[1], H, 128)
    p["fe_W1"], p["fe_b1"] = lin(keys[2], H, 512)
    p["fe_g"] = jnp.ones((1, 512), jnp.float32)
    p["fe_beta"] = jnp.zeros((1, 512), jnp.float32)
    p["fe_W2"], p["fe_b2"] = lin(keys[3], 512, 128)
    p["diff_W"], p["diff_b"] = lin(keys[4], H, 128)
    p["wq"], p["bq"] = lin(keys[5], H, H)      # MHA in_proj split into q/k/v
    p["wk"], p["bk"] = lin(keys[6], H, H)
    p["wv"], p["bv"] = lin(keys[7], H, H)
    p["wo"], p["bo"] = lin(keys[8], H, H)      # MHA out_proj
    p["ev_W"], p["ev_b"] = lin(keys[9], H, 128)
    p["c1_W"], p["c1_b"] = lin(keys[10], 128 * 5, 128 * 3)
    p["c2_W"], p["c2_b"] = lin(keys[11], 128 * 3, 64)
    p["c3_W"], p["c3_b"] = lin(keys[12], 64, 2)
    return p


def _vmem_limit_bytes():
    """Per-generation VMEM limit: ~80% of physical, capped at 100 MiB."""
    try:
        cap = int(pltpu.get_tpu_info().vmem_capacity_bytes)
    except Exception:
        cap = 64 * 1024 * 1024                 # conservative (v7x-sized) fallback
    return min(int(cap * 0.8), 100 * 1024 * 1024)


def _auto_batch_tile(B, S, H, hdp, vmem_limit_bytes):
    """Largest power-of-two batch tile whose working set fits ~half the VMEM
    limit while keeping B//tb >= 2 (so the 'parallel' batch axis can still be
    sharded across both v7x TensorCores)."""
    per_ex = (2 * 2 * S * H                # seq bf16, double-buffered by the pipeline
              + 3 * S * S * 4              # one head's score / prob temporaries (f32)
              + 4 * 3 * hdp * S            # one head's q/k/v (f32 + bf16 copies)
              + 2 * 4 * S * H)             # attention accumulator + out-proj partial
    budget = max(vmem_limit_bytes // 2, 1)  # leave room for (double-buffered) weights
    tb, cand = 1, 2
    while cand <= B:
        if B % cand == 0 and (B // cand) >= 2 and cand * per_ex <= budget:
            tb = cand
        cand *= 2
    return tb


def bert_classifier_v4_forward(seq_out, input_ids, attention_mask, event_mask,
                               params, *, batch_tile=None):
    B, S, H = seq_out.shape
    assert H % NUM_HEADS == 0
    hd = H // NUM_HEADS
    hdp = max(128, ((hd + 127) // 128) * 128)        # lane-padded head dim
    f32, bf16 = jnp.float32, jnp.bfloat16

    vmem_limit = _vmem_limit_bytes()
    if batch_tile is None:
        batch_tile = _auto_batch_tile(B, S, H, hdp, vmem_limit)
    tb = batch_tile
    assert B % tb == 0

    # --- plain-JAX glue (mask construction, dtype/layout prep) ------------------
    seq_bf = seq_out.astype(bf16)                              # halve HBM->VMEM bytes
    amask = attention_mask.astype(f32)[:, :, None]             # [B, S, 1]
    s1, s2, dvalid = make_sentence_masks(input_ids)
    s1 = s1[:, :, None]                                        # [B, S, 1]
    s2 = s2[:, :, None]
    dvalid = dvalid[:, :, None]                                # [B, 1, 1]
    emaskf = event_mask.astype(f32)
    emask = emaskf[:, :, None]                                 # [B, S, 1]
    # key_padding_mask = ~event_mask (as in the reference) -> lane-dense additive bias
    kbias = ((1.0 - emaskf) * NEG_BIG)[:, None, :]             # [B, 1, S]
    has_ev = (jnp.sum(emaskf) > 0).astype(f32).reshape(1, 1)   # global switch (as in ref)

    # --- per-head, lane-padded, fused QKV weights --------------------------------
    def pad_head(w, axis):
        pad = [(0, 0)] * w.ndim
        pad[axis] = (0, hdp - hd)
        return jnp.pad(w, pad)

    def split_heads_cols(w):                   # [d0, NH*hd] -> [NH, d0, hdp]
        d0 = w.shape[0]
        wh = w.reshape(d0, NUM_HEADS, hd).transpose(1, 0, 2)
        return pad_head(wh, 2)

    w_qkvh = jnp.concatenate([split_heads_cols(params["wq"]),
                              split_heads_cols(params["wk"]),
                              split_heads_cols(params["wv"])], axis=2).astype(bf16)
    b_qkvh = jnp.concatenate([split_heads_cols(params["bq"]),
                              split_heads_cols(params["bk"]),
                              split_heads_cols(params["bv"])], axis=2)   # [NH,1,3*hdp] f32
    wo_h = pad_head(params["wo"].reshape(NUM_HEADS, hd, H), 1).astype(bf16)  # [NH,hdp,H]

    # --- all other matmul weights in bf16 (single-pass MXU); biases / LN in f32 ---
    clsW = params["cls_W"].astype(bf16)
    maxW = params["max_W"].astype(bf16)
    feW1 = params["fe_W1"].astype(bf16)
    feW2 = params["fe_W2"].astype(bf16)
    diffW = params["diff_W"].astype(bf16)
    evW = params["ev_W"].astype(bf16)
    c1W = params["c1_W"]
    c1_chunks = [c1W[i * 128:(i + 1) * 128].astype(bf16) for i in range(5)]
    c2W = params["c2_W"].astype(bf16)
    n_out = params["c3_W"].shape[1]
    c3W_pad = jnp.pad(params["c3_W"], ((0, 0), (0, 128 - n_out))).astype(bf16)
    c3b_pad = jnp.pad(params["c3_b"], ((0, 0), (0, 128 - n_out)))

    batch_args = [seq_bf, amask, s1, s2, dvalid, emask, kbias]
    other_args = [has_ev,
                  clsW, params["cls_b"],
                  maxW, params["max_b"],
                  feW1, params["fe_b1"], params["fe_g"], params["fe_beta"],
                  feW2, params["fe_b2"],
                  diffW, params["diff_b"],
                  w_qkvh, b_qkvh, wo_h, params["bo"],
                  evW, params["ev_b"],
                  *c1_chunks, params["c1_b"],
                  c2W, params["c2_b"], c3W_pad, c3b_pad]

    def batch_spec(a):
        nd = a.ndim
        return pl.BlockSpec((tb,) + a.shape[1:],
                            lambda b, nd=nd: (b,) + (0,) * (nd - 1))

    def full_spec(a):
        nd = a.ndim
        return pl.BlockSpec(a.shape, lambda b, nd=nd: (0,) * nd)

    in_specs = [batch_spec(a) for a in batch_args] + [full_spec(a) for a in other_args]

    # Lane-dense output: 2-D once the batch tile fills sublanes, 3-D otherwise.
    if tb % 8 == 0:
        out_shape = jax.ShapeDtypeStruct((B, 128), f32)
        out_spec = pl.BlockSpec((tb, 128), lambda b: (b, 0))
    else:
        out_shape = jax.ShapeDtypeStruct((B, 1, 128), f32)
        out_spec = pl.BlockSpec((tb, 1, 128), lambda b: (b, 0, 0))

    # Rough cost hint for the XLA scheduler.
    flops = (2 * B * S * H * 3 * hdp * NUM_HEADS       # per-head fused QKV projections
             + 2 * B * S * hdp * H * NUM_HEADS         # out-proj partials
             + 2 * 2 * B * NUM_HEADS * S * S * hdp     # scores + context
             + 2 * B * H * (4 * 128 + 512)             # cls/max/diff/event + fe1
             + 2 * B * (512 * 128 + 5 * 128 * 384 + 384 * 64 + 64 * 128))
    transcendentals = B * NUM_HEADS * S * S + 5 * B * 128
    bytes_accessed = sum(int(a.size) * a.dtype.itemsize
                         for a in batch_args + other_args) + B * 128 * 4

    out = pl.pallas_call(
        _bert_heads_kernel,
        out_shape=out_shape,
        grid=(B // tb,),
        in_specs=in_specs,
        out_specs=out_spec,
        compiler_params=pltpu.CompilerParams(
            dimension_semantics=("parallel",),          # batch tiles across TensorCores
            vmem_limit_bytes=int(vmem_limit)),
        cost_estimate=pl.CostEstimate(flops=int(flops),
                                      transcendentals=int(transcendentals),
                                      bytes_accessed=int(bytes_accessed)),
    )(*batch_args, *other_args)

    return out.reshape(B, 128)[:, :n_out]               # [B, 2]


if __name__ == "__main__":
    key = jax.random.PRNGKey(0)
    B, S, H = 2, 8, 32                       # hidden divisible by 8 heads
    k_seq, k_par = jax.random.split(key, 2)

    # Stand-in for BERT last_hidden_state (encoder itself is untranslatable).
    seq_out = jax.random.normal(k_seq, (B, S, H), jnp.float32)
    input_ids = jnp.array([[101, 5, 6, 102, 7, 8, 102, 0],
                           [101, 9, 10, 11, 102, 12, 102, 0]], dtype=jnp.int32)
    attention_mask = jnp.array([[1, 1, 1, 1, 1, 1, 1, 0],
                                [1, 1, 1, 1, 1, 1, 1, 0]], dtype=jnp.int32)
    # Deterministic synthetic event mask (TextRank replacement, see TODO above).
    event_mask = jnp.array([[0, 1, 1, 0, 1, 0, 0, 0],
                            [0, 1, 0, 1, 0, 1, 0, 0]], dtype=jnp.int32)

    params = init_params(k_par, H)
    logits = bert_classifier_v4_forward(seq_out, input_ids, attention_mask,
                                        event_mask, params)   # batch_tile auto-derived
    logits = jax.block_until_ready(logits)
    assert logits.shape == (B, 2)
    assert bool(jnp.all(jnp.isfinite(logits)))
    print("KERNEL_OK")
</pallas_src>

<mosaic_0001>
module attributes {stable_mosaic.version = 11 : i64} {
  func.func @_bert_heads_kernel(%arg0: i32, %arg1: memref<1x8x32xbf16, #tpu.memory_space<vmem>>, %arg2: memref<1x8x1xf32, #tpu.memory_space<vmem>>, %arg3: memref<1x8x1xf32, #tpu.memory_space<vmem>>, %arg4: memref<1x8x1xf32, #tpu.memory_space<vmem>>, %arg5: memref<1x1x1xf32, #tpu.memory_space<vmem>>, %arg6: memref<1x8x1xf32, #tpu.memory_space<vmem>>, %arg7: memref<1x1x8xf32, #tpu.memory_space<vmem>>, %arg8: memref<1x1xf32, #tpu.memory_space<vmem>>, %arg9: memref<32x128xbf16, #tpu.memory_space<vmem>>, %arg10: memref<1x128xf32, #tpu.memory_space<vmem>>, %arg11: memref<32x128xbf16, #tpu.memory_space<vmem>>, %arg12: memref<1x128xf32, #tpu.memory_space<vmem>>, %arg13: memref<32x512xbf16, #tpu.memory_space<vmem>>, %arg14: memref<1x512xf32, #tpu.memory_space<vmem>>, %arg15: memref<1x512xf32, #tpu.memory_space<vmem>>, %arg16: memref<1x512xf32, #tpu.memory_space<vmem>>, %arg17: memref<512x128xbf16, #tpu.memory_space<vmem>>, %arg18: memref<1x128xf32, #tpu.memory_space<vmem>>, %arg19: memref<32x128xbf16, #tpu.memory_space<vmem>>, %arg20: memref<1x128xf32, #tpu.memory_space<vmem>>, %arg21: memref<8x32x384xbf16, #tpu.memory_space<vmem>>, %arg22: memref<8x1x384xf32, #tpu.memory_space<vmem>>, %arg23: memref<8x128x32xbf16, #tpu.memory_space<vmem>>, %arg24: memref<1x32xf32, #tpu.memory_space<vmem>>, %arg25: memref<32x128xbf16, #tpu.memory_space<vmem>>, %arg26: memref<1x128xf32, #tpu.memory_space<vmem>>, %arg27: memref<128x384xbf16, #tpu.memory_space<vmem>>, %arg28: memref<128x384xbf16, #tpu.memory_space<vmem>>, %arg29: memref<128x384xbf16, #tpu.memory_space<vmem>>, %arg30: memref<128x384xbf16, #tpu.memory_space<vmem>>, %arg31: memref<128x384xbf16, #tpu.memory_space<vmem>>, %arg32: memref<1x384xf32, #tpu.memory_space<vmem>>, %arg33: memref<384x64xbf16, #tpu.memory_space<vmem>>, %arg34: memref<1x64xf32, #tpu.memory_space<vmem>>, %arg35: memref<64x128xbf16, #tpu.memory_space<vmem>>, %arg36: memref<1x128xf32, #tpu.memory_space<vmem>>, %arg37: memref<1x1x128xf32, #tpu.memory_space<vmem>>) attributes {dimension_semantics = [#tpu.dimension_semantics<parallel>], iteration_bounds = array<i64: 2>, scalar_prefetch = 0 : i64, scratch_operands = 0 : i64, tpu.core_type = #tpu.core_type<tc>, window_params = [{transform_indices = @transform_0, window_bounds = array<i64: 1, 8, 32>}, {transform_indices = @transform_1, window_bounds = array<i64: 1, 8, 1>}, {transform_indices = @transform_2, window_bounds = array<i64: 1, 8, 1>}, {transform_indices = @transform_3, window_bounds = array<i64: 1, 8, 1>}, {transform_indices = @transform_4, window_bounds = array<i64: 1, 1, 1>}, {transform_indices = @transform_5, window_bounds = array<i64: 1, 8, 1>}, {transform_indices = @transform_6, window_bounds = array<i64: 1, 1, 8>}, {pipeline_mode = #tpu.pipeline_mode<synchronous>, transform_indices = @transform_7, window_bounds = array<i64: 1, 1>}, {pipeline_mode = #tpu.pipeline_mode<synchronous>, transform_indices = @transform_8, window_bounds = array<i64: 32, 128>}, {pipeline_mode = #tpu.pipeline_mode<synchronous>, transform_indices = @transform_9, window_bounds = array<i64: 1, 128>}, {pipeline_mode = #tpu.pipeline_mode<synchronous>, transform_indices = @transform_10, window_bounds = array<i64: 32, 128>}, {pipeline_mode = #tpu.pipeline_mode<synchronous>, transform_indices = @transform_11, window_bounds = array<i64: 1, 128>}, {pipeline_mode = #tpu.pipeline_mode<synchronous>, transform_indices = @transform_12, window_bounds = array<i64: 32, 512>}, {pipeline_mode = #tpu.pipeline_mode<synchronous>, transform_indices = @transform_13, window_bounds = array<i64: 1, 512>}, {pipeline_mode = #tpu.pipeline_mode<synchronous>, transform_indices = @transform_14, window_bounds = array<i64: 1, 512>}, {pipeline_mode = #tpu.pipeline_mode<synchronous>, transform_indices = @transform_15, window_bounds = array<i64: 1, 512>}, {pipeline_mode = #tpu.pipeline_mode<synchronous>, transform_indices = @transform_16, window_bounds = array<i64: 512, 128>}, {pipeline_mode = #tpu.pipeline_mode<synchronous>, transform_indices = @transform_17, window_bounds = array<i64: 1, 128>}, {pipeline_mode = #tpu.pipeline_mode<synchronous>, transform_indices = @transform_18, window_bounds = array<i64: 32, 128>}, {pipeline_mode = #tpu.pipeline_mode<synchronous>, transform_indices = @transform_19, window_bounds = array<i64: 1, 128>}, {pipeline_mode = #tpu.pipeline_mode<synchronous>, transform_indices = @transform_20, window_bounds = array<i64: 8, 32, 384>}, {pipeline_mode = #tpu.pipeline_mode<synchronous>, transform_indices = @transform_21, window_bounds = array<i64: 8, 1, 384>}, {pipeline_mode = #tpu.pipeline_mode<synchronous>, transform_indices = @transform_22, window_bounds = array<i64: 8, 128, 32>}, {pipeline_mode = #tpu.pipeline_mode<synchronous>, transform_indices = @transform_23, window_bounds = array<i64: 1, 32>}, {pipeline_mode = #tpu.pipeline_mode<synchronous>, transform_indices = @transform_24, window_bounds = array<i64: 32, 128>}, {pipeline_mode = #tpu.pipeline_mode<synchronous>, transform_indices = @transform_25, window_bounds = array<i64: 1, 128>}, {pipeline_mode = #tpu.pipeline_mode<synchronous>, transform_indices = @transform_26, window_bounds = array<i64: 128, 384>}, {pipeline_mode = #tpu.pipeline_mode<synchronous>, transform_indices = @transform_27, window_bounds = array<i64: 128, 384>}, {pipeline_mode = #tpu.pipeline_mode<synchronous>, transform_indices = @transform_28, window_bounds = array<i64: 128, 384>}, {pipeline_mode = #tpu.pipeline_mode<synchronous>, transform_indices = @transform_29, window_bounds = array<i64: 128, 384>}, {pipeline_mode = #tpu.pipeline_mode<synchronous>, transform_indices = @transform_30, window_bounds = array<i64: 128, 384>}, {pipeline_mode = #tpu.pipeline_mode<synchronous>, transform_indices = @transform_31, window_bounds = array<i64: 1, 384>}, {pipeline_mode = #tpu.pipeline_mode<synchronous>, transform_indices = @transform_32, window_bounds = array<i64: 384, 64>}, {pipeline_mode = #tpu.pipeline_mode<synchronous>, transform_indices = @transform_33, window_bounds = array<i64: 1, 64>}, {pipeline_mode = #tpu.pipeline_mode<synchronous>, transform_indices = @transform_34, window_bounds = array<i64: 64, 128>}, {pipeline_mode = #tpu.pipeline_mode<synchronous>, transform_indices = @transform_35, window_bounds = array<i64: 1, 128>}, {transform_indices = @transform_36, window_bounds = array<i64: 1, 1, 128>}]} {
    %c0 = arith.constant 0 : index
    %c0_0 = arith.constant 0 : index
    %c0_1 = arith.constant 0 : index
    %0 = vector.load %arg1[%c0, %c0_0, %c0_1] : memref<1x8x32xbf16, #tpu.memory_space<vmem>>, vector<1x8x32xbf16>
    %c0_2 = arith.constant 0 : index
    %c0_3 = arith.constant 0 : index
    %c0_4 = arith.constant 0 : index
    %1 = vector.load %arg2[%c0_2, %c0_3, %c0_4] : memref<1x8x1xf32, #tpu.memory_space<vmem>>, vector<1x8x1xf32>
    %c0_5 = arith.constant 0 : index
    %c0_6 = arith.constant 0 : index
    %c0_7 = arith.constant 0 : index
    %2 = vector.load %arg6[%c0_5, %c0_6, %c0_7] : memref<1x8x1xf32, #tpu.memory_space<vmem>>, vector<1x8x1xf32>
    %3 = vector.extract_strided_slice %0 {offsets = [0, 0, 0], sizes = [1, 1, 32], strides = [1, 1, 1]} : vector<1x8x32xbf16> to vector<1x1x32xbf16>
    %4 = vector.shape_cast %3 : vector<1x1x32xbf16> to vector<1x32xbf16>
    %c0_8 = arith.constant 0 : index
    %c0_9 = arith.constant 0 : index
    %5 = vector.load %arg9[%c0_8, %c0_9] : memref<32x128xbf16, #tpu.memory_space<vmem>>, vector<32x128xbf16>
    %cst = arith.constant dense<0.000000e+00> : vector<1x128xf32>
    %6 = tpu.matmul %4, %5, %cst {dimension_numbers = #tpu.dot_dimension_numbers<[1], [0], [0], [1], [0, 0, 1, 1], [], []>} : vector<1x32xbf16>, vector<32x128xbf16>, vector<1x128xf32> -> vector<1x128xf32>
    %c0_10 = arith.constant 0 : index
    %c0_11 = arith.constant 0 : index
    %7 = vector.load %arg10[%c0_10, %c0_11] : memref<1x128xf32, #tpu.memory_space<vmem>>, vector<1x128xf32>
    %8 = arith.addf %6, %7 : vector<1x128xf32>
    %9 = math.tanh %8 : vector<1x128xf32>
    %10 = arith.extf %0 : vector<1x8x32xbf16> to vector<1x8x32xf32>
    %cst_12 = arith.constant 0.000000e+00 : f32
    %11 = vector.broadcast %cst_12 : f32 to vector<1x8x1xf32>
    %12 = arith.cmpf oeq, %1, %11 : vector<1x8x1xf32>
    %cst_13 = arith.constant -1.000000e+09 : f32
    %13 = vector.shape_cast %12 : vector<1x8x1xi1> to vector<1x8x1xi1>
    %14 = vector.broadcast %13 : vector<1x8x1xi1> to vector<1x8x32xi1>
    %15 = vector.broadcast %cst_13 : f32 to vector<1x8x32xf32>
    %16 = arith.select %14, %15, %10 : vector<1x8x32xi1>, vector<1x8x32xf32>
    %cst_14 = arith.constant dense<0xFF800000> : vector<1x32xf32>
    %17 = vector.multi_reduction <maximumf>, %16, %cst_14 [1] : vector<1x8x32xf32> to vector<1x32xf32>
    %18 = arith.truncf %17 : vector<1x32xf32> to vector<1x32xbf16>
    %c0_15 = arith.constant 0 : index
    %c0_16 = arith.constant 0 : index
    %19 = vector.load %arg11[%c0_15, %c0_16] : memref<32x128xbf16, #tpu.memory_space<vmem>>, vector<32x128xbf16>
    %cst_17 = arith.constant dense<0.000000e+00> : vector<1x128xf32>
    %20 = tpu.matmul %18, %19, %cst_17 {dimension_numbers = #tpu.dot_dimension_numbers<[1], [0], [0], [1], [0, 0, 1, 1], [], []>} : vector<1x32xbf16>, vector<32x128xbf16>, vector<1x128xf32> -> vector<1x128xf32>
    %c0_18 = arith.constant 0 : index
    %c0_19 = arith.constant 0 : index
    %21 = vector.load %arg12[%c0_18, %c0_19] : memref<1x128xf32, #tpu.memory_space<vmem>>, vector<1x128xf32>
    %22 = arith.addf %20, %21 : vector<1x128xf32>
    %23 = math.tanh %22 : vector<1x128xf32>
    %c0_20 = arith.constant 0 : index
    %c0_21 = arith.constant 0 : index
    %24 = vector.load %arg13[%c0_20, %c0_21] : memref<32x512xbf16, #tpu.memory_space<vmem>>, vector<32x512xbf16>
    %cst_22 = arith.constant dense<0.000000e+00> : vector<1x512xf32>
    %25 = tpu.matmul %4, %24, %cst_22 {dimension_numbers = #tpu.dot_dimension_numbers<[1], [0], [0], [1], [0, 0, 1, 1], [], []>} : vector<1x32xbf16>, vector<32x512xbf16>, vector<1x512xf32> -> vector<1x512xf32>
    %c0_23 = arith.constant 0 : index
    %c0_24 = arith.constant 0 : index
    %26 = vector.load %arg14[%c0_23, %c0_24] : memref<1x512xf32, #tpu.memory_space<vmem>>, vector<1x512xf32>
    %27 = arith.addf %25, %26 : vector<1x512xf32>
    %cst_25 = arith.constant 0.000000e+00 : f32
    %28 = vector.broadcast %cst_25 : f32 to vector<1x512xf32>
    %29 = arith.maximumf %27, %28 : vector<1x512xf32>
    %cst_26 = arith.constant dense<0.000000e+00> : vector<1xf32>
    %30 = vector.multi_reduction <add>, %29, %cst_26 [1] : vector<1x512xf32> to vector<1xf32>
    %31 = vector.shape_cast %30 : vector<1xf32> to vector<1x1xf32>
    %cst_27 = arith.constant 5.120000e+02 : f32
    %32 = vector.broadcast %cst_27 : f32 to vector<1x1xf32>
    %33 = arith.divf %31, %32 : vector<1x1xf32>
    %34 = vector.broadcast %33 : vector<1x1xf32> to vector<1x512xf32>
    %35 = arith.subf %29, %34 : vector<1x512xf32>
    %36 = arith.mulf %35, %35 : vector<1x512xf32>
    %cst_28 = arith.constant dense<0.000000e+00> : vector<1xf32>
    %37 = vector.multi_reduction <add>, %36, %cst_28 [1] : vector<1x512xf32> to vector<1xf32>
    %38 = vector.shape_cast %37 : vector<1xf32> to vector<1x1xf32>
    %cst_29 = arith.constant 5.120000e+02 : f32
    %39 = vector.broadcast %cst_29 : f32 to vector<1x1xf32>
    %40 = arith.divf %38, %39 : vector<1x1xf32>
    %41 = vector.broadcast %33 : vector<1x1xf32> to vector<1x512xf32>
    %42 = arith.subf %29, %41 : vector<1x512xf32>
    %cst_30 = arith.constant 9.99999974E-6 : f32
    %43 = vector.broadcast %cst_30 : f32 to vector<1x1xf32>
    %44 = arith.addf %40, %43 : vector<1x1xf32>
    %45 = math.rsqrt %44 : vector<1x1xf32>
    %46 = vector.broadcast %45 : vector<1x1xf32> to vector<1x512xf32>
    %47 = arith.mulf %42, %46 : vector<1x512xf32>
    %c0_31 = arith.constant 0 : index
    %c0_32 = arith.constant 0 : index
    %48 = vector.load %arg15[%c0_31, %c0_32] : memref<1x512xf32, #tpu.memory_space<vmem>>, vector<1x512xf32>
    %49 = arith.mulf %47, %48 : vector<1x512xf32>
    %c0_33 = arith.constant 0 : index
    %c0_34 = arith.constant 0 : index
    %50 = vector.load %arg16[%c0_33, %c0_34] : memref<1x512xf32, #tpu.memory_space<vmem>>, vector<1x512xf32>
    %51 = arith.addf %49, %50 : vector<1x512xf32>
    %52 = arith.truncf %51 : vector<1x512xf32> to vector<1x512xbf16>
    %c0_35 = arith.constant 0 : index
    %c0_36 = arith.constant 0 : index
    %53 = vector.load %arg17[%c0_35, %c0_36] : memref<512x128xbf16, #tpu.memory_space<vmem>>, vector<512x128xbf16>
    %cst_37 = arith.constant dense<0.000000e+00> : vector<1x128xf32>
    %54 = tpu.matmul %52, %53, %cst_37 {dimension_numbers = #tpu.dot_dimension_numbers<[1], [0], [0], [1], [0, 0, 1, 1], [], []>} : vector<1x512xbf16>, vector<512x128xbf16>, vector<1x128xf32> -> vector<1x128xf32>
    %c0_38 = arith.constant 0 : index
    %c0_39 = arith.constant 0 : index
    %55 = vector.load %arg18[%c0_38, %c0_39] : memref<1x128xf32, #tpu.memory_space<vmem>>, vector<1x128xf32>
    %56 = arith.addf %54, %55 : vector<1x128xf32>
    %c0_40 = arith.constant 0 : index
    %c0_41 = arith.constant 0 : index
    %c0_42 = arith.constant 0 : index
    %57 = vector.load %arg3[%c0_40, %c0_41, %c0_42] : memref<1x8x1xf32, #tpu.memory_space<vmem>>, vector<1x8x1xf32>
    %c0_43 = arith.constant 0 : index
    %c0_44 = arith.constant 0 : index
    %c0_45 = arith.constant 0 : index
    %58 = vector.load %arg4[%c0_43, %c0_44, %c0_45] : memref<1x8x1xf32, #tpu.memory_space<vmem>>, vector<1x8x1xf32>
    %cst_46 = arith.constant dense<0.000000e+00> : vector<1x1xf32>
    %59 = vector.multi_reduction <add>, %57, %cst_46 [1] : vector<1x8x1xf32> to vector<1x1xf32>
    %60 = vector.shape_cast %59 : vector<1x1xf32> to vector<1x1x1xf32>
    %cst_47 = arith.constant 1.000000e+00 : f32
    %61 = vector.broadcast %cst_47 : f32 to vector<1x1x1xf32>
    %62 = arith.maximumf %60, %61 : vector<1x1x1xf32>
    %cst_48 = arith.constant dense<0.000000e+00> : vector<1x1xf32>
    %63 = vector.multi_reduction <add>, %58, %cst_48 [1] : vector<1x8x1xf32> to vector<1x1xf32>
    %64 = vector.shape_cast %63 : vector<1x1xf32> to vector<1x1x1xf32>
    %cst_49 = arith.constant 1.000000e+00 : f32
    %65 = vector.broadcast %cst_49 : f32 to vector<1x1x1xf32>
    %66 = arith.maximumf %64, %65 : vector<1x1x1xf32>
    %67 = vector.broadcast %62 : vector<1x1x1xf32> to vector<1x8x1xf32>
    %68 = arith.divf %57, %67 : vector<1x8x1xf32>
    %69 = vector.broadcast %66 : vector<1x1x1xf32> to vector<1x8x1xf32>
    %70 = arith.divf %58, %69 : vector<1x8x1xf32>
    %71 = arith.subf %68, %70 : vector<1x8x1xf32>
    %72 = vector.broadcast %71 : vector<1x8x1xf32> to vector<1x8x32xf32>
    %73 = arith.mulf %10, %72 : vector<1x8x32xf32>
    %cst_50 = arith.constant dense<0.000000e+00> : vector<1x32xf32>
    %74 = vector.multi_reduction <add>, %73, %cst_50 [1] : vector<1x8x32xf32> to vector<1x32xf32>
    %75 = math.absf %74 : vector<1x32xf32>
    %c0_51 = arith.constant 0 : index
    %c0_52 = arith.constant 0 : index
    %c0_53 = arith.constant 0 : index
    %76 = vector.load %arg5[%c0_51, %c0_52, %c0_53] : memref<1x1x1xf32, #tpu.memory_space<vmem>>, vector<1x1x1xf32>
    %77 = vector.shape_cast %76 : vector<1x1x1xf32> to vector<1x1xf32>
    %78 = vector.broadcast %77 : vector<1x1xf32> to vector<1x32xf32>
    %79 = arith.mulf %75, %78 : vector<1x32xf32>
    %80 = arith.truncf %79 : vector<1x32xf32> to vector<1x32xbf16>
    %c0_54 = arith.constant 0 : index
    %c0_55 = arith.constant 0 : index
    %81 = vector.load %arg19[%c0_54, %c0_55] : memref<32x128xbf16, #tpu.memory_space<vmem>>, vector<32x128xbf16>
    %cst_56 = arith.constant dense<0.000000e+00> : vector<1x128xf32>
    %82 = tpu.matmul %80, %81, %cst_56 {dimension_numbers = #tpu.dot_dimension_numbers<[1], [0], [0], [1], [0, 0, 1, 1], [], []>} : vector<1x32xbf16>, vector<32x128xbf16>, vector<1x128xf32> -> vector<1x128xf32>
    %c0_57 = arith.constant 0 : index
    %c0_58 = arith.constant 0 : index
    %83 = vector.load %arg20[%c0_57, %c0_58] : memref<1x128xf32, #tpu.memory_space<vmem>>, vector<1x128xf32>
    %84 = arith.addf %82, %83 : vector<1x128xf32>
    %85 = math.tanh %84 : vector<1x128xf32>
    %86 = vector.shape_cast %0 : vector<1x8x32xbf16> to vector<8x32xbf16>
    %c0_59 = arith.constant 0 : index
    %c0_60 = arith.constant 0 : index
    %c0_61 = arith.constant 0 : index
    %87 = vector.load %arg7[%c0_59, %c0_60, %c0_61] : memref<1x1x8xf32, #tpu.memory_space<vmem>>, vector<1x1x8xf32>
    %cst_62 = arith.constant 0.000000e+00 : f32
    %88 = vector.broadcast %cst_62 : f32 to vector<8x32xf32>
    %c0_i32 = arith.constant 0 : i32
    %c8_i32 = arith.constant 8 : i32
    %89 = arith.addi %c0_i32, %c8_i32 : i32
    %c1_i32 = arith.constant 1 : i32
    %90 = scf.for %arg38 = %c0_i32 to %89 step %c1_i32 iter_args(%arg39 = %88) -> (vector<8x32xf32>)  : i32 {
      %155 = arith.index_cast %arg38 : i32 to index
      %c0_111 = arith.constant 0 : index
      %c0_112 = arith.constant 0 : index
      %156 = vector.load %arg21[%155, %c0_111, %c0_112] : memref<8x32x384xbf16, #tpu.memory_space<vmem>>, vector<1x32x384xbf16>
      %157 = vector.shape_cast %156 : vector<1x32x384xbf16> to vector<32x384xbf16>
      %cst_113 = arith.constant dense<0.000000e+00> : vector<8x384xf32>
      %158 = tpu.matmul %86, %157, %cst_113 {dimension_numbers = #tpu.dot_dimension_numbers<[1], [0], [0], [1], [0, 0, 1, 1], [], []>} : vector<8x32xbf16>, vector<32x384xbf16>, vector<8x384xf32> -> vector<8x384xf32>
      %159 = arith.index_cast %arg38 : i32 to index
      %c0_114 = arith.constant 0 : index
      %c0_115 = arith.constant 0 : index
      %160 = vector.load %arg22[%159, %c0_114, %c0_115] : memref<8x1x384xf32, #tpu.memory_space<vmem>>, vector<1x1x384xf32>
      %161 = vector.shape_cast %160 : vector<1x1x384xf32> to vector<1x384xf32>
      %162 = vector.broadcast %161 : vector<1x384xf32> to vector<8x384xf32>
      %163 = arith.addf %158, %162 : vector<8x384xf32>
      %164 = vector.extract_strided_slice %163 {offsets = [0, 0], sizes = [8, 128], strides = [1, 1]} : vector<8x384xf32> to vector<8x128xf32>
      %cst_116 = arith.constant 5.000000e-01 : f32
      %165 = vector.broadcast %cst_116 : f32 to vector<8x128xf32>
      %166 = arith.mulf %164, %165 : vector<8x128xf32>
      %167 = arith.truncf %166 : vector<8x128xf32> to vector<8x128xbf16>
      %168 = vector.shape_cast %167 : vector<8x128xbf16> to vector<1x8x128xbf16>
      %169 = vector.extract_strided_slice %163 {offsets = [0, 128], sizes = [8, 128], strides = [1, 1]} : vector<8x384xf32> to vector<8x128xf32>
      %170 = arith.truncf %169 : vector<8x128xf32> to vector<8x128xbf16>
      %171 = vector.shape_cast %170 : vector<8x128xbf16> to vector<1x8x128xbf16>
      %172 = vector.extract_strided_slice %163 {offsets = [0, 256], sizes = [8, 128], strides = [1, 1]} : vector<8x384xf32> to vector<8x128xf32>
      %173 = arith.truncf %172 : vector<8x128xf32> to vector<8x128xbf16>
      %174 = vector.shape_cast %173 : vector<8x128xbf16> to vector<1x8x128xbf16>
      "tpu.trace_start"() <{level = 10 : i32, message = "bqd,bkd->bqk"}> : () -> ()
      %cst_117 = arith.constant dense<0.000000e+00> : vector<1x8x8xf32>
      %175 = tpu.matmul %168, %171, %cst_117 {dimension_numbers = #tpu.dot_dimension_numbers<[2], [2], [1], [1], [0, 0, 0, 1, 1, 1], [0], [0]>} : vector<1x8x128xbf16>, vector<1x8x128xbf16>, vector<1x8x8xf32> -> vector<1x8x8xf32>
      "tpu.trace_stop"() : () -> ()
      %176 = vector.broadcast %87 : vector<1x1x8xf32> to vector<1x8x8xf32>
      %177 = arith.addf %175, %176 : vector<1x8x8xf32>
      %cst_118 = arith.constant dense<0xFF800000> : vector<1x8xf32>
      %178 = vector.multi_reduction <maximumf>, %177, %cst_118 [2] : vector<1x8x8xf32> to vector<1x8xf32>
      %179 = vector.shape_cast %178 : vector<1x8xf32> to vector<1x8x1xf32>
      %180 = vector.broadcast %179 : vector<1x8x1xf32> to vector<1x8x8xf32>
      %181 = arith.subf %177, %180 : vector<1x8x8xf32>
      %182 = math.exp %181 : vector<1x8x8xf32>
      %cst_119 = arith.constant dense<0.000000e+00> : vector<1x8xf32>
      %183 = vector.multi_reduction <add>, %182, %cst_119 [2] : vector<1x8x8xf32> to vector<1x8xf32>
      %184 = vector.shape_cast %183 : vector<1x8xf32> to vector<1x8x1xf32>
      %185 = tpu.reciprocal %184 {approx = true} : vector<1x8x1xf32> -> vector<1x8x1xf32>
      %186 = vector.broadcast %185 : vector<1x8x1xf32> to vector<1x8x8xf32>
      %187 = arith.mulf %182, %186 : vector<1x8x8xf32>
      %188 = arith.truncf %187 : vector<1x8x8xf32> to vector<1x8x8xbf16>
      "tpu.trace_start"() <{level = 10 : i32, message = "bqk,bkd->bqd"}> : () -> ()
      %cst_120 = arith.constant dense<0.000000e+00> : vector<1x8x128xf32>
      %189 = tpu.matmul %188, %174, %cst_120 {dimension_numbers = #tpu.dot_dimension_numbers<[2], [1], [1], [2], [0, 0, 0, 1, 1, 2], [0], [0]>} : vector<1x8x8xbf16>, vector<1x8x128xbf16>, vector<1x8x128xf32> -> vector<1x8x128xf32>
      "tpu.trace_stop"() : () -> ()
      %190 = vector.shape_cast %189 : vector<1x8x128xf32> to vector<8x128xf32>
      %191 = arith.truncf %190 : vector<8x128xf32> to vector<8x128xbf16>
      %192 = arith.index_cast %arg38 : i32 to index
      %c0_121 = arith.constant 0 : index
      %c0_122 = arith.constant 0 : index
      %193 = vector.load %arg23[%192, %c0_121, %c0_122] : memref<8x128x32xbf16, #tpu.memory_space<vmem>>, vector<1x128x32xbf16>
      %194 = vector.shape_cast %193 : vector<1x128x32xbf16> to vector<128x32xbf16>
      %cst_123 = arith.constant dense<0.000000e+00> : vector<8x32xf32>
      %195 = tpu.matmul %191, %194, %cst_123 {dimension_numbers = #tpu.dot_dimension_numbers<[1], [0], [0], [1], [0, 0, 1, 1], [], []>} : vector<8x128xbf16>, vector<128x32xbf16>, vector<8x32xf32> -> vector<8x32xf32>
      %196 = arith.addf %arg39, %195 : vector<8x32xf32>
      scf.yield %196 : vector<8x32xf32>
    }
    %c8_i32_63 = arith.constant 8 : i32
    %c0_64 = arith.constant 0 : index
    %c0_65 = arith.constant 0 : index
    %91 = vector.load %arg24[%c0_64, %c0_65] : memref<1x32xf32, #tpu.memory_space<vmem>>, vector<1x32xf32>
    %92 = vector.broadcast %91 : vector<1x32xf32> to vector<8x32xf32>
    %93 = arith.addf %90, %92 : vector<8x32xf32>
    %94 = vector.shape_cast %93 : vector<8x32xf32> to vector<1x8x32xf32>
    %cst_66 = arith.constant dense<0.000000e+00> : vector<1x1xf32>
    %95 = vector.multi_reduction <add>, %2, %cst_66 [1] : vector<1x8x1xf32> to vector<1x1xf32>
    %96 = vector.broadcast %2 : vector<1x8x1xf32> to vector<1x8x32xf32>
    %97 = arith.mulf %94, %96 : vector<1x8x32xf32>
    %cst_67 = arith.constant dense<0.000000e+00> : vector<1x32xf32>
    %98 = vector.multi_reduction <add>, %97, %cst_67 [1] : vector<1x8x32xf32> to vector<1x32xf32>
    %cst_68 = arith.constant 9.99999993E-9 : f32
    %99 = vector.broadcast %cst_68 : f32 to vector<1x1xf32>
    %100 = arith.addf %95, %99 : vector<1x1xf32>
    %101 = vector.broadcast %100 : vector<1x1xf32> to vector<1x32xf32>
    %102 = arith.divf %98, %101 : vector<1x32xf32>
    %cst_69 = arith.constant dense<0.000000e+00> : vector<1x32xf32>
    %103 = vector.multi_reduction <add>, %94, %cst_69 [1] : vector<1x8x32xf32> to vector<1x32xf32>
    %cst_70 = arith.constant 8.000000e+00 : f32
    %104 = vector.broadcast %cst_70 : f32 to vector<1x32xf32>
    %105 = arith.divf %103, %104 : vector<1x32xf32>
    %c0_71 = arith.constant 0 : index
    %c0_72 = arith.constant 0 : index
    %106 = vector.load %arg8[%c0_71, %c0_72] : memref<1x1xf32, #tpu.memory_space<vmem>>, vector<1x1xf32>
    %cst_73 = arith.constant 0.000000e+00 : f32
    %107 = vector.broadcast %cst_73 : f32 to vector<1x1xf32>
    %108 = arith.cmpf ogt, %106, %107 : vector<1x1xf32>
    %109 = vector.shape_cast %108 : vector<1x1xi1> to vector<1x1xi1>
    %110 = vector.broadcast %109 : vector<1x1xi1> to vector<1x32xi1>
    %111 = arith.select %110, %102, %105 : vector<1x32xi1>, vector<1x32xf32>
    %112 = arith.truncf %111 : vector<1x32xf32> to vector<1x32xbf16>
    %c0_74 = arith.constant 0 : index
    %c0_75 = arith.constant 0 : index
    %113 = vector.load %arg25[%c0_74, %c0_75] : memref<32x128xbf16, #tpu.memory_space<vmem>>, vector<32x128xbf16>
    %cst_76 = arith.constant dense<0.000000e+00> : vector<1x128xf32>
    %114 = tpu.matmul %112, %113, %cst_76 {dimension_numbers = #tpu.dot_dimension_numbers<[1], [0], [0], [1], [0, 0, 1, 1], [], []>} : vector<1x32xbf16>, vector<32x128xbf16>, vector<1x128xf32> -> vector<1x128xf32>
    %c0_77 = arith.constant 0 : index
    %c0_78 = arith.constant 0 : index
    %115 = vector.load %arg26[%c0_77, %c0_78] : memref<1x128xf32, #tpu.memory_space<vmem>>, vector<1x128xf32>
    %116 = arith.addf %114, %115 : vector<1x128xf32>
    %117 = math.tanh %116 : vector<1x128xf32>
    %118 = arith.truncf %9 : vector<1x128xf32> to vector<1x128xbf16>
    %c0_79 = arith.constant 0 : index
    %c0_80 = arith.constant 0 : index
    %119 = vector.load %arg27[%c0_79, %c0_80] : memref<128x384xbf16, #tpu.memory_space<vmem>>, vector<128x384xbf16>
    %cst_81 = arith.constant dense<0.000000e+00> : vector<1x384xf32>
    %120 = tpu.matmul %118, %119, %cst_81 {dimension_numbers = #tpu.dot_dimension_numbers<[1], [0], [0], [1], [0, 0, 1, 1], [], []>} : vector<1x128xbf16>, vector<128x384xbf16>, vector<1x384xf32> -> vector<1x384xf32>
    %121 = arith.truncf %23 : vector<1x128xf32> to vector<1x128xbf16>
    %c0_82 = arith.constant 0 : index
    %c0_83 = arith.constant 0 : index
    %122 = vector.load %arg28[%c0_82, %c0_83] : memref<128x384xbf16, #tpu.memory_space<vmem>>, vector<128x384xbf16>
    %cst_84 = arith.constant dense<0.000000e+00> : vector<1x384xf32>
    %123 = tpu.matmul %121, %122, %cst_84 {dimension_numbers = #tpu.dot_dimension_numbers<[1], [0], [0], [1], [0, 0, 1, 1], [], []>} : vector<1x128xbf16>, vector<128x384xbf16>, vector<1x384xf32> -> vector<1x384xf32>
    %124 = arith.addf %120, %123 : vector<1x384xf32>
    %125 = arith.truncf %56 : vector<1x128xf32> to vector<1x128xbf16>
    %c0_85 = arith.constant 0 : index
    %c0_86 = arith.constant 0 : index
    %126 = vector.load %arg29[%c0_85, %c0_86] : memref<128x384xbf16, #tpu.memory_space<vmem>>, vector<128x384xbf16>
    %cst_87 = arith.constant dense<0.000000e+00> : vector<1x384xf32>
    %127 = tpu.matmul %125, %126, %cst_87 {dimension_numbers = #tpu.dot_dimension_numbers<[1], [0], [0], [1], [0, 0, 1, 1], [], []>} : vector<1x128xbf16>, vector<128x384xbf16>, vector<1x384xf32> -> vector<1x384xf32>
    %128 = arith.addf %124, %127 : vector<1x384xf32>
    %129 = arith.truncf %85 : vector<1x128xf32> to vector<1x128xbf16>
    %c0_88 = arith.constant 0 : index
    %c0_89 = arith.constant 0 : index
    %130 = vector.load %arg30[%c0_88, %c0_89] : memref<128x384xbf16, #tpu.memory_space<vmem>>, vector<128x384xbf16>
    %cst_90 = arith.constant dense<0.000000e+00> : vector<1x384xf32>
    %131 = tpu.matmul %129, %130, %cst_90 {dimension_numbers = #tpu.dot_dimension_numbers<[1], [0], [0], [1], [0, 0, 1, 1], [], []>} : vector<1x128xbf16>, vector<128x384xbf16>, vector<1x384xf32> -> vector<1x384xf32>
    %132 = arith.addf %128, %131 : vector<1x384xf32>
    %133 = arith.truncf %117 : vector<1x128xf32> to vector<1x128xbf16>
    %c0_91 = arith.constant 0 : index
    %c0_92 = arith.constant 0 : index
    %134 = vector.load %arg31[%c0_91, %c0_92] : memref<128x384xbf16, #tpu.memory_space<vmem>>, vector<128x384xbf16>
    %cst_93 = arith.constant dense<0.000000e+00> : vector<1x384xf32>
    %135 = tpu.matmul %133, %134, %cst_93 {dimension_numbers = #tpu.dot_dimension_numbers<[1], [0], [0], [1], [0, 0, 1, 1], [], []>} : vector<1x128xbf16>, vector<128x384xbf16>, vector<1x384xf32> -> vector<1x384xf32>
    %136 = arith.addf %132, %135 : vector<1x384xf32>
    %c0_94 = arith.constant 0 : index
    %c0_95 = arith.constant 0 : index
    %137 = vector.load %arg32[%c0_94, %c0_95] : memref<1x384xf32, #tpu.memory_space<vmem>>, vector<1x384xf32>
    %138 = arith.addf %136, %137 : vector<1x384xf32>
    %cst_96 = arith.constant 0.000000e+00 : f32
    %139 = vector.broadcast %cst_96 : f32 to vector<1x384xf32>
    %140 = arith.maximumf %138, %139 : vector<1x384xf32>
    %141 = arith.truncf %140 : vector<1x384xf32> to vector<1x384xbf16>
    %c0_97 = arith.constant 0 : index
    %c0_98 = arith.constant 0 : index
    %142 = vector.load %arg33[%c0_97, %c0_98] : memref<384x64xbf16, #tpu.memory_space<vmem>>, vector<384x64xbf16>
    %cst_99 = arith.constant dense<0.000000e+00> : vector<1x64xf32>
    %143 = tpu.matmul %141, %142, %cst_99 {dimension_numbers = #tpu.dot_dimension_numbers<[1], [0], [0], [1], [0, 0, 1, 1], [], []>} : vector<1x384xbf16>, vector<384x64xbf16>, vector<1x64xf32> -> vector<1x64xf32>
    %c0_100 = arith.constant 0 : index
    %c0_101 = arith.constant 0 : index
    %144 = vector.load %arg34[%c0_100, %c0_101] : memref<1x64xf32, #tpu.memory_space<vmem>>, vector<1x64xf32>
    %145 = arith.addf %143, %144 : vector<1x64xf32>
    %cst_102 = arith.constant 0.000000e+00 : f32
    %146 = vector.broadcast %cst_102 : f32 to vector<1x64xf32>
    %147 = arith.maximumf %145, %146 : vector<1x64xf32>
    %148 = arith.truncf %147 : vector<1x64xf32> to vector<1x64xbf16>
    %c0_103 = arith.constant 0 : index
    %c0_104 = arith.constant 0 : index
    %149 = vector.load %arg35[%c0_103, %c0_104] : memref<64x128xbf16, #tpu.memory_space<vmem>>, vector<64x128xbf16>
    %cst_105 = arith.constant dense<0.000000e+00> : vector<1x128xf32>
    %150 = tpu.matmul %148, %149, %cst_105 {dimension_numbers = #tpu.dot_dimension_numbers<[1], [0], [0], [1], [0, 0, 1, 1], [], []>} : vector<1x64xbf16>, vector<64x128xbf16>, vector<1x128xf32> -> vector<1x128xf32>
    %c0_106 = arith.constant 0 : index
    %c0_107 = arith.constant 0 : index
    %151 = vector.load %arg36[%c0_106, %c0_107] : memref<1x128xf32, #tpu.memory_space<vmem>>, vector<1x128xf32>
    %152 = arith.addf %150, %151 : vector<1x128xf32>
    %153 = vector.shape_cast %152 : vector<1x128xf32> to vector<1x1x128xf32>
    %c0_108 = arith.constant 0 : index
    %c0_109 = arith.constant 0 : index
    %c0_110 = arith.constant 0 : index
    %154 = vector.load %arg37[%c0_108, %c0_109, %c0_110] : memref<1x1x128xf32, #tpu.memory_space<vmem>>, vector<1x1x128xf32>
    tpu.vector_store %arg37[%c0_108, %c0_109, %c0_110], %153 {strides = array<i32>} : memref<1x1x128xf32, #tpu.memory_space<vmem>>, vector<1x1x128xf32>,
    return
  }
  func.func @transform_0(%arg0: i32) -> (i32, i32, i32) {
    %c0_i32 = arith.constant 0 : i32
    %c0_i32_0 = arith.constant 0 : i32
    %c0_i32_1 = arith.constant 0 : i32
    return %arg0, %c0_i32, %c0_i32_0 : i32, i32, i32
  }
  func.func @transform_1(%arg0: i32) -> (i32, i32, i32) {
    %c0_i32 = arith.constant 0 : i32
    %c0_i32_0 = arith.constant 0 : i32
    %c0_i32_1 = arith.constant 0 : i32
    return %arg0, %c0_i32, %c0_i32_0 : i32, i32, i32
  }
  func.func @transform_2(%arg0: i32) -> (i32, i32, i32) {
    %c0_i32 = arith.constant 0 : i32
    %c0_i32_0 = arith.constant 0 : i32
    %c0_i32_1 = arith.constant 0 : i32
    return %arg0, %c0_i32, %c0_i32_0 : i32, i32, i32
  }
  func.func @transform_3(%arg0: i32) -> (i32, i32, i32) {
    %c0_i32 = arith.constant 0 : i32
    %c0_i32_0 = arith.constant 0 : i32
    %c0_i32_1 = arith.constant 0 : i32
    return %arg0, %c0_i32, %c0_i32_0 : i32, i32, i32
  }
  func.func @transform_4(%arg0: i32) -> (i32, i32, i32) {
    %c0_i32 = arith.constant 0 : i32
    %c0_i32_0 = arith.constant 0 : i32
    %c0_i32_1 = arith.constant 0 : i32
    return %arg0, %c0_i32, %c0_i32_0 : i32, i32, i32
  }
  func.func @transform_5(%arg0: i32) -> (i32, i32, i32) {
    %c0_i32 = arith.constant 0 : i32
    %c0_i32_0 = arith.constant 0 : i32
    %c0_i32_1 = arith.constant 0 : i32
    return %arg0, %c0_i32, %c0_i32_0 : i32, i32, i32
  }
  func.func @transform_6(%arg0: i32) -> (i32, i32, i32) {
    %c0_i32 = arith.constant 0 : i32
    %c0_i32_0 = arith.constant 0 : i32
    %c0_i32_1 = arith.constant 0 : i32
    return %arg0, %c0_i32, %c0_i32_0 : i32, i32, i32
  }
  func.func @transform_7(%arg0: i32) -> (i32, i32) {
    %c0_i32 = arith.constant 0 : i32
    %c0_i32_0 = arith.constant 0 : i32
    %c0_i32_1 = arith.constant 0 : i32
    return %c0_i32, %c0_i32_0 : i32, i32
  }
  func.func @transform_8(%arg0: i32) -> (i32, i32) {
    %c0_i32 = arith.constant 0 : i32
    %c0_i32_0 = arith.constant 0 : i32
    %c0_i32_1 = arith.constant 0 : i32
    return %c0_i32, %c0_i32_0 : i32, i32
  }
  func.func @transform_9(%arg0: i32) -> (i32, i32) {
    %c0_i32 = arith.constant 0 : i32
    %c0_i32_0 = arith.constant 0 : i32
    %c0_i32_1 = arith.constant 0 : i32
    return %c0_i32, %c0_i32_0 : i32, i32
  }
  func.func @transform_10(%arg0: i32) -> (i32, i32) {
    %c0_i32 = arith.constant 0 : i32
    %c0_i32_0 = arith.constant 0 : i32
    %c0_i32_1 = arith.constant 0 : i32
    return %c0_i32, %c0_i32_0 : i32, i32
  }
  func.func @transform_11(%arg0: i32) -> (i32, i32) {
    %c0_i32 = arith.constant 0 : i32
    %c0_i32_0 = arith.constant 0 : i32
    %c0_i32_1 = arith.constant 0 : i32
    return %c0_i32, %c0_i32_0 : i32, i32
  }
  func.func @transform_12(%arg0: i32) -> (i32, i32) {
    %c0_i32 = arith.constant 0 : i32
    %c0_i32_0 = arith.constant 0 : i32
    %c0_i32_1 = arith.constant 0 : i32
    return %c0_i32, %c0_i32_0 : i32, i32
  }
  func.func @transform_13(%arg0: i32) -> (i32, i32) {
    %c0_i32 = arith.constant 0 : i32
    %c0_i32_0 = arith.constant 0 : i32
    %c0_i32_1 = arith.constant 0 : i32
    return %c0_i32, %c0_i32_0 : i32, i32
  }
  func.func @transform_14(%arg0: i32) -> (i32, i32) {
    %c0_i32 = arith.constant 0 : i32
    %c0_i32_0 = arith.constant 0 : i32
    %c0_i32_1 = arith.constant 0 : i32
    return %c0_i32, %c0_i32_0 : i32, i32
  }
  func.func @transform_15(%arg0: i32) -> (i32, i32) {
    %c0_i32 = arith.constant 0 : i32
    %c0_i32_0 = arith.constant 0 : i32
    %c0_i32_1 = arith.constant 0 : i32
    return %c0_i32, %c0_i32_0 : i32, i32
  }
  func.func @transform_16(%arg0: i32) -> (i32, i32) {
    %c0_i32 = arith.constant 0 : i32
    %c0_i32_0 = arith.constant 0 : i32
    %c0_i32_1 = arith.constant 0 : i32
    return %c0_i32, %c0_i32_0 : i32, i32
  }
  func.func @transform_17(%arg0: i32) -> (i32, i32) {
    %c0_i32 = arith.constant 0 : i32
    %c0_i32_0 = arith.constant 0 : i32
    %c0_i32_1 = arith.constant 0 : i32
    return %c0_i32, %c0_i32_0 : i32, i32
  }
  func.func @transform_18(%arg0: i32) -> (i32, i32) {
    %c0_i32 = arith.constant 0 : i32
    %c0_i32_0 = arith.constant 0 : i32
    %c0_i32_1 = arith.constant 0 : i32
    return %c0_i32, %c0_i32_0 : i32, i32
  }
  func.func @transform_19(%arg0: i32) -> (i32, i32) {
    %c0_i32 = arith.constant 0 : i32
    %c0_i32_0 = arith.constant 0 : i32
    %c0_i32_1 = arith.constant 0 : i32
    return %c0_i32, %c0_i32_0 : i32, i32
  }
  func.func @transform_20(%arg0: i32) -> (i32, i32, i32) {
    %c0_i32 = arith.constant 0 : i32
    %c0_i32_0 = arith.constant 0 : i32
    %c0_i32_1 = arith.constant 0 : i32
    %c0_i32_2 = arith.constant 0 : i32
    return %c0_i32, %c0_i32_0, %c0_i32_1 : i32, i32, i32
  }
  func.func @transform_21(%arg0: i32) -> (i32, i32, i32) {
    %c0_i32 = arith.constant 0 : i32
    %c0_i32_0 = arith.constant 0 : i32
    %c0_i32_1 = arith.constant 0 : i32
    %c0_i32_2 = arith.constant 0 : i32
    return %c0_i32, %c0_i32_0, %c0_i32_1 : i32, i32, i32
  }
  func.func @transform_22(%arg0: i32) -> (i32, i32, i32) {
    %c0_i32 = arith.constant 0 : i32
    %c0_i32_0 = arith.constant 0 : i32
    %c0_i32_1 = arith.constant 0 : i32
    %c0_i32_2 = arith.constant 0 : i32
    return %c0_i32, %c0_i32_0, %c0_i32_1 : i32, i32, i32
  }
  func.func @transform_23(%arg0: i32) -> (i32, i32) {
    %c0_i32 = arith.constant 0 : i32
    %c0_i32_0 = arith.constant 0 : i32
    %c0_i32_1 = arith.constant 0 : i32
    return %c0_i32, %c0_i32_0 : i32, i32
  }
  func.func @transform_24(%arg0: i32) -> (i32, i32) {
    %c0_i32 = arith.constant 0 : i32
    %c0_i32_0 = arith.constant 0 : i32
    %c0_i32_1 = arith.constant 0 : i32
    return %c0_i32, %c0_i32_0 : i32, i32
  }
  func.func @transform_25(%arg0: i32) -> (i32, i32) {
    %c0_i32 = arith.constant 0 : i32
    %c0_i32_0 = arith.constant 0 : i32
    %c0_i32_1 = arith.constant 0 : i32
    return %c0_i32, %c0_i32_0 : i32, i32
  }
  func.func @transform_26(%arg0: i32) -> (i32, i32) {
    %c0_i32 = arith.constant 0 : i32
    %c0_i32_0 = arith.constant 0 : i32
    %c0_i32_1 = arith.constant 0 : i32
    return %c0_i32, %c0_i32_0 : i32, i32
  }
  func.func @transform_27(%arg0: i32) -> (i32, i32) {
    %c0_i32 = arith.constant 0 : i32
    %c0_i32_0 = arith.constant 0 : i32
    %c0_i32_1 = arith.constant 0 : i32
    return %c0_i32, %c0_i32_0 : i32, i32
  }
  func.func @transform_28(%arg0: i32) -> (i32, i32) {
    %c0_i32 = arith.constant 0 : i32
    %c0_i32_0 = arith.constant 0 : i32
    %c0_i32_1 = arith.constant 0 : i32
    return %c0_i32, %c0_i32_0 : i32, i32
  }
  func.func @transform_29(%arg0: i32) -> (i32, i32) {
    %c0_i32 = arith.constant 0 : i32
    %c0_i32_0 = arith.constant 0 : i32
    %c0_i32_1 = arith.constant 0 : i32
    return %c0_i32, %c0_i32_0 : i32, i32
  }
  func.func @transform_30(%arg0: i32) -> (i32, i32) {
    %c0_i32 = arith.constant 0 : i32
    %c0_i32_0 = arith.constant 0 : i32
    %c0_i32_1 = arith.constant 0 : i32
    return %c0_i32, %c0_i32_0 : i32, i32
  }
  func.func @transform_31(%arg0: i32) -> (i32, i32) {
    %c0_i32 = arith.constant 0 : i32
    %c0_i32_0 = arith.constant 0 : i32
    %c0_i32_1 = arith.constant 0 : i32
    return %c0_i32, %c0_i32_0 : i32, i32
  }
  func.func @transform_32(%arg0: i32) -> (i32, i32) {
    %c0_i32 = arith.constant 0 : i32
    %c0_i32_0 = arith.constant 0 : i32
    %c0_i32_1 = arith.constant 0 : i32
    return %c0_i32, %c0_i32_0 : i32, i32
  }
  func.func @transform_33(%arg0: i32) -> (i32, i32) {
    %c0_i32 = arith.constant 0 : i32
    %c0_i32_0 = arith.constant 0 : i32
    %c0_i32_1 = arith.constant 0 : i32
    return %c0_i32, %c0_i32_0 : i32, i32
  }
  func.func @transform_34(%arg0: i32) -> (i32, i32) {
    %c0_i32 = arith.constant 0 : i32
    %c0_i32_0 = arith.constant 0 : i32
    %c0_i32_1 = arith.constant 0 : i32
    return %c0_i32, %c0_i32_0 : i32, i32
  }
  func.func @transform_35(%arg0: i32) -> (i32, i32) {
    %c0_i32 = arith.constant 0 : i32
    %c0_i32_0 = arith.constant 0 : i32
    %c0_i32_1 = arith.constant 0 : i32
    return %c0_i32, %c0_i32_0 : i32, i32
  }
  func.func @transform_36(%arg0: i32) -> (i32, i32, i32) {
    %c0_i32 = arith.constant 0 : i32
    %c0_i32_0 = arith.constant 0 : i32
    %c0_i32_1 = arith.constant 0 : i32
    return %arg0, %c0_i32, %c0_i32_0 : i32, i32, i32
  }
}

</mosaic_0001>

<llo_original>
// kernel: tpu_custom_call.1
$region0: #{tpu_custom_call.1}
  #allocation0 [shape = 'u32[]', space=smem, size = 0x4, offset = 0x4, fixed_abs, tag = 'smem constant byte address 0x4 - core index']
  #allocation1 [shape = 'u32[144,128]{1,0:T(1,128)}', space=vmem, size = 0x12000, scoped, tag = 'internal scratch']
  #allocation2 [shape = 'f32[1,1]{1,0:T(1,128)S(1)}', space=vmem, size = 0x200, scoped, tag = 'scoped memory for tpu_custom_call.1']
  %s0 = inlined_call_operand.smem [shape: u32[37], index: -1, kind: input, shape index: {}]
  %s1 = sld [smem:[%s0]]
  %s2 = scalar_lea.smem %s0, 1
  %s3 = sld [smem:[%s2]]
  %s4 = scalar_lea.smem %s0, 2
  %s5 = sld [smem:[%s4]]
  %s6 = scalar_lea.smem %s0, 3
  %s7 = sld [smem:[%s6]]
  %s8 = scalar_lea.smem %s0, 4
  %s9 = sld [smem:[%s8]]
  %s10 = scalar_lea.smem %s0, 5
  %s11 = sld [smem:[%s10]]
  %s12 = scalar_lea.smem %s0, 6
  %s13 = sld [smem:[%s12]]
  %s14 = scalar_lea.smem %s0, 7
  %s15 = sld [smem:[%s14]]
  %s16 = scalar_lea.smem %s0, 8
  %s17 = sld [smem:[%s16]]
  %s18 = scalar_lea.smem %s0, 9
  %s19 = sld [smem:[%s18]]
  %s20 = scalar_lea.smem %s0, 10
  %s21 = sld [smem:[%s20]]
  %s22 = scalar_lea.smem %s0, 11
  %s23 = sld [smem:[%s22]]
  %s24 = scalar_lea.smem %s0, 12
  %s25 = sld [smem:[%s24]]
  %s26 = scalar_lea.smem %s0, 13
  %s27 = sld [smem:[%s26]]
  %s28 = scalar_lea.smem %s0, 14
  %s29 = sld [smem:[%s28]]
  %s30 = scalar_lea.smem %s0, 15
  %s31 = sld [smem:[%s30]]
  %s32 = scalar_lea.smem %s0, 16
  %s33 = sld [smem:[%s32]]
  %s34 = scalar_lea.smem %s0, 17
  %s35 = sld [smem:[%s34]]
  %s36 = scalar_lea.smem %s0, 18
  %s37 = sld [smem:[%s36]]
  %s38 = scalar_lea.smem %s0, 19
  %s39 = sld [smem:[%s38]]
  %s40 = scalar_lea.smem %s0, 20
  %s41 = sld [smem:[%s40]]
  %s42 = scalar_lea.smem %s0, 21
  %s43 = sld [smem:[%s42]]
  %s44 = scalar_lea.smem %s0, 22
  %s45 = sld [smem:[%s44]]
  %s46 = scalar_lea.smem %s0, 23
  %s47 = sld [smem:[%s46]]
  %s48 = scalar_lea.smem %s0, 24
  %s49 = sld [smem:[%s48]]
  %s50 = scalar_lea.smem %s0, 25
  %s51 = sld [smem:[%s50]]
  %s52 = scalar_lea.smem %s0, 26
  %s53 = sld [smem:[%s52]]
  %s54 = scalar_lea.smem %s0, 27
  %s55 = sld [smem:[%s54]]
  %s56 = scalar_lea.smem %s0, 28
  %s57 = sld [smem:[%s56]]
  %s58 = scalar_lea.smem %s0, 29
  %s59 = sld [smem:[%s58]]
  %s60 = scalar_lea.smem %s0, 30
  %s61 = sld [smem:[%s60]]
  %s62 = scalar_lea.smem %s0, 31
  %s63 = sld [smem:[%s62]]
  %s64 = scalar_lea.smem %s0, 32
  %s65 = sld [smem:[%s64]]
  %s66 = scalar_lea.smem %s0, 33
  %s67 = sld [smem:[%s66]]
  %s68 = scalar_lea.smem %s0, 34
  %s69 = sld [smem:[%s68]]
  %s70 = scalar_lea.smem %s0, 35
  %s71 = sld [smem:[%s70]]
  %s72 = scalar_lea.smem %s0, 36
  %s73 = sld [smem:[%s72]]
  %s74 = sld [smem:[#allocation0]]
  $region272: #{tpu_custom_call.1} parent=0
    _
  %s76 = ssub.s32 1, %s74
  %s77 = scalar_select 0, %s76, %s74
  %v78 = vstv %s15
  %79 = vst [vmem:[#allocation2] sm:$0x1] %v78
  $region1: #{tpu_custom_call.1} parent=0
    #allocation3 [shape = 'u8[4096]{0}', space=vmem, size = 0x1000, scoped, tag = 'input window, operand 0']
    #allocation4 [shape = 's32[2]{0}', space=sflag, size = 0x8, scoped, tag = 'scoped memory for tpu_custom_call.1']
    #allocation5 [shape = 's32[2]{0}', space=sflag, size = 0x8, scoped, tag = 'scoped memory for tpu_custom_call.1']
    #allocation6 [shape = 'u8[1024]{0}', space=vmem, size = 0x400, scoped, tag = 'input window, operand 6']
    #allocation7 [shape = 's32[2]{0}', space=sflag, size = 0x8, scoped, tag = 'scoped memory for tpu_custom_call.1']
    #allocation8 [shape = 'u8[8192]{0}', space=vmem, size = 0x2000, scoped, tag = 'input window, operand 8, single buffered']
    #allocation9 [shape = 'u8[512]{0}', space=vmem, size = 0x400, scoped, tag = 'input window, operand 9, single buffered']
    #allocation10 [shape = 's32[1]{0}', space=sflag, size = 0x4, scoped, tag = 'scoped memory for tpu_custom_call.1']
    #allocation11 [shape = 'u8[8192]{0}', space=vmem, size = 0x2000, scoped, tag = 'input window, operand 10, single buffered']
    #allocation12 [shape = 'u8[512]{0}', space=vmem, size = 0x400, scoped, tag = 'input window, operand 11, single buffered']
    #allocation13 [shape = 's32[1]{0}', space=sflag, size = 0x4, scoped, tag = 'scoped memory for tpu_custom_call.1']
    #allocation14 [shape = 'u8[32768]{0}', space=vmem, size = 0x8000, scoped, tag = 'input window, operand 12, single buffered']
    #allocation15 [shape = 'u8[2048]{0}', space=vmem, size = 0x800, scoped, tag = 'input window, operand 13, single buffered']
    #allocation16 [shape = 's32[1]{0}', space=sflag, size = 0x4, scoped, tag = 'scoped memory for tpu_custom_call.1']
    #allocation17 [shape = 'u8[2048]{0}', space=vmem, size = 0x800, scoped, tag = 'input window, operand 14, single buffered']
    #allocation18 [shape = 'u8[2048]{0}', space=vmem, size = 0x800, scoped, tag = 'input window, operand 15, single buffered']
    #allocation19 [shape = 's32[1]{0}', space=sflag, size = 0x4, scoped, tag = 'scoped memory for tpu_custom_call.1']
    #allocation20 [shape = 'u8[512]{0}', space=vmem, size = 0x400, scoped, tag = 'input window, operand 17, single buffered']
    #allocation21 [shape = 'u8[8192]{0}', space=vmem, size = 0x2000, scoped, tag = 'input window, operand 18, single buffered']
    #allocation22 [shape = 's32[1]{0}', space=sflag, size = 0x4, scoped, tag = 'scoped memory for tpu_custom_call.1']
    #allocation23 [shape = 'u8[512]{0}', space=vmem, size = 0x400, scoped, tag = 'input window, operand 19, single buffered']
    #allocation24 [shape = 'u8[12288]{0}', space=vmem, size = 0x3000, scoped, tag = 'input window, operand 21, single buffered']
    #allocation25 [shape = 's32[1]{0}', space=sflag, size = 0x4, scoped, tag = 'scoped memory for tpu_custom_call.1']
    #allocation26 [shape = 'u8[512]{0}', space=vmem, size = 0x400, scoped, tag = 'input window, operand 23, single buffered']
    #allocation27 [shape = 'u8[8192]{0}', space=vmem, size = 0x2000, scoped, tag = 'input window, operand 24, single buffered']
    #allocation28 [shape = 's32[1]{0}', space=sflag, size = 0x4, scoped, tag = 'scoped memory for tpu_custom_call.1']
    #allocation29 [shape = 'u8[512]{0}', space=vmem, size = 0x400, scoped, tag = 'input window, operand 25, single buffered']
    #allocation30 [shape = 'u8[98304]{0}', space=vmem, size = 0x18000, scoped, tag = 'input window, operand 28, single buffered']
    #allocation31 [shape = 's32[1]{0}', space=sflag, size = 0x4, scoped, tag = 'scoped memory for tpu_custom_call.1']
    #allocation32 [shape = 'u8[98304]{0}', space=vmem, size = 0x18000, scoped, tag = 'input window, operand 29, single buffered']
    #allocation33 [shape = 'u8[98304]{0}', space=vmem, size = 0x18000, scoped, tag = 'input window, operand 30, single buffered']
    #allocation34 [shape = 's32[1]{0}', space=sflag, size = 0x4, scoped, tag = 'scoped memory for tpu_custom_call.1']
    #allocation35 [shape = 'u8[1536]{0}', space=vmem, size = 0x800, scoped, tag = 'input window, operand 31, single buffered']
    #allocation36 [shape = 'u8[512]{0}', space=vmem, size = 0x400, scoped, tag = 'input window, operand 33, single buffered']
    #allocation37 [shape = 's32[1]{0}', space=sflag, size = 0x4, scoped, tag = 'scoped memory for tpu_custom_call.1']
    #allocation38 [shape = 'u8[1024]{0}', space=vmem, size = 0x400, scoped, tag = 'output window, operand 0']
    %80 = vsyncpa [#allocation4], 0
    %s81 = scalar_lea.sflag [#allocation4], 1
    %82 = vsyncpa %s81, 0
    %83 = vsyncpa [#allocation7], 0
    %s84 = scalar_lea.sflag [#allocation7], 1
    %85 = vsyncpa %s84, 0
    %86 = vsyncpa [#allocation10], 0
    %87 = vsyncpa [#allocation13], 0
    %88 = vsyncpa [#allocation16], 0
    %89 = vsyncpa [#allocation19], 0
    %90 = vsyncpa [#allocation22], 0
    %91 = vsyncpa [#allocation25], 0
    %92 = vsyncpa [#allocation28], 0
    %93 = vsyncpa [#allocation31], 0
    %94 = vsyncpa [#allocation34], 0
    %95 = vsyncpa [#allocation37], 0
    %96 = vsyncpa [#allocation5], 0
    %s97 = scalar_lea.sflag [#allocation5], 1
    %98 = vsyncpa %s97, 0
    loop: start=0, step=1, limit=4
    $region2: #{tpu_custom_call.1} parent=1 // loop_pre_header
      _
    $region3: #{tpu_custom_call.1} parent=1 // loop_header
      %s100 = sphi 0, %s104
      %p101 = scmp.ge.s32.totalorder %s100, 4
      %s110 = sphi 0, %s112
      %s113 = sphi 0, %s110
      %s114 = sphi 0, %s113
      %s130 = sphi 0, %s114
      %s136 = sphi 0, %s138
      %s139 = sphi 0, %s136
      %s140 = sphi 0, %s139
      %s156 = sphi 0, %s140
      %s162 = sphi 0, %s164
      %s165 = sphi 0, %s162
      %s166 = sphi 0, %s165
      %s182 = sphi 0, %s166
      %s188 = sphi 0, %s190
      %s191 = sphi 0, %s188
      %s192 = sphi 0, %s191
      %s208 = sphi 0, %s192
      %s214 = sphi 0, %s216
      %s217 = sphi 0, %s214
      %s218 = sphi 0, %s217
      %s234 = sphi 0, %s218
      %s240 = sphi 0, %s242
      %s243 = sphi 0, %s240
      %s244 = sphi 0, %s243
      %s260 = sphi 0, %s244
      %s266 = sphi 0, %s268
      %s269 = sphi 0, %s266
      %s270 = sphi 0, %s269
      %s286 = sphi 0, %s270
      %s290 = sphi 0, %s290
      %s292 = sphi 0, %s290
      %s293 = sphi 0, %s292
      %s307 = sphi 0, %s293
      %s311 = sphi 0, %s311
      %s313 = sphi 0, %s311
      %s314 = sphi 0, %s313
      %s328 = sphi 0, %s314
      %s332 = sphi 0, %s332
      %s334 = sphi 0, %s332
      %s335 = sphi 0, %s334
      %s349 = sphi 0, %s335
      %s353 = sphi 0, %s353
      %s355 = sphi 0, %s353
      %s356 = sphi 0, %s355
      %s370 = sphi 0, %s356
      %s374 = sphi 0, %s374
      %s376 = sphi 0, %s374
      %s377 = sphi 0, %s376
      %s391 = sphi 0, %s377
      %s395 = sphi 0, %s395
      %s397 = sphi 0, %s395
      %s398 = sphi 0, %s397
      %s412 = sphi 0, %s398
      %s416 = sphi 0, %s416
      %s418 = sphi 0, %s416
      %s419 = sphi 0, %s418
      %s433 = sphi 0, %s419
      %s437 = sphi 0, %s437
      %s439 = sphi 0, %s437
      %s440 = sphi 0, %s439
      %s454 = sphi 0, %s440
      %s458 = sphi 0, %s458
      %s460 = sphi 0, %s458
      %s461 = sphi 0, %s460
      %s475 = sphi 0, %s461
      %s479 = sphi 0, %s479
      %s481 = sphi 0, %s479
      %s482 = sphi 0, %s481
      %s496 = sphi 0, %s482
      %s500 = sphi 0, %s500
      %s502 = sphi 0, %s500
      %s503 = sphi 0, %s502
      %s517 = sphi 0, %s503
      %s521 = sphi 0, %s521
      %s523 = sphi 0, %s521
      %s524 = sphi 0, %s523
      %s538 = sphi 0, %s524
      %s542 = sphi 0, %s542
      %s544 = sphi 0, %s542
      %s545 = sphi 0, %s544
      %s559 = sphi 0, %s545
      %s563 = sphi 0, %s563
      %s565 = sphi 0, %s563
      %s566 = sphi 0, %s565
      %s580 = sphi 0, %s566
      %s584 = sphi 0, %s584
      %s586 = sphi 0, %s584
      %s587 = sphi 0, %s586
      %s601 = sphi 0, %s587
      %s605 = sphi 0, %s605
      %s607 = sphi 0, %s605
      %s608 = sphi 0, %s607
      %s622 = sphi 0, %s608
      %s626 = sphi 0, %s626
      %s628 = sphi 0, %s626
      %s629 = sphi 0, %s628
      %s643 = sphi 0, %s629
      %s647 = sphi 0, %s647
      %s649 = sphi 0, %s647
      %s650 = sphi 0, %s649
      %s664 = sphi 0, %s650
      %s668 = sphi 0, %s668
      %s670 = sphi 0, %s668
      %s671 = sphi 0, %s670
      %s685 = sphi 0, %s671
      %s689 = sphi 0, %s689
      %s691 = sphi 0, %s689
      %s692 = sphi 0, %s691
      %s706 = sphi 0, %s692
      %s710 = sphi 0, %s710
      %s712 = sphi 0, %s710
      %s713 = sphi 0, %s712
      %s727 = sphi 0, %s713
      %s731 = sphi 0, %s731
      %s733 = sphi 0, %s731
      %s734 = sphi 0, %s733
      %s748 = sphi 0, %s734
      %s752 = sphi 0, %s752
      %s754 = sphi 0, %s752
      %s755 = sphi 0, %s754
      %s769 = sphi 0, %s755
      %s773 = sphi 0, %s773
      %s775 = sphi 0, %s773
      %s776 = sphi 0, %s775
      %s790 = sphi 0, %s776
      %s794 = sphi 0, %s794
      %s796 = sphi 0, %s794
      %s797 = sphi 0, %s796
      %s811 = sphi 0, %s797
      %s815 = sphi 0, %s815
      %s817 = sphi 0, %s815
      %s818 = sphi 0, %s817
      %s832 = sphi 0, %s818
      %s836 = sphi 0, %s836
      %s838 = sphi 0, %s836
      %s839 = sphi 0, %s838
      %s853 = sphi 0, %s839
      %s857 = sphi 0, %s857
      %s859 = sphi 0, %s857
      %s860 = sphi 0, %s859
      %s874 = sphi 0, %s860
      %s878 = sphi 0, %s878
      %s880 = sphi 0, %s878
      %s881 = sphi 0, %s880
      %s895 = sphi 0, %s881
      %s901 = sphi 0, %s903
      %s904 = sphi 0, %s901
      %s905 = sphi 0, %s904
      %s921 = sphi 0, %s905
    $region4: #{tpu_custom_call.1} parent=1 // loop_header_branch
      %103 = sbr.rel (%p101) target = $region8
    $region5: #{tpu_custom_call.1} parent=1 // loop_body
      %s105 = ssub.s32 %s100, 1
      %s106 = ssub.s32 %s100, 2
      %s107 = sadd.s32 %s100, 1
      %s108 = ssub.s32 %s100, %s107
      %p109 = scmp.eq.s32.totalorder %s108, 0
      %s111 = sadd.s32 %s110, 1
      %s112 = scalar_select %p109, %s110, %s111
      %p115 = pneg %p109
      %p116 = scmp.eq.s32.totalorder %s100, 1
      %p117 = por %p115, %p116
      %p118 = scmp.ne.s32.totalorder %s110, %s113
      %p119 = scmp.eq.s32.totalorder %s100, 0
      %p120 = por %p118, %p119
      %p121 = scmp.ne.s32.totalorder %s110, %s113
      %p122 = scmp.eq.s32.totalorder %s105, 1
      %p123 = por %p121, %p122
      %p124 = scmp.ne.s32.totalorder %s113, %s114
      %p125 = scmp.eq.s32.totalorder %s105, 0
      %p126 = por %p124, %p125
      %p127 = scmp.ne.s32.totalorder %s113, %s114
      %p128 = scmp.eq.s32.totalorder %s106, 1
      %p129 = por %p127, %p128
      %p131 = scmp.ne.s32.totalorder %s114, %s130
      %p132 = scmp.eq.s32.totalorder %s106, 0
      %p133 = por %p131, %p132
      %s134 = ssub.s32 %s100, %s107
      %p135 = scmp.eq.s32.totalorder %s134, 0
      %s137 = sadd.s32 %s136, 1
      %s138 = scalar_select %p135, %s136, %s137
      %p141 = pneg %p135
      %p142 = scmp.eq.s32.totalorder %s100, 1
      %p143 = por %p141, %p142
      %p144 = scmp.ne.s32.totalorder %s136, %s139
      %p145 = scmp.eq.s32.totalorder %s100, 0
      %p146 = por %p144, %p145
      %p147 = scmp.ne.s32.totalorder %s136, %s139
      %p148 = scmp.eq.s32.totalorder %s105, 1
      %p149 = por %p147, %p148
      %p150 = scmp.ne.s32.totalorder %s139, %s140
      %p151 = scmp.eq.s32.totalorder %s105, 0
      %p152 = por %p150, %p151
      %p153 = scmp.ne.s32.totalorder %s139, %s140
      %p154 = scmp.eq.s32.totalorder %s106, 1
      %p155 = por %p153, %p154
      %p157 = scmp.ne.s32.totalorder %s140, %s156
      %p158 = scmp.eq.s32.totalorder %s106, 0
      %p159 = por %p157, %p158
      %s160 = ssub.s32 %s100, %s107
      %p161 = scmp.eq.s32.totalorder %s160, 0
      %s163 = sadd.s32 %s162, 1
      %s164 = scalar_select %p161, %s162, %s163
      %p167 = pneg %p161
      %p168 = scmp.eq.s32.totalorder %s100, 1
      %p169 = por %p167, %p168
      %p170 = scmp.ne.s32.totalorder %s162, %s165
      %p171 = scmp.eq.s32.totalorder %s100, 0
      %p172 = por %p170, %p171
      %p173 = scmp.ne.s32.totalorder %s162, %s165
      %p174 = scmp.eq.s32.totalorder %s105, 1
      %p175 = por %p173, %p174
      %p176 = scmp.ne.s32.totalorder %s165, %s166
      %p177 = scmp.eq.s32.totalorder %s105, 0
      %p178 = por %p176, %p177
      %p179 = scmp.ne.s32.totalorder %s165, %s166
      %p180 = scmp.eq.s32.totalorder %s106, 1
      %p181 = por %p179, %p180
      %p183 = scmp.ne.s32.totalorder %s166, %s182
      %p184 = scmp.eq.s32.totalorder %s106, 0
      %p185 = por %p183, %p184
      %s186 = ssub.s32 %s100, %s107
      %p187 = scmp.eq.s32.totalorder %s186, 0
      %s189 = sadd.s32 %s188, 1
      %s190 = scalar_select %p187, %s188, %s189
      %p193 = pneg %p187
      %p194 = scmp.eq.s32.totalorder %s100, 1
      %p195 = por %p193, %p194
      %p196 = scmp.ne.s32.totalorder %s188, %s191
      %p197 = scmp.eq.s32.totalorder %s100, 0
      %p198 = por %p196, %p197
      %p199 = scmp.ne.s32.totalorder %s188, %s191
      %p200 = scmp.eq.s32.totalorder %s105, 1
      %p201 = por %p199, %p200
      %p202 = scmp.ne.s32.totalorder %s191, %s192
      %p203 = scmp.eq.s32.totalorder %s105, 0
      %p204 = por %p202, %p203
      %p205 = scmp.ne.s32.totalorder %s191, %s192
      %p206 = scmp.eq.s32.totalorder %s106, 1
      %p207 = por %p205, %p206
      %p209 = scmp.ne.s32.totalorder %s192, %s208
      %p210 = scmp.eq.s32.totalorder %s106, 0
      %p211 = por %p209, %p210
      %s212 = ssub.s32 %s100, %s107
      %p213 = scmp.eq.s32.totalorder %s212, 0
      %s215 = sadd.s32 %s214, 1
      %s216 = scalar_select %p213, %s214, %s215
      %p219 = pneg %p213
      %p220 = scmp.eq.s32.totalorder %s100, 1
      %p221 = por %p219, %p220
      %p222 = scmp.ne.s32.totalorder %s214, %s217
      %p223 = scmp.eq.s32.totalorder %s100, 0
      %p224 = por %p222, %p223
      %p225 = scmp.ne.s32.totalorder %s214, %s217
      %p226 = scmp.eq.s32.totalorder %s105, 1
      %p227 = por %p225, %p226
      %p228 = scmp.ne.s32.totalorder %s217, %s218
      %p229 = scmp.eq.s32.totalorder %s105, 0
      %p230 = por %p228, %p229
      %p231 = scmp.ne.s32.totalorder %s217, %s218
      %p232 = scmp.eq.s32.totalorder %s106, 1
      %p233 = por %p231, %p232
      %p235 = scmp.ne.s32.totalorder %s218, %s234
      %p236 = scmp.eq.s32.totalorder %s106, 0
      %p237 = por %p235, %p236
      %s238 = ssub.s32 %s100, %s107
      %p239 = scmp.eq.s32.totalorder %s238, 0
      %s241 = sadd.s32 %s240, 1
      %s242 = scalar_select %p239, %s240, %s241
      %p245 = pneg %p239
      %p246 = scmp.eq.s32.totalorder %s100, 1
      %p247 = por %p245, %p246
      %p248 = scmp.ne.s32.totalorder %s240, %s243
      %p249 = scmp.eq.s32.totalorder %s100, 0
      %p250 = por %p248, %p249
      %p251 = scmp.ne.s32.totalorder %s240, %s243
      %p252 = scmp.eq.s32.totalorder %s105, 1
      %p253 = por %p251, %p252
      %p254 = scmp.ne.s32.totalorder %s243, %s244
      %p255 = scmp.eq.s32.totalorder %s105, 0
      %p256 = por %p254, %p255
      %p257 = scmp.ne.s32.totalorder %s243, %s244
      %p258 = scmp.eq.s32.totalorder %s106, 1
      %p259 = por %p257, %p258
      %p261 = scmp.ne.s32.totalorder %s244, %s260
      %p262 = scmp.eq.s32.totalorder %s106, 0
      %p263 = por %p261, %p262
      %s264 = ssub.s32 %s100, %s107
      %p265 = scmp.eq.s32.totalorder %s264, 0
      %s267 = sadd.s32 %s266, 1
      %s268 = scalar_select %p265, %s266, %s267
      %p271 = pneg %p265
      %p272 = scmp.eq.s32.totalorder %s100, 1
      %p273 = por %p271, %p272
      %p274 = scmp.ne.s32.totalorder %s266, %s269
      %p275 = scmp.eq.s32.totalorder %s100, 0
      %p276 = por %p274, %p275
      %p277 = scmp.ne.s32.totalorder %s266, %s269
      %p278 = scmp.eq.s32.totalorder %s105, 1
      %p279 = por %p277, %p278
      %p280 = scmp.ne.s32.totalorder %s269, %s270
      %p281 = scmp.eq.s32.totalorder %s105, 0
      %p282 = por %p280, %p281
      %p283 = scmp.ne.s32.totalorder %s269, %s270
      %p284 = scmp.eq.s32.totalorder %s106, 1
      %p285 = por %p283, %p284
      %p287 = scmp.ne.s32.totalorder %s270, %s286
      %p288 = scmp.eq.s32.totalorder %s106, 0
      %p289 = por %p287, %p288
      %s291 = sadd.s32 %s290, 1
      %p294 = scmp.eq.s32.totalorder %s100, 1
      %p295 = scmp.ne.s32.totalorder %s290, %s292
      %p296 = scmp.eq.s32.totalorder %s100, 0
      %p297 = por %p295, %p296
      %p298 = scmp.ne.s32.totalorder %s290, %s292
      %p299 = scmp.eq.s32.totalorder %s105, 1
      %p300 = por %p298, %p299
      %p301 = scmp.ne.s32.totalorder %s292, %s293
      %p302 = scmp.eq.s32.totalorder %s105, 0
      %p303 = por %p301, %p302
      %p304 = scmp.ne.s32.totalorder %s292, %s293
      %p305 = scmp.eq.s32.totalorder %s106, 1
      %p306 = por %p304, %p305
      %p308 = scmp.ne.s32.totalorder %s293, %s307
      %p309 = scmp.eq.s32.totalorder %s106, 0
      %p310 = por %p308, %p309
      %s312 = sadd.s32 %s311, 1
      %p315 = scmp.eq.s32.totalorder %s100, 1
      %p316 = scmp.ne.s32.totalorder %s311, %s313
      %p317 = scmp.eq.s32.totalorder %s100, 0
      %p318 = por %p316, %p317
      %p319 = scmp.ne.s32.totalorder %s311, %s313
      %p320 = scmp.eq.s32.totalorder %s105, 1
      %p321 = por %p319, %p320
      %p322 = scmp.ne.s32.totalorder %s313, %s314
      %p323 = scmp.eq.s32.totalorder %s105, 0
      %p324 = por %p322, %p323
      %p325 = scmp.ne.s32.totalorder %s313, %s314
      %p326 = scmp.eq.s32.totalorder %s106, 1
      %p327 = por %p325, %p326
      %p329 = scmp.ne.s32.totalorder %s314, %s328
      %p330 = scmp.eq.s32.totalorder %s106, 0
      %p331 = por %p329, %p330
      %s333 = sadd.s32 %s332, 1
      %p336 = scmp.eq.s32.totalorder %s100, 1
      %p337 = scmp.ne.s32.totalorder %s332, %s334
      %p338 = scmp.eq.s32.totalorder %s100, 0
      %p339 = por %p337, %p338
      %p340 = scmp.ne.s32.totalorder %s332, %s334
      %p341 = scmp.eq.s32.totalorder %s105, 1
      %p342 = por %p340, %p341
      %p343 = scmp.ne.s32.totalorder %s334, %s335
      %p344 = scmp.eq.s32.totalorder %s105, 0
      %p345 = por %p343, %p344
      %p346 = scmp.ne.s32.totalorder %s334, %s335
      %p347 = scmp.eq.s32.totalorder %s106, 1
      %p348 = por %p346, %p347
      %p350 = scmp.ne.s32.totalorder %s335, %s349
      %p351 = scmp.eq.s32.totalorder %s106, 0
      %p352 = por %p350, %p351
      %s354 = sadd.s32 %s353, 1
      %p357 = scmp.eq.s32.totalorder %s100, 1
      %p358 = scmp.ne.s32.totalorder %s353, %s355
      %p359 = scmp.eq.s32.totalorder %s100, 0
      %p360 = por %p358, %p359
      %p361 = scmp.ne.s32.totalorder %s353, %s355
      %p362 = scmp.eq.s32.totalorder %s105, 1
      %p363 = por %p361, %p362
      %p364 = scmp.ne.s32.totalorder %s355, %s356
      %p365 = scmp.eq.s32.totalorder %s105, 0
      %p366 = por %p364, %p365
      %p367 = scmp.ne.s32.totalorder %s355, %s356
      %p368 = scmp.eq.s32.totalorder %s106, 1
      %p369 = por %p367, %p368
      %p371 = scmp.ne.s32.totalorder %s356, %s370
      %p372 = scmp.eq.s32.totalorder %s106, 0
      %p373 = por %p371, %p372
      %s375 = sadd.s32 %s374, 1
      %p378 = scmp.eq.s32.totalorder %s100, 1
      %p379 = scmp.ne.s32.totalorder %s374, %s376
      %p380 = scmp.eq.s32.totalorder %s100, 0
      %p381 = por %p379, %p380
      %p382 = scmp.ne.s32.totalorder %s374, %s376
      %p383 = scmp.eq.s32.totalorder %s105, 1
      %p384 = por %p382, %p383
      %p385 = scmp.ne.s32.totalorder %s376, %s377
      %p386 = scmp.eq.s32.totalorder %s105, 0
      %p387 = por %p385, %p386
      %p388 = scmp.ne.s32.totalorder %s376, %s377
      %p389 = scmp.eq.s32.totalorder %s106, 1
      %p390 = por %p388, %p389
      %p392 = scmp.ne.s32.totalorder %s377, %s391
      %p393 = scmp.eq.s32.totalorder %s106, 0
      %p394 = por %p392, %p393
      %s396 = sadd.s32 %s395, 1
      %p399 = scmp.eq.s32.totalorder %s100, 1
      %p400 = scmp.ne.s32.totalorder %s395, %s397
      %p401 = scmp.eq.s32.totalorder %s100, 0
      %p402 = por %p400, %p401
      %p403 = scmp.ne.s32.totalorder %s395, %s397
      %p404 = scmp.eq.s32.totalorder %s105, 1
      %p405 = por %p403, %p404
      %p406 = scmp.ne.s32.totalorder %s397, %s398
      %p407 = scmp.eq.s32.totalorder %s105, 0
      %p408 = por %p406, %p407
      %p409 = scmp.ne.s32.totalorder %s397, %s398
      %p410 = scmp.eq.s32.totalorder %s106, 1
      %p411 = por %p409, %p410
      %p413 = scmp.ne.s32.totalorder %s398, %s412
      %p414 = scmp.eq.s32.totalorder %s106, 0
      %p415 = por %p413, %p414
      %s417 = sadd.s32 %s416, 1
      %p420 = scmp.eq.s32.totalorder %s100, 1
      %p421 = scmp.ne.s32.totalorder %s416, %s418
      %p422 = scmp.eq.s32.totalorder %s100, 0
      %p423 = por %p421, %p422
      %p424 = scmp.ne.s32.totalorder %s416, %s418
      %p425 = scmp.eq.s32.totalorder %s105, 1
      %p426 = por %p424, %p425
      %p427 = scmp.ne.s32.totalorder %s418, %s419
      %p428 = scmp.eq.s32.totalorder %s105, 0
      %p429 = por %p427, %p428
      %p430 = scmp.ne.s32.totalorder %s418, %s419
      %p431 = scmp.eq.s32.totalorder %s106, 1
      %p432 = por %p430, %p431
      %p434 = scmp.ne.s32.totalorder %s419, %s433
      %p435 = scmp.eq.s32.totalorder %s106, 0
      %p436 = por %p434, %p435
      %s438 = sadd.s32 %s437, 1
      %p441 = scmp.eq.s32.totalorder %s100, 1
      %p442 = scmp.ne.s32.totalorder %s437, %s439
      %p443 = scmp.eq.s32.totalorder %s100, 0
      %p444 = por %p442, %p443
      %p445 = scmp.ne.s32.totalorder %s437, %s439
      %p446 = scmp.eq.s32.totalorder %s105, 1
      %p447 = por %p445, %p446
      %p448 = scmp.ne.s32.totalorder %s439, %s440
      %p449 = scmp.eq.s32.totalorder %s105, 0
      %p450 = por %p448, %p449
      %p451 = scmp.ne.s32.totalorder %s439, %s440
      %p452 = scmp.eq.s32.totalorder %s106, 1
      %p453 = por %p451, %p452
      %p455 = scmp.ne.s32.totalorder %s440, %s454
      %p456 = scmp.eq.s32.totalorder %s106, 0
      %p457 = por %p455, %p456
      %s459 = sadd.s32 %s458, 1
      %p462 = scmp.eq.s32.totalorder %s100, 1
      %p463 = scmp.ne.s32.totalorder %s458, %s460
      %p464 = scmp.eq.s32.totalorder %s100, 0
      %p465 = por %p463, %p464
      %p466 = scmp.ne.s32.totalorder %s458, %s460
      %p467 = scmp.eq.s32.totalorder %s105, 1
      %p468 = por %p466, %p467
      %p469 = scmp.ne.s32.totalorder %s460, %s461
      %p470 = scmp.eq.s32.totalorder %s105, 0
      %p471 = por %p469, %p470
      %p472 = scmp.ne.s32.totalorder %s460, %s461
      %p473 = scmp.eq.s32.totalorder %s106, 1
      %p474 = por %p472, %p473
      %p476 = scmp.ne.s32.totalorder %s461, %s475
      %p477 = scmp.eq.s32.totalorder %s106, 0
      %p478 = por %p476, %p477
      %s480 = sadd.s32 %s479, 1
      %p483 = scmp.eq.s32.totalorder %s100, 1
      %p484 = scmp.ne.s32.totalorder %s479, %s481
      %p485 = scmp.eq.s32.totalorder %s100, 0
      %p486 = por %p484, %p485
      %p487 = scmp.ne.s32.totalorder %s479, %s481
      %p488 = scmp.eq.s32.totalorder %s105, 1
      %p489 = por %p487, %p488
      %p490 = scmp.ne.s32.totalorder %s481, %s482
      %p491 = scmp.eq.s32.totalorder %s105, 0
      %p492 = por %p490, %p491
      %p493 = scmp.ne.s32.totalorder %s481, %s482
      %p494 = scmp.eq.s32.totalorder %s106, 1
      %p495 = por %p493, %p494
      %p497 = scmp.ne.s32.totalorder %s482, %s496
      %p498 = scmp.eq.s32.totalorder %s106, 0
      %p499 = por %p497, %p498
      %s501 = sadd.s32 %s500, 1
      %p504 = scmp.eq.s32.totalorder %s100, 1
      %p505 = scmp.ne.s32.totalorder %s500, %s502
      %p506 = scmp.eq.s32.totalorder %s100, 0
      %p507 = por %p505, %p506
      %p508 = scmp.ne.s32.totalorder %s500, %s502
      %p509 = scmp.eq.s32.totalorder %s105, 1
      %p510 = por %p508, %p509
      %p511 = scmp.ne.s32.totalorder %s502, %s503
      %p512 = scmp.eq.s32.totalorder %s105, 0
      %p513 = por %p511, %p512
      %p514 = scmp.ne.s32.totalorder %s502, %s503
      %p515 = scmp.eq.s32.totalorder %s106, 1
      %p516 = por %p514, %p515
      %p518 = scmp.ne.s32.totalorder %s503, %s517
      %p519 = scmp.eq.s32.totalorder %s106, 0
      %p520 = por %p518, %p519
      %s522 = sadd.s32 %s521, 1
      %p525 = scmp.eq.s32.totalorder %s100, 1
      %p526 = scmp.ne.s32.totalorder %s521, %s523
      %p527 = scmp.eq.s32.totalorder %s100, 0
      %p528 = por %p526, %p527
      %p529 = scmp.ne.s32.totalorder %s521, %s523
      %p530 = scmp.eq.s32.totalorder %s105, 1
      %p531 = por %p529, %p530
      %p532 = scmp.ne.s32.totalorder %s523, %s524
      %p533 = scmp.eq.s32.totalorder %s105, 0
      %p534 = por %p532, %p533
      %p535 = scmp.ne.s32.totalorder %s523, %s524
      %p536 = scmp.eq.s32.totalorder %s106, 1
      %p537 = por %p535, %p536
      %p539 = scmp.ne.s32.totalorder %s524, %s538
      %p540 = scmp.eq.s32.totalorder %s106, 0
      %p541 = por %p539, %p540
      %s543 = sadd.s32 %s542, 1
      %p546 = scmp.eq.s32.totalorder %s100, 1
      %p547 = scmp.ne.s32.totalorder %s542, %s544
      %p548 = scmp.eq.s32.totalorder %s100, 0
      %p549 = por %p547, %p548
      %p550 = scmp.ne.s32.totalorder %s542, %s544
      %p551 = scmp.eq.s32.totalorder %s105, 1
      %p552 = por %p550, %p551
      %p553 = scmp.ne.s32.totalorder %s544, %s545
      %p554 = scmp.eq.s32.totalorder %s105, 0
      %p555 = por %p553, %p554
      %p556 = scmp.ne.s32.totalorder %s544, %s545
      %p557 = scmp.eq.s32.totalorder %s106, 1
      %p558 = por %p556, %p557
      %p560 = scmp.ne.s32.totalorder %s545, %s559
      %p561 = scmp.eq.s32.totalorder %s106, 0
      %p562 = por %p560, %p561
      %s564 = sadd.s32 %s563, 1
      %p567 = scmp.eq.s32.totalorder %s100, 1
      %p568 = scmp.ne.s32.totalorder %s563, %s565
      %p569 = scmp.eq.s32.totalorder %s100, 0
      %p570 = por %p568, %p569
      %p571 = scmp.ne.s32.totalorder %s563, %s565
      %p572 = scmp.eq.s32.totalorder %s105, 1
      %p573 = por %p571, %p572
      %p574 = scmp.ne.s32.totalorder %s565, %s566
      %p575 = scmp.eq.s32.totalorder %s105, 0
      %p576 = por %p574, %p575
      %p577 = scmp.ne.s32.totalorder %s565, %s566
      %p578 = scmp.eq.s32.totalorder %s106, 1
      %p579 = por %p577, %p578
      %p581 = scmp.ne.s32.totalorder %s566, %s580
      %p582 = scmp.eq.s32.totalorder %s106, 0
      %p583 = por %p581, %p582
      %s585 = sadd.s32 %s584, 1
      %p588 = scmp.eq.s32.totalorder %s100, 1
      %p589 = scmp.ne.s32.totalorder %s584, %s586
      %p590 = scmp.eq.s32.totalorder %s100, 0
      %p591 = por %p589, %p590
      %p592 = scmp.ne.s32.totalorder %s584, %s586
      %p593 = scmp.eq.s32.totalorder %s105, 1
      %p594 = por %p592, %p593
      %p595 = scmp.ne.s32.totalorder %s586, %s587
      %p596 = scmp.eq.s32.totalorder %s105, 0
      %p597 = por %p595, %p596
      %p598 = scmp.ne.s32.totalorder %s586, %s587
      %p599 = scmp.eq.s32.totalorder %s106, 1
      %p600 = por %p598, %p599
      %p602 = scmp.ne.s32.totalorder %s587, %s601
      %p603 = scmp.eq.s32.totalorder %s106, 0
      %p604 = por %p602, %p603
      %s606 = sadd.s32 %s605, 1
      %p609 = scmp.eq.s32.totalorder %s100, 1
      %p610 = scmp.ne.s32.totalorder %s605, %s607
      %p611 = scmp.eq.s32.totalorder %s100, 0
      %p612 = por %p610, %p611
      %p613 = scmp.ne.s32.totalorder %s605, %s607
      %p614 = scmp.eq.s32.totalorder %s105, 1
      %p615 = por %p613, %p614
      %p616 = scmp.ne.s32.totalorder %s607, %s608
      %p617 = scmp.eq.s32.totalorder %s105, 0
      %p618 = por %p616, %p617
      %p619 = scmp.ne.s32.totalorder %s607, %s608
      %p620 = scmp.eq.s32.totalorder %s106, 1
      %p621 = por %p619, %p620
      %p623 = scmp.ne.s32.totalorder %s608, %s622
      %p624 = scmp.eq.s32.totalorder %s106, 0
      %p625 = por %p623, %p624
      %s627 = sadd.s32 %s626, 1
      %p630 = scmp.eq.s32.totalorder %s100, 1
      %p631 = scmp.ne.s32.totalorder %s626, %s628
      %p632 = scmp.eq.s32.totalorder %s100, 0
      %p633 = por %p631, %p632
      %p634 = scmp.ne.s32.totalorder %s626, %s628
      %p635 = scmp.eq.s32.totalorder %s105, 1
      %p636 = por %p634, %p635
      %p637 = scmp.ne.s32.totalorder %s628, %s629
      %p638 = scmp.eq.s32.totalorder %s105, 0
      %p639 = por %p637, %p638
      %p640 = scmp.ne.s32.totalorder %s628, %s629
      %p641 = scmp.eq.s32.totalorder %s106, 1
      %p642 = por %p640, %p641
      %p644 = scmp.ne.s32.totalorder %s629, %s643
      %p645 = scmp.eq.s32.totalorder %s106, 0
      %p646 = por %p644, %p645
      %s648 = sadd.s32 %s647, 1
      %p651 = scmp.eq.s32.totalorder %s100, 1
      %p652 = scmp.ne.s32.totalorder %s647, %s649
      %p653 = scmp.eq.s32.totalorder %s100, 0
      %p654 = por %p652, %p653
      %p655 = scmp.ne.s32.totalorder %s647, %s649
      %p656 = scmp.eq.s32.totalorder %s105, 1
      %p657 = por %p655, %p656
      %p658 = scmp.ne.s32.totalorder %s649, %s650
      %p659 = scmp.eq.s32.totalorder %s105, 0
      %p660 = por %p658, %p659
      %p661 = scmp.ne.s32.totalorder %s649, %s650
      %p662 = scmp.eq.s32.totalorder %s106, 1
      %p663 = por %p661, %p662
      %p665 = scmp.ne.s32.totalorder %s650, %s664
      %p666 = scmp.eq.s32.totalorder %s106, 0
      %p667 = por %p665, %p666
      %s669 = sadd.s32 %s668, 1
      %p672 = scmp.eq.s32.totalorder %s100, 1
      %p673 = scmp.ne.s32.totalorder %s668, %s670
      %p674 = scmp.eq.s32.totalorder %s100, 0
      %p675 = por %p673, %p674
      %p676 = scmp.ne.s32.totalorder %s668, %s670
      %p677 = scmp.eq.s32.totalorder %s105, 1
      %p678 = por %p676, %p677
      %p679 = scmp.ne.s32.totalorder %s670, %s671
      %p680 = scmp.eq.s32.totalorder %s105, 0
      %p681 = por %p679, %p680
      %p682 = scmp.ne.s32.totalorder %s670, %s671
      %p683 = scmp.eq.s32.totalorder %s106, 1
      %p684 = por %p682, %p683
      %p686 = scmp.ne.s32.totalorder %s671, %s685
      %p687 = scmp.eq.s32.totalorder %s106, 0
      %p688 = por %p686, %p687
      %s690 = sadd.s32 %s689, 1
      %p693 = scmp.eq.s32.totalorder %s100, 1
      %p694 = scmp.ne.s32.totalorder %s689, %s691
      %p695 = scmp.eq.s32.totalorder %s100, 0
      %p696 = por %p694, %p695
      %p697 = scmp.ne.s32.totalorder %s689, %s691
      %p698 = scmp.eq.s32.totalorder %s105, 1
      %p699 = por %p697, %p698
      %p700 = scmp.ne.s32.totalorder %s691, %s692
      %p701 = scmp.eq.s32.totalorder %s105, 0
      %p702 = por %p700, %p701
      %p703 = scmp.ne.s32.totalorder %s691, %s692
      %p704 = scmp.eq.s32.totalorder %s106, 1
      %p705 = por %p703, %p704
      %p707 = scmp.ne.s32.totalorder %s692, %s706
      %p708 = scmp.eq.s32.totalorder %s106, 0
      %p709 = por %p707, %p708
      %s711 = sadd.s32 %s710, 1
      %p714 = scmp.eq.s32.totalorder %s100, 1
      %p715 = scmp.ne.s32.totalorder %s710, %s712
      %p716 = scmp.eq.s32.totalorder %s100, 0
      %p717 = por %p715, %p716
      %p718 = scmp.ne.s32.totalorder %s710, %s712
      %p719 = scmp.eq.s32.totalorder %s105, 1
      %p720 = por %p718, %p719
      %p721 = scmp.ne.s32.totalorder %s712, %s713
      %p722 = scmp.eq.s32.totalorder %s105, 0
      %p723 = por %p721, %p722
      %p724 = scmp.ne.s32.totalorder %s712, %s713
      %p725 = scmp.eq.s32.totalorder %s106, 1
      %p726 = por %p724, %p725
      %p728 = scmp.ne.s32.totalorder %s713, %s727
      %p729 = scmp.eq.s32.totalorder %s106, 0
      %p730 = por %p728, %p729
      %s732 = sadd.s32 %s731, 1
      %p735 = scmp.eq.s32.totalorder %s100, 1
      %p736 = scmp.ne.s32.totalorder %s731, %s733
      %p737 = scmp.eq.s32.totalorder %s100, 0
      %p738 = por %p736, %p737
      %p739 = scmp.ne.s32.totalorder %s731, %s733
      %p740 = scmp.eq.s32.totalorder %s105, 1
      %p741 = por %p739, %p740
      %p742 = scmp.ne.s32.totalorder %s733, %s734
      %p743 = scmp.eq.s32.totalorder %s105, 0
      %p744 = por %p742, %p743
      %p745 = scmp.ne.s32.totalorder %s733, %s734
      %p746 = scmp.eq.s32.totalorder %s106, 1
      %p747 = por %p745, %p746
      %p749 = scmp.ne.s32.totalorder %s734, %s748
      %p750 = scmp.eq.s32.totalorder %s106, 0
      %p751 = por %p749, %p750
      %s753 = sadd.s32 %s752, 1
      %p756 = scmp.eq.s32.totalorder %s100, 1
      %p757 = scmp.ne.s32.totalorder %s752, %s754
      %p758 = scmp.eq.s32.totalorder %s100, 0
      %p759 = por %p757, %p758
      %p760 = scmp.ne.s32.totalorder %s752, %s754
      %p761 = scmp.eq.s32.totalorder %s105, 1
      %p762 = por %p760, %p761
      %p763 = scmp.ne.s32.totalorder %s754, %s755
      %p764 = scmp.eq.s32.totalorder %s105, 0
      %p765 = por %p763, %p764
      %p766 = scmp.ne.s32.totalorder %s754, %s755
      %p767 = scmp.eq.s32.totalorder %s106, 1
      %p768 = por %p766, %p767
      %p770 = scmp.ne.s32.totalorder %s755, %s769
      %p771 = scmp.eq.s32.totalorder %s106, 0
      %p772 = por %p770, %p771
      %s774 = sadd.s32 %s773, 1
      %p777 = scmp.eq.s32.totalorder %s100, 1
      %p778 = scmp.ne.s32.totalorder %s773, %s775
      %p779 = scmp.eq.s32.totalorder %s100, 0
      %p780 = por %p778, %p779
      %p781 = scmp.ne.s32.totalorder %s773, %s775
      %p782 = scmp.eq.s32.totalorder %s105, 1
      %p783 = por %p781, %p782
      %p784 = scmp.ne.s32.totalorder %s775, %s776
      %p785 = scmp.eq.s32.totalorder %s105, 0
      %p786 = por %p784, %p785
      %p787 = scmp.ne.s32.totalorder %s775, %s776
      %p788 = scmp.eq.s32.totalorder %s106, 1
      %p789 = por %p787, %p788
      %p791 = scmp.ne.s32.totalorder %s776, %s790
      %p792 = scmp.eq.s32.totalorder %s106, 0
      %p793 = por %p791, %p792
      %s795 = sadd.s32 %s794, 1
      %p798 = scmp.eq.s32.totalorder %s100, 1
      %p799 = scmp.ne.s32.totalorder %s794, %s796
      %p800 = scmp.eq.s32.totalorder %s100, 0
      %p801 = por %p799, %p800
      %p802 = scmp.ne.s32.totalorder %s794, %s796
      %p803 = scmp.eq.s32.totalorder %s105, 1
      %p804 = por %p802, %p803
      %p805 = scmp.ne.s32.totalorder %s796, %s797
      %p806 = scmp.eq.s32.totalorder %s105, 0
      %p807 = por %p805, %p806
      %p808 = scmp.ne.s32.totalorder %s796, %s797
      %p809 = scmp.eq.s32.totalorder %s106, 1
      %p810 = por %p808, %p809
      %p812 = scmp.ne.s32.totalorder %s797, %s811
      %p813 = scmp.eq.s32.totalorder %s106, 0
      %p814 = por %p812, %p813
      %s816 = sadd.s32 %s815, 1
      %p819 = scmp.eq.s32.totalorder %s100, 1
      %p820 = scmp.ne.s32.totalorder %s815, %s817
      %p821 = scmp.eq.s32.totalorder %s100, 0
      %p822 = por %p820, %p821
      %p823 = scmp.ne.s32.totalorder %s815, %s817
      %p824 = scmp.eq.s32.totalorder %s105, 1
      %p825 = por %p823, %p824
      %p826 = scmp.ne.s32.totalorder %s817, %s818
      %p827 = scmp.eq.s32.totalorder %s105, 0
      %p828 = por %p826, %p827
      %p829 = scmp.ne.s32.totalorder %s817, %s818
      %p830 = scmp.eq.s32.totalorder %s106, 1
      %p831 = por %p829, %p830
      %p833 = scmp.ne.s32.totalorder %s818, %s832
      %p834 = scmp.eq.s32.totalorder %s106, 0
      %p835 = por %p833, %p834
      %s837 = sadd.s32 %s836, 1
      %p840 = scmp.eq.s32.totalorder %s100, 1
      %p841 = scmp.ne.s32.totalorder %s836, %s838
      %p842 = scmp.eq.s32.totalorder %s100, 0
      %p843 = por %p841, %p842
      %p844 = scmp.ne.s32.totalorder %s836, %s838
      %p845 = scmp.eq.s32.totalorder %s105, 1
      %p846 = por %p844, %p845
      %p847 = scmp.ne.s32.totalorder %s838, %s839
      %p848 = scmp.eq.s32.totalorder %s105, 0
      %p849 = por %p847, %p848
      %p850 = scmp.ne.s32.totalorder %s838, %s839
      %p851 = scmp.eq.s32.totalorder %s106, 1
      %p852 = por %p850, %p851
      %p854 = scmp.ne.s32.totalorder %s839, %s853
      %p855 = scmp.eq.s32.totalorder %s106, 0
      %p856 = por %p854, %p855
      %s858 = sadd.s32 %s857, 1
      %p861 = scmp.eq.s32.totalorder %s100, 1
      %p862 = scmp.ne.s32.totalorder %s857, %s859
      %p863 = scmp.eq.s32.totalorder %s100, 0
      %p864 = por %p862, %p863
      %p865 = scmp.ne.s32.totalorder %s857, %s859
      %p866 = scmp.eq.s32.totalorder %s105, 1
      %p867 = por %p865, %p866
      %p868 = scmp.ne.s32.totalorder %s859, %s860
      %p869 = scmp.eq.s32.totalorder %s105, 0
      %p870 = por %p868, %p869
      %p871 = scmp.ne.s32.totalorder %s859, %s860
      %p872 = scmp.eq.s32.totalorder %s106, 1
      %p873 = por %p871, %p872
      %p875 = scmp.ne.s32.totalorder %s860, %s874
      %p876 = scmp.eq.s32.totalorder %s106, 0
      %p877 = por %p875, %p876
      %s879 = sadd.s32 %s878, 1
      %p882 = scmp.eq.s32.totalorder %s100, 1
      %p883 = scmp.ne.s32.totalorder %s878, %s880
      %p884 = scmp.eq.s32.totalorder %s100, 0
      %p885 = por %p883, %p884
      %p886 = scmp.ne.s32.totalorder %s878, %s880
      %p887 = scmp.eq.s32.totalorder %s105, 1
      %p888 = por %p886, %p887
      %p889 = scmp.ne.s32.totalorder %s880, %s881
      %p890 = scmp.eq.s32.totalorder %s105, 0
      %p891 = por %p889, %p890
      %p892 = scmp.ne.s32.totalorder %s880, %s881
      %p893 = scmp.eq.s32.totalorder %s106, 1
      %p894 = por %p892, %p893
      %p896 = scmp.ne.s32.totalorder %s881, %s895
      %p897 = scmp.eq.s32.totalorder %s106, 0
      %p898 = por %p896, %p897
      %s899 = ssub.s32 %s100, %s107
      %p900 = scmp.eq.s32.totalorder %s899, 0
      %s902 = sadd.s32 %s901, 1
      %s903 = scalar_select %p900, %s901, %s902
      %p906 = pneg %p900
      %p907 = scmp.eq.s32.totalorder %s100, 1
      %p908 = por %p906, %p907
      %p909 = scmp.ne.s32.totalorder %s901, %s904
      %p910 = scmp.eq.s32.totalorder %s100, 0
      %p911 = por %p909, %p910
      %p912 = scmp.ne.s32.totalorder %s901, %s904
      %p913 = scmp.eq.s32.totalorder %s105, 1
      %p914 = por %p912, %p913
      %p915 = scmp.ne.s32.totalorder %s904, %s905
      %p916 = scmp.eq.s32.totalorder %s105, 0
      %p917 = por %p915, %p916
      %p918 = scmp.ne.s32.totalorder %s904, %s905
      %p919 = scmp.eq.s32.totalorder %s106, 1
      %p920 = por %p918, %p919
      %p922 = scmp.ne.s32.totalorder %s905, %s921
      %p923 = scmp.eq.s32.totalorder %s106, 0
      %p924 = por %p922, %p923
      %p925 = scmp.le.s32.totalorder 1, %s100
      %p926 = scmp.lt.s32.totalorder %s100, 3
      %p927 = pnand %p925, %p926
      %p928 = pneg %p927
      // Predicated region
      $region9: #{tpu_custom_call.1} parent=5 // pred_check
        _
      $region10: #{tpu_custom_call.1} parent=5 // pred_check_branch
        %930 = sbr.rel (%p927) target = $region12
      $region11: #{tpu_custom_call.1} parent=5 // pred_region
        %s931 = ssub.s32 %s100, 1
        // Predicated region
        $region13: #{tpu_custom_call.1} parent=11 // pred_check
          %p932 = pneg %p303
        $region14: #{tpu_custom_call.1} parent=11 // pred_check_branch
          %934 = sbr.rel (%p932) target = $region16
        $region15: #{tpu_custom_call.1} parent=11 // pred_region
          _
        $region16: #{tpu_custom_call.1} parent=11 // pred_fallthru
          _
        // Predicated region
        $region17: #{tpu_custom_call.1} parent=11 // pred_check
          %p935 = pneg %p324
        $region18: #{tpu_custom_call.1} parent=11 // pred_check_branch
          %937 = sbr.rel (%p935) target = $region20
        $region19: #{tpu_custom_call.1} parent=11 // pred_region
          %s939 = ssub.s32 256, 256
          %940 = vsyncadd [#allocation7], %s939
          %s941 = sshll.u32 [#allocation8], 4
          %s942 = int_to_ptr.vmem [resolvable:$true] %s941
          %947 = dma.hbm_to_vmem [thread:$0]  %s17, 256, %s942, [#allocation7], 64, 64, 4
        $region20: #{tpu_custom_call.1} parent=11 // pred_fallthru
          _
        // Predicated region
        $region21: #{tpu_custom_call.1} parent=11 // pred_check
          %p948 = pneg %p345
        $region22: #{tpu_custom_call.1} parent=11 // pred_check_branch
          %950 = sbr.rel (%p948) target = $region24
        $region23: #{tpu_custom_call.1} parent=11 // pred_region
          %s952 = ssub.s32 16, 16
          %953 = vsyncadd [#allocation10], %s952
          %s955 = sshll.u32 [#allocation9], 4
          %s956 = int_to_ptr.vmem [resolvable:$true] %s955
          %958 = dma.hbm_to_vmem [thread:$0]  %s19, 16, %s956, [#allocation10]
        $region24: #{tpu_custom_call.1} parent=11 // pred_fallthru
          _
        // Predicated region
        $region25: #{tpu_custom_call.1} parent=11 // pred_check
          %p959 = pneg %p366
        $region26: #{tpu_custom_call.1} parent=11 // pred_check_branch
          %961 = sbr.rel (%p959) target = $region28
        $region27: #{tpu_custom_call.1} parent=11 // pred_region
          %s963 = ssub.s32 256, 256
          %964 = vsyncadd [#allocation10], %s963
          %s965 = sshll.u32 [#allocation11], 4
          %s966 = int_to_ptr.vmem [resolvable:$true] %s965
          %971 = dma.hbm_to_vmem [thread:$0]  %s21, 256, %s966, [#allocation10], 64, 64, 4
        $region28: #{tpu_custom_call.1} parent=11 // pred_fallthru
          _
        // Predicated region
        $region29: #{tpu_custom_call.1} parent=11 // pred_check
          %p972 = pneg %p387
        $region30: #{tpu_custom_call.1} parent=11 // pred_check_branch
          %974 = sbr.rel (%p972) target = $region32
        $region31: #{tpu_custom_call.1} parent=11 // pred_region
          %s976 = ssub.s32 16, 16
          %977 = vsyncadd [#allocation13], %s976
          %s979 = sshll.u32 [#allocation12], 4
          %s980 = int_to_ptr.vmem [resolvable:$true] %s979
          %982 = dma.hbm_to_vmem [thread:$0]  %s23, 16, %s980, [#allocation13]
        $region32: #{tpu_custom_call.1} parent=11 // pred_fallthru
          _
        // Predicated region
        $region33: #{tpu_custom_call.1} parent=11 // pred_check
          %p983 = pneg %p408
        $region34: #{tpu_custom_call.1} parent=11 // pred_check_branch
          %985 = sbr.rel (%p983) target = $region36
        $region35: #{tpu_custom_call.1} parent=11 // pred_region
          %s987 = ssub.s32 1024, 1024
          %988 = vsyncadd [#allocation13], %s987
          %s989 = sshll.u32 [#allocation14], 4
          %s990 = int_to_ptr.vmem [resolvable:$true] %s989
          %995 = dma.hbm_to_vmem [thread:$0]  %s25, 1024, %s990, [#allocation13], 256, 256, 16
        $region36: #{tpu_custom_call.1} parent=11 // pred_fallthru
          _
        // Predicated region
        $region37: #{tpu_custom_call.1} parent=11 // pred_check
          %p996 = pneg %p429
        $region38: #{tpu_custom_call.1} parent=11 // pred_check_branch
          %998 = sbr.rel (%p996) target = $region40
        $region39: #{tpu_custom_call.1} parent=11 // pred_region
          %s1000 = ssub.s32 64, 64
          %1001 = vsyncadd [#allocation16], %s1000
          %s1003 = sshll.u32 [#allocation15], 4
          %s1004 = int_to_ptr.vmem [resolvable:$true] %s1003
          %1006 = dma.hbm_to_vmem [thread:$0]  %s27, 64, %s1004, [#allocation16]
        $region40: #{tpu_custom_call.1} parent=11 // pred_fallthru
          _
        // Predicated region
        $region41: #{tpu_custom_call.1} parent=11 // pred_check
          %p1007 = pneg %p450
        $region42: #{tpu_custom_call.1} parent=11 // pred_check_branch
          %1009 = sbr.rel (%p1007) target = $region44
        $region43: #{tpu_custom_call.1} parent=11 // pred_region
          %s1011 = ssub.s32 64, 64
          %1012 = vsyncadd [#allocation16], %s1011
          %s1014 = sshll.u32 [#allocation17], 4
          %s1015 = int_to_ptr.vmem [resolvable:$true] %s1014
          %1017 = dma.hbm_to_vmem [thread:$0]  %s29, 64, %s1015, [#allocation16]
        $region44: #{tpu_custom_call.1} parent=11 // pred_fallthru
          _
        // Predicated region
        $region45: #{tpu_custom_call.1} parent=11 // pred_check
          %p1018 = pneg %p471
        $region46: #{tpu_custom_call.1} parent=11 // pred_check_branch
          %1020 = sbr.rel (%p1018) target = $region48
        $region47: #{tpu_custom_call.1} parent=11 // pred_region
          %s1022 = ssub.s32 64, 64
          %1023 = vsyncadd [#allocation19], %s1022
          %s1025 = sshll.u32 [#allocation18], 4
          %s1026 = int_to_ptr.vmem [resolvable:$true] %s1025
          %1028 = dma.hbm_to_vmem [thread:$0]  %s31, 64, %s1026, [#allocation19]
        $region48: #{tpu_custom_call.1} parent=11 // pred_fallthru
          _
        // Predicated region
        $region49: #{tpu_custom_call.1} parent=11 // pred_check
          %p1029 = pneg %p492
        $region50: #{tpu_custom_call.1} parent=11 // pred_check_branch
          %1031 = sbr.rel (%p1029) target = $region52
        $region51: #{tpu_custom_call.1} parent=11 // pred_region
          _
        $region52: #{tpu_custom_call.1} parent=11 // pred_fallthru
          _
        // Predicated region
        $region53: #{tpu_custom_call.1} parent=11 // pred_check
          %p1032 = pneg %p513
        $region54: #{tpu_custom_call.1} parent=11 // pred_check_branch
          %1034 = sbr.rel (%p1032) target = $region56
        $region55: #{tpu_custom_call.1} parent=11 // pred_region
          %s1036 = ssub.s32 16, 16
          %1037 = vsyncadd [#allocation19], %s1036
          %s1039 = sshll.u32 [#allocation20], 4
          %s1040 = int_to_ptr.vmem [resolvable:$true] %s1039
          %1042 = dma.hbm_to_vmem [thread:$0]  %s35, 16, %s1040, [#allocation19]
        $region56: #{tpu_custom_call.1} parent=11 // pred_fallthru
          _
        // Predicated region
        $region57: #{tpu_custom_call.1} parent=11 // pred_check
          %p1043 = pneg %p534
        $region58: #{tpu_custom_call.1} parent=11 // pred_check_branch
          %1045 = sbr.rel (%p1043) target = $region60
        $region59: #{tpu_custom_call.1} parent=11 // pred_region
          %s1047 = ssub.s32 256, 256
          %1048 = vsyncadd [#allocation22], %s1047
          %s1049 = sshll.u32 [#allocation21], 4
          %s1050 = int_to_ptr.vmem [resolvable:$true] %s1049
          %1055 = dma.hbm_to_vmem [thread:$0]  %s37, 256, %s1050, [#allocation22], 64, 64, 4
        $region60: #{tpu_custom_call.1} parent=11 // pred_fallthru
          _
        // Predicated region
        $region61: #{tpu_custom_call.1} parent=11 // pred_check
          %p1056 = pneg %p555
        $region62: #{tpu_custom_call.1} parent=11 // pred_check_branch
          %1058 = sbr.rel (%p1056) target = $region64
        $region63: #{tpu_custom_call.1} parent=11 // pred_region
          %s1060 = ssub.s32 16, 16
          %1061 = vsyncadd [#allocation22], %s1060
          %s1063 = sshll.u32 [#allocation23], 4
          %s1064 = int_to_ptr.vmem [resolvable:$true] %s1063
          %1066 = dma.hbm_to_vmem [thread:$0]  %s39, 16, %s1064, [#allocation22]
        $region64: #{tpu_custom_call.1} parent=11 // pred_fallthru
          _
        // Predicated region
        $region65: #{tpu_custom_call.1} parent=11 // pred_check
          %p1067 = pneg %p576
        $region66: #{tpu_custom_call.1} parent=11 // pred_check_branch
          %1069 = sbr.rel (%p1067) target = $region68
        $region67: #{tpu_custom_call.1} parent=11 // pred_region
          _
        $region68: #{tpu_custom_call.1} parent=11 // pred_fallthru
          _
        // Predicated region
        $region69: #{tpu_custom_call.1} parent=11 // pred_check
          %p1070 = pneg %p597
        $region70: #{tpu_custom_call.1} parent=11 // pred_check_branch
          %1072 = sbr.rel (%p1070) target = $region72
        $region71: #{tpu_custom_call.1} parent=11 // pred_region
          %s1074 = ssub.s32 384, 384
          %1075 = vsyncadd [#allocation25], %s1074
          %s1076 = sshll.u32 [#allocation24], 4
          %s1077 = int_to_ptr.vmem [resolvable:$true] %s1076
          %1082 = dma.hbm_to_vmem [thread:$0]  %s43, 384, %s1077, [#allocation25], 48, 48, 3
        $region72: #{tpu_custom_call.1} parent=11 // pred_fallthru
          _
        // Predicated region
        $region73: #{tpu_custom_call.1} parent=11 // pred_check
          %p1083 = pneg %p618
        $region74: #{tpu_custom_call.1} parent=11 // pred_check_branch
          %1085 = sbr.rel (%p1083) target = $region76
        $region75: #{tpu_custom_call.1} parent=11 // pred_region
          _
        $region76: #{tpu_custom_call.1} parent=11 // pred_fallthru
          _
        // Predicated region
        $region77: #{tpu_custom_call.1} parent=11 // pred_check
          %p1086 = pneg %p639
        $region78: #{tpu_custom_call.1} parent=11 // pred_check_branch
          %1088 = sbr.rel (%p1086) target = $region80
        $region79: #{tpu_custom_call.1} parent=11 // pred_region
          %s1090 = ssub.s32 16, 16
          %1091 = vsyncadd [#allocation25], %s1090
          %s1093 = sshll.u32 [#allocation26], 4
          %s1094 = int_to_ptr.vmem [resolvable:$true] %s1093
          %1096 = dma.hbm_to_vmem [thread:$0]  %s47, 16, %s1094, [#allocation25]
        $region80: #{tpu_custom_call.1} parent=11 // pred_fallthru
          _
        // Predicated region
        $region81: #{tpu_custom_call.1} parent=11 // pred_check
          %p1097 = pneg %p660
        $region82: #{tpu_custom_call.1} parent=11 // pred_check_branch
          %1099 = sbr.rel (%p1097) target = $region84
        $region83: #{tpu_custom_call.1} parent=11 // pred_region
          %s1101 = ssub.s32 256, 256
          %1102 = vsyncadd [#allocation28], %s1101
          %s1103 = sshll.u32 [#allocation27], 4
          %s1104 = int_to_ptr.vmem [resolvable:$true] %s1103
          %1109 = dma.hbm_to_vmem [thread:$0]  %s49, 256, %s1104, [#allocation28], 64, 64, 4
        $region84: #{tpu_custom_call.1} parent=11 // pred_fallthru
          _
        // Predicated region
        $region85: #{tpu_custom_call.1} parent=11 // pred_check
          %p1110 = pneg %p681
        $region86: #{tpu_custom_call.1} parent=11 // pred_check_branch
          %1112 = sbr.rel (%p1110) target = $region88
        $region87: #{tpu_custom_call.1} parent=11 // pred_region
          %s1114 = ssub.s32 16, 16
          %1115 = vsyncadd [#allocation28], %s1114
          %s1117 = sshll.u32 [#allocation29], 4
          %s1118 = int_to_ptr.vmem [resolvable:$true] %s1117
          %1120 = dma.hbm_to_vmem [thread:$0]  %s51, 16, %s1118, [#allocation28]
        $region88: #{tpu_custom_call.1} parent=11 // pred_fallthru
          _
        // Predicated region
        $region89: #{tpu_custom_call.1} parent=11 // pred_check
          %p1121 = pneg %p702
        $region90: #{tpu_custom_call.1} parent=11 // pred_check_branch
          %1123 = sbr.rel (%p1121) target = $region92
        $region91: #{tpu_custom_call.1} parent=11 // pred_region
          _
        $region92: #{tpu_custom_call.1} parent=11 // pred_fallthru
          _
        // Predicated region
        $region93: #{tpu_custom_call.1} parent=11 // pred_check
          %p1124 = pneg %p723
        $region94: #{tpu_custom_call.1} parent=11 // pred_check_branch
          %1126 = sbr.rel (%p1124) target = $region96
        $region95: #{tpu_custom_call.1} parent=11 // pred_region
          _
        $region96: #{tpu_custom_call.1} parent=11 // pred_fallthru
          _
        // Predicated region
        $region97: #{tpu_custom_call.1} parent=11 // pred_check
          %p1127 = pneg %p744
        $region98: #{tpu_custom_call.1} parent=11 // pred_check_branch
          %1129 = sbr.rel (%p1127) target = $region100
        $region99: #{tpu_custom_call.1} parent=11 // pred_region
          %s1131 = ssub.s32 3072, 3072
          %1132 = vsyncadd [#allocation31], %s1131
          %s1133 = sshll.u32 [#allocation30], 4
          %s1134 = int_to_ptr.vmem [resolvable:$true] %s1133
          %1139 = dma.hbm_to_vmem [thread:$0]  %s57, 3072, %s1134, [#allocation31], 192, 192, 12
        $region100: #{tpu_custom_call.1} parent=11 // pred_fallthru
          _
        // Predicated region
        $region101: #{tpu_custom_call.1} parent=11 // pred_check
          %p1140 = pneg %p765
        $region102: #{tpu_custom_call.1} parent=11 // pred_check_branch
          %1142 = sbr.rel (%p1140) target = $region104
        $region103: #{tpu_custom_call.1} parent=11 // pred_region
          %s1144 = ssub.s32 3072, 3072
          %1145 = vsyncadd [#allocation31], %s1144
          %s1146 = sshll.u32 [#allocation32], 4
          %s1147 = int_to_ptr.vmem [resolvable:$true] %s1146
          %1152 = dma.hbm_to_vmem [thread:$0]  %s59, 3072, %s1147, [#allocation31], 192, 192, 12
        $region104: #{tpu_custom_call.1} parent=11 // pred_fallthru
          _
        // Predicated region
        $region105: #{tpu_custom_call.1} parent=11 // pred_check
          %p1153 = pneg %p786
        $region106: #{tpu_custom_call.1} parent=11 // pred_check_branch
          %1155 = sbr.rel (%p1153) target = $region108
        $region107: #{tpu_custom_call.1} parent=11 // pred_region
          %s1157 = ssub.s32 3072, 3072
          %1158 = vsyncadd [#allocation34], %s1157
          %s1159 = sshll.u32 [#allocation33], 4
          %s1160 = int_to_ptr.vmem [resolvable:$true] %s1159
          %1165 = dma.hbm_to_vmem [thread:$0]  %s61, 3072, %s1160, [#allocation34], 192, 192, 12
        $region108: #{tpu_custom_call.1} parent=11 // pred_fallthru
          _
        // Predicated region
        $region109: #{tpu_custom_call.1} parent=11 // pred_check
          %p1166 = pneg %p807
        $region110: #{tpu_custom_call.1} parent=11 // pred_check_branch
          %1168 = sbr.rel (%p1166) target = $region112
        $region111: #{tpu_custom_call.1} parent=11 // pred_region
          %s1170 = ssub.s32 48, 48
          %1171 = vsyncadd [#allocation34], %s1170
          %s1173 = sshll.u32 [#allocation35], 4
          %s1174 = int_to_ptr.vmem [resolvable:$true] %s1173
          %1176 = dma.hbm_to_vmem [thread:$0]  %s63, 48, %s1174, [#allocation34]
        $region112: #{tpu_custom_call.1} parent=11 // pred_fallthru
          _
        // Predicated region
        $region113: #{tpu_custom_call.1} parent=11 // pred_check
          %p1177 = pneg %p828
        $region114: #{tpu_custom_call.1} parent=11 // pred_check_branch
          %1179 = sbr.rel (%p1177) target = $region116
        $region115: #{tpu_custom_call.1} parent=11 // pred_region
          _
        $region116: #{tpu_custom_call.1} parent=11 // pred_fallthru
          _
        // Predicated region
        $region117: #{tpu_custom_call.1} parent=11 // pred_check
          %p1180 = pneg %p849
        $region118: #{tpu_custom_call.1} parent=11 // pred_check_branch
          %1182 = sbr.rel (%p1180) target = $region120
        $region119: #{tpu_custom_call.1} parent=11 // pred_region
          %s1184 = ssub.s32 16, 16
          %1185 = vsyncadd [#allocation37], %s1184
          %s1187 = sshll.u32 [#allocation36], 4
          %s1188 = int_to_ptr.vmem [resolvable:$true] %s1187
          %1190 = dma.hbm_to_vmem [thread:$0]  %s67, 16, %s1188, [#allocation37]
        $region120: #{tpu_custom_call.1} parent=11 // pred_fallthru
          _
        // Predicated region
        $region121: #{tpu_custom_call.1} parent=11 // pred_check
          %p1191 = pneg %p870
        $region122: #{tpu_custom_call.1} parent=11 // pred_check_branch
          %1193 = sbr.rel (%p1191) target = $region124
        $region123: #{tpu_custom_call.1} parent=11 // pred_region
          _
        $region124: #{tpu_custom_call.1} parent=11 // pred_fallthru
          _
        // Predicated region
        $region125: #{tpu_custom_call.1} parent=11 // pred_check
          %p1194 = pneg %p891
        $region126: #{tpu_custom_call.1} parent=11 // pred_check_branch
          %1196 = sbr.rel (%p1194) target = $region128
        $region127: #{tpu_custom_call.1} parent=11 // pred_region
          _
        $region128: #{tpu_custom_call.1} parent=11 // pred_fallthru
          _
      $region12: #{tpu_custom_call.1} parent=5 // pred_fallthru
        _
      %p1197 = scmp.lt.s32.totalorder %s100, 2
      // Predicated region
      $region129: #{tpu_custom_call.1} parent=5 // pred_check
        %p1198 = pneg %p1197
      $region130: #{tpu_custom_call.1} parent=5 // pred_check_branch
        %1200 = sbr.rel (%p1198) target = $region132
      $region131: #{tpu_custom_call.1} parent=5 // pred_region
        // Predicated region
        $region133: #{tpu_custom_call.1} parent=131 // pred_check
          %p1201 = pneg %p120
        $region134: #{tpu_custom_call.1} parent=131 // pred_check_branch
          %1203 = sbr.rel (%p1201) target = $region136
        $region135: #{tpu_custom_call.1} parent=131 // pred_region
          %s1204 = sand.u32 %s110, 1
          %s1205 = scalar_lea.sflag [#allocation4], %s1204
          %s1206 = sand.u32 %s110, 1
          %s1207 = smul.addr %s1206, 4
          %s1208 = scalar_lea.vmem [#allocation3], %s1207
          %s1210 = ssub.s32 64, 64
          %1211 = vsyncadd %s1205, %s1210
          %s1212 = smul.addr %s100, 64
          %s1213 = scalar_lea.hbm %s1, %s1212
          %s1215 = sshll.u32 %s1208, 4
          %s1216 = int_to_ptr.vmem [resolvable:$true] %s1215
          %1218 = dma.hbm_to_vmem [thread:$0]  %s1213, 64, %s1216, %s1205
        $region136: #{tpu_custom_call.1} parent=131 // pred_fallthru
          _
        // Predicated region
        $region137: #{tpu_custom_call.1} parent=131 // pred_check
          %p1219 = pneg %p146
        $region138: #{tpu_custom_call.1} parent=131 // pred_check_branch
          %1221 = sbr.rel (%p1219) target = $region140
        $region139: #{tpu_custom_call.1} parent=131 // pred_region
          %p1222 = scmp.lt.s32.totalorder %s100, 1
          %s1223 = scalar_select %p1222, %s100, 1
          %s1224 = smul.addr %s1223, 8
          %s1225 = scalar_lea.vmem %s3, %s1224
        $region140: #{tpu_custom_call.1} parent=131 // pred_fallthru
          _
        // Predicated region
        $region141: #{tpu_custom_call.1} parent=131 // pred_check
          %p1226 = pneg %p172
        $region142: #{tpu_custom_call.1} parent=131 // pred_check_branch
          %1228 = sbr.rel (%p1226) target = $region144
        $region143: #{tpu_custom_call.1} parent=131 // pred_region
          %p1229 = scmp.lt.s32.totalorder %s100, 1
          %s1230 = scalar_select %p1229, %s100, 1
          %s1231 = smul.addr %s1230, 8
          %s1232 = scalar_lea.vmem %s5, %s1231
        $region144: #{tpu_custom_call.1} parent=131 // pred_fallthru
          _
        // Predicated region
        $region145: #{tpu_custom_call.1} parent=131 // pred_check
          %p1233 = pneg %p198
        $region146: #{tpu_custom_call.1} parent=131 // pred_check_branch
          %1235 = sbr.rel (%p1233) target = $region148
        $region147: #{tpu_custom_call.1} parent=131 // pred_region
          %p1236 = scmp.lt.s32.totalorder %s100, 1
          %s1237 = scalar_select %p1236, %s100, 1
          %s1238 = smul.addr %s1237, 8
          %s1239 = scalar_lea.vmem %s7, %s1238
        $region148: #{tpu_custom_call.1} parent=131 // pred_fallthru
          _
        // Predicated region
        $region149: #{tpu_custom_call.1} parent=131 // pred_check
          %p1240 = pneg %p224
        $region150: #{tpu_custom_call.1} parent=131 // pred_check_branch
          %1242 = sbr.rel (%p1240) target = $region152
        $region151: #{tpu_custom_call.1} parent=131 // pred_region
          %p1243 = scmp.lt.s32.totalorder %s100, 1
          %s1244 = scalar_select %p1243, %s100, 1
          %s1245 = scalar_lea.vmem %s9, %s1244
        $region152: #{tpu_custom_call.1} parent=131 // pred_fallthru
          _
        // Predicated region
        $region153: #{tpu_custom_call.1} parent=131 // pred_check
          %p1246 = pneg %p250
        $region154: #{tpu_custom_call.1} parent=131 // pred_check_branch
          %1248 = sbr.rel (%p1246) target = $region156
        $region155: #{tpu_custom_call.1} parent=131 // pred_region
          %p1249 = scmp.lt.s32.totalorder %s100, 1
          %s1250 = scalar_select %p1249, %s100, 1
          %s1251 = smul.addr %s1250, 8
          %s1252 = scalar_lea.vmem %s11, %s1251
        $region156: #{tpu_custom_call.1} parent=131 // pred_fallthru
          _
        // Predicated region
        $region157: #{tpu_custom_call.1} parent=131 // pred_check
          %p1253 = pneg %p276
        $region158: #{tpu_custom_call.1} parent=131 // pred_check_branch
          %1255 = sbr.rel (%p1253) target = $region160
        $region159: #{tpu_custom_call.1} parent=131 // pred_region
          %s1256 = sand.u32 %s100, 1
          %s1257 = scalar_lea.sflag [#allocation7], %s1256
          %s1258 = sand.u32 %s266, 1
          %s1259 = scalar_lea.vmem [#allocation6], %s1258
          %s1261 = ssub.s32 16, 16
          %1262 = vsyncadd %s1257, %s1261
          %s1263 = smul.addr %s100, 16
          %s1264 = scalar_lea.hbm %s13, %s1263
          %s1266 = sshll.u32 %s1259, 4
          %s1267 = int_to_ptr.vmem [resolvable:$true] %s1266
          %1269 = dma.hbm_to_vmem [thread:$0]  %s1264, 16, %s1267, %s1257
        $region160: #{tpu_custom_call.1} parent=131 // pred_fallthru
          _
      $region132: #{tpu_custom_call.1} parent=5 // pred_fallthru
        _
      %p1270 = scmp.le.s32.totalorder 1, %s100
      %p1271 = scmp.lt.s32.totalorder %s100, 3
      %p1272 = pnand %p1270, %p1271
      %p1273 = pneg %p1272
      // Predicated region
      $region161: #{tpu_custom_call.1} parent=5 // pred_check
        _
      $region162: #{tpu_custom_call.1} parent=5 // pred_check_branch
        %1275 = sbr.rel (%p1272) target = $region164
      $region163: #{tpu_custom_call.1} parent=5 // pred_region
        %s1276 = ssub.s32 %s100, 1
        %s1277 = sand.u32 %s113, 1
        %s1278 = scalar_lea.sflag [#allocation4], %s1277
        %s1279 = sand.u32 %s113, 1
        %s1280 = smul.addr %s1279, 4
        %s1281 = scalar_lea.vmem [#allocation3], %s1280
        // Predicated region
        $region165: #{tpu_custom_call.1} parent=163 // pred_check
          %p1282 = pneg %p126
        $region166: #{tpu_custom_call.1} parent=163 // pred_check_branch
          %1284 = sbr.rel (%p1282) target = $region168
        $region167: #{tpu_custom_call.1} parent=163 // pred_region
          %1285 = dma.done %s1278, 64
        $region168: #{tpu_custom_call.1} parent=163 // pred_fallthru
          _
        %s1286 = sand.u32 %s105, 1
        %s1287 = scalar_lea.sflag [#allocation7], %s1286
        %s1288 = sand.u32 %s269, 1
        %s1289 = scalar_lea.vmem [#allocation6], %s1288
        // Predicated region
        $region169: #{tpu_custom_call.1} parent=163 // pred_check
          %p1290 = pneg %p282
        $region170: #{tpu_custom_call.1} parent=163 // pred_check_branch
          %1292 = sbr.rel (%p1290) target = $region172
        $region171: #{tpu_custom_call.1} parent=163 // pred_region
          %1293 = dma.done %s1287, 16
        $region172: #{tpu_custom_call.1} parent=163 // pred_fallthru
          _
        // Predicated region
        $region173: #{tpu_custom_call.1} parent=163 // pred_check
          %p1294 = pneg %p324
        $region174: #{tpu_custom_call.1} parent=163 // pred_check_branch
          %1296 = sbr.rel (%p1294) target = $region176
        $region175: #{tpu_custom_call.1} parent=163 // pred_region
          %1297 = dma.done [#allocation7], 256
        $region176: #{tpu_custom_call.1} parent=163 // pred_fallthru
          _
        // Predicated region
        $region177: #{tpu_custom_call.1} parent=163 // pred_check
          %p1298 = pneg %p345
        $region178: #{tpu_custom_call.1} parent=163 // pred_check_branch
          %1300 = sbr.rel (%p1298) target = $region180
        $region179: #{tpu_custom_call.1} parent=163 // pred_region
          %1301 = dma.done [#allocation10], 16
        $region180: #{tpu_custom_call.1} parent=163 // pred_fallthru
          _
        // Predicated region
        $region181: #{tpu_custom_call.1} parent=163 // pred_check
          %p1302 = pneg %p366
        $region182: #{tpu_custom_call.1} parent=163 // pred_check_branch
          %1304 = sbr.rel (%p1302) target = $region184
        $region183: #{tpu_custom_call.1} parent=163 // pred_region
          %1305 = dma.done [#allocation10], 256
        $region184: #{tpu_custom_call.1} parent=163 // pred_fallthru
          _
        // Predicated region
        $region185: #{tpu_custom_call.1} parent=163 // pred_check
          %p1306 = pneg %p387
        $region186: #{tpu_custom_call.1} parent=163 // pred_check_branch
          %1308 = sbr.rel (%p1306) target = $region188
        $region187: #{tpu_custom_call.1} parent=163 // pred_region
          %1309 = dma.done [#allocation13], 16
        $region188: #{tpu_custom_call.1} parent=163 // pred_fallthru
          _
        // Predicated region
        $region189: #{tpu_custom_call.1} parent=163 // pred_check
          %p1310 = pneg %p408
        $region190: #{tpu_custom_call.1} parent=163 // pred_check_branch
          %1312 = sbr.rel (%p1310) target = $region192
        $region191: #{tpu_custom_call.1} parent=163 // pred_region
          %1313 = dma.done [#allocation13], 1024
        $region192: #{tpu_custom_call.1} parent=163 // pred_fallthru
          _
        // Predicated region
        $region193: #{tpu_custom_call.1} parent=163 // pred_check
          %p1314 = pneg %p429
        $region194: #{tpu_custom_call.1} parent=163 // pred_check_branch
          %1316 = sbr.rel (%p1314) target = $region196
        $region195: #{tpu_custom_call.1} parent=163 // pred_region
          %1317 = dma.done [#allocation16], 64
        $region196: #{tpu_custom_call.1} parent=163 // pred_fallthru
          _
        // Predicated region
        $region197: #{tpu_custom_call.1} parent=163 // pred_check
          %p1318 = pneg %p450
        $region198: #{tpu_custom_call.1} parent=163 // pred_check_branch
          %1320 = sbr.rel (%p1318) target = $region200
        $region199: #{tpu_custom_call.1} parent=163 // pred_region
          %1321 = dma.done [#allocation16], 64
        $region200: #{tpu_custom_call.1} parent=163 // pred_fallthru
          _
        // Predicated region
        $region201: #{tpu_custom_call.1} parent=163 // pred_check
          %p1322 = pneg %p471
        $region202: #{tpu_custom_call.1} parent=163 // pred_check_branch
          %1324 = sbr.rel (%p1322) target = $region204
        $region203: #{tpu_custom_call.1} parent=163 // pred_region
          %1325 = dma.done [#allocation19], 64
        $region204: #{tpu_custom_call.1} parent=163 // pred_fallthru
          _
        // Predicated region
        $region205: #{tpu_custom_call.1} parent=163 // pred_check
          %p1326 = pneg %p513
        $region206: #{tpu_custom_call.1} parent=163 // pred_check_branch
          %1328 = sbr.rel (%p1326) target = $region208
        $region207: #{tpu_custom_call.1} parent=163 // pred_region
          %1329 = dma.done [#allocation19], 16
        $region208: #{tpu_custom_call.1} parent=163 // pred_fallthru
          _
        // Predicated region
        $region209: #{tpu_custom_call.1} parent=163 // pred_check
          %p1330 = pneg %p534
        $region210: #{tpu_custom_call.1} parent=163 // pred_check_branch
          %1332 = sbr.rel (%p1330) target = $region212
        $region211: #{tpu_custom_call.1} parent=163 // pred_region
          %1333 = dma.done [#allocation22], 256
        $region212: #{tpu_custom_call.1} parent=163 // pred_fallthru
          _
        // Predicated region
        $region213: #{tpu_custom_call.1} parent=163 // pred_check
          %p1334 = pneg %p555
        $region214: #{tpu_custom_call.1} parent=163 // pred_check_branch
          %1336 = sbr.rel (%p1334) target = $region216
        $region215: #{tpu_custom_call.1} parent=163 // pred_region
          %1337 = dma.done [#allocation22], 16
        $region216: #{tpu_custom_call.1} parent=163 // pred_fallthru
          _
        // Predicated region
        $region217: #{tpu_custom_call.1} parent=163 // pred_check
          %p1338 = pneg %p597
        $region218: #{tpu_custom_call.1} parent=163 // pred_check_branch
          %1340 = sbr.rel (%p1338) target = $region220
        $region219: #{tpu_custom_call.1} parent=163 // pred_region
          %1341 = dma.done [#allocation25], 384
        $region220: #{tpu_custom_call.1} parent=163 // pred_fallthru
          _
        // Predicated region
        $region221: #{tpu_custom_call.1} parent=163 // pred_check
          %p1342 = pneg %p639
        $region222: #{tpu_custom_call.1} parent=163 // pred_check_branch
          %1344 = sbr.rel (%p1342) target = $region224
        $region223: #{tpu_custom_call.1} parent=163 // pred_region
          %1345 = dma.done [#allocation25], 16
        $region224: #{tpu_custom_call.1} parent=163 // pred_fallthru
          _
        // Predicated region
        $region225: #{tpu_custom_call.1} parent=163 // pred_check
          %p1346 = pneg %p660
        $region226: #{tpu_custom_call.1} parent=163 // pred_check_branch
          %1348 = sbr.rel (%p1346) target = $region228
        $region227: #{tpu_custom_call.1} parent=163 // pred_region
          %1349 = dma.done [#allocation28], 256
        $region228: #{tpu_custom_call.1} parent=163 // pred_fallthru
          _
        // Predicated region
        $region229: #{tpu_custom_call.1} parent=163 // pred_check
          %p1350 = pneg %p681
        $region230: #{tpu_custom_call.1} parent=163 // pred_check_branch
          %1352 = sbr.rel (%p1350) target = $region232
        $region231: #{tpu_custom_call.1} parent=163 // pred_region
          %1353 = dma.done [#allocation28], 16
        $region232: #{tpu_custom_call.1} parent=163 // pred_fallthru
          _
        // Predicated region
        $region233: #{tpu_custom_call.1} parent=163 // pred_check
          %p1354 = pneg %p744
        $region234: #{tpu_custom_call.1} parent=163 // pred_check_branch
          %1356 = sbr.rel (%p1354) target = $region236
        $region235: #{tpu_custom_call.1} parent=163 // pred_region
          %1357 = dma.done [#allocation31], 3072
        $region236: #{tpu_custom_call.1} parent=163 // pred_fallthru
          _
        // Predicated region
        $region237: #{tpu_custom_call.1} parent=163 // pred_check
          %p1358 = pneg %p765
        $region238: #{tpu_custom_call.1} parent=163 // pred_check_branch
          %1360 = sbr.rel (%p1358) target = $region240
        $region239: #{tpu_custom_call.1} parent=163 // pred_region
          %1361 = dma.done [#allocation31], 3072
        $region240: #{tpu_custom_call.1} parent=163 // pred_fallthru
          _
        // Predicated region
        $region241: #{tpu_custom_call.1} parent=163 // pred_check
          %p1362 = pneg %p786
        $region242: #{tpu_custom_call.1} parent=163 // pred_check_branch
          %1364 = sbr.rel (%p1362) target = $region244
        $region243: #{tpu_custom_call.1} parent=163 // pred_region
          %1365 = dma.done [#allocation34], 3072
        $region244: #{tpu_custom_call.1} parent=163 // pred_fallthru
          _
        // Predicated region
        $region245: #{tpu_custom_call.1} parent=163 // pred_check
          %p1366 = pneg %p807
        $region246: #{tpu_custom_call.1} parent=163 // pred_check_branch
          %1368 = sbr.rel (%p1366) target = $region248
        $region247: #{tpu_custom_call.1} parent=163 // pred_region
          %1369 = dma.done [#allocation34], 48
        $region248: #{tpu_custom_call.1} parent=163 // pred_fallthru
          _
        // Predicated region
        $region249: #{tpu_custom_call.1} parent=163 // pred_check
          %p1370 = pneg %p849
        $region250: #{tpu_custom_call.1} parent=163 // pred_check_branch
          %1372 = sbr.rel (%p1370) target = $region252
        $region251: #{tpu_custom_call.1} parent=163 // pred_region
          %1373 = dma.done [#allocation37], 16
        $region252: #{tpu_custom_call.1} parent=163 // pred_fallthru
          _
        %s1374 = sand.u32 %s113, 1
        %s1375 = scalar_lea.sflag [#allocation4], %s1374
        %s1376 = sand.u32 %s113, 1
        %s1377 = smul.addr %s1376, 4
        %s1378 = scalar_lea.vmem [#allocation3], %s1377
        %p1379 = pneg %p126
        %p1380 = pneg %p123
        %p1381 = scmp.lt.s32.totalorder %s105, 1
        %s1382 = scalar_select %p1381, %s105, 1
        %s1383 = smul.addr %s1382, 8
        %s1384 = scalar_lea.vmem %s3, %s1383
        %p1385 = pneg %p152
        %p1386 = pneg %p149
        %p1387 = scmp.lt.s32.totalorder %s105, 1
        %s1388 = scalar_select %p1387, %s105, 1
        %s1389 = smul.addr %s1388, 8
        %s1390 = scalar_lea.vmem %s5, %s1389
        %p1391 = pneg %p178
        %p1392 = pneg %p175
        %p1393 = scmp.lt.s32.totalorder %s105, 1
        %s1394 = scalar_select %p1393, %s105, 1
        %s1395 = smul.addr %s1394, 8
        %s1396 = scalar_lea.vmem %s7, %s1395
        %p1397 = pneg %p204
        %p1398 = pneg %p201
        %p1399 = scmp.lt.s32.totalorder %s105, 1
        %s1400 = scalar_select %p1399, %s105, 1
        %s1401 = scalar_lea.vmem %s9, %s1400
        %p1402 = pneg %p230
        %p1403 = pneg %p227
        %p1404 = scmp.lt.s32.totalorder %s105, 1
        %s1405 = scalar_select %p1404, %s105, 1
        %s1406 = smul.addr %s1405, 8
        %s1407 = scalar_lea.vmem %s11, %s1406
        %p1408 = pneg %p256
        %p1409 = pneg %p253
        %s1410 = sand.u32 %s105, 1
        %s1411 = scalar_lea.sflag [#allocation7], %s1410
        %s1412 = sand.u32 %s269, 1
        %s1413 = scalar_lea.vmem [#allocation6], %s1412
        %p1414 = pneg %p282
        %p1415 = pneg %p279
        %p1416 = pneg %p303
        %p1417 = pneg %p300
        %p1418 = pneg %p324
        %p1419 = pneg %p321
        %p1420 = pneg %p345
        %p1421 = pneg %p342
        %p1422 = pneg %p366
        %p1423 = pneg %p363
        %p1424 = pneg %p387
        %p1425 = pneg %p384
        %p1426 = pneg %p408
        %p1427 = pneg %p405
        %p1428 = pneg %p429
        %p1429 = pneg %p426
        %p1430 = pneg %p450
        %p1431 = pneg %p447
        %p1432 = pneg %p471
        %p1433 = pneg %p468
        %p1434 = pneg %p492
        %p1435 = pneg %p489
        %p1436 = pneg %p513
        %p1437 = pneg %p510
        %p1438 = pneg %p534
        %p1439 = pneg %p531
        %p1440 = pneg %p555
        %p1441 = pneg %p552
        %p1442 = pneg %p576
        %p1443 = pneg %p573
        %p1444 = pneg %p597
        %p1445 = pneg %p594
        %p1446 = pneg %p618
        %p1447 = pneg %p615
        %p1448 = pneg %p639
        %p1449 = pneg %p636
        %p1450 = pneg %p660
        %p1451 = pneg %p657
        %p1452 = pneg %p681
        %p1453 = pneg %p678
        %p1454 = pneg %p702
        %p1455 = pneg %p699
        %p1456 = pneg %p723
        %p1457 = pneg %p720
        %p1458 = pneg %p744
        %p1459 = pneg %p741
        %p1460 = pneg %p765
        %p1461 = pneg %p762
        %p1462 = pneg %p786
        %p1463 = pneg %p783
        %p1464 = pneg %p807
        %p1465 = pneg %p804
        %p1466 = pneg %p828
        %p1467 = pneg %p825
        %p1468 = pneg %p849
        %p1469 = pneg %p846
        %p1470 = pneg %p870
        %p1471 = pneg %p867
        %p1472 = pneg %p891
        %p1473 = pneg %p888
        %p1474 = pneg %p917
        %p1475 = pneg %p914
        %s1476 = sand.u32 %s904, 1
        %s1477 = scalar_lea.sflag [#allocation5], %s1476
        %s1478 = sand.u32 %s904, 1
        %s1479 = scalar_lea.vmem [#allocation38], %s1478
        %p1480 = scmp.lt.s32.totalorder %s105, 1
        %s1481 = scalar_select %p1480, %s105, 1
        %s1482 = smul.addr %s1481, 8
        %s1483 = scalar_lea.vmem %s3, %s1482
        %p1484 = scmp.lt.s32.totalorder %s105, 1
        %s1485 = scalar_select %p1484, %s105, 1
        %s1486 = smul.addr %s1485, 8
        %s1487 = scalar_lea.vmem %s5, %s1486
        %p1488 = scmp.lt.s32.totalorder %s105, 1
        %s1489 = scalar_select %p1488, %s105, 1
        %s1490 = smul.addr %s1489, 8
        %s1491 = scalar_lea.vmem %s7, %s1490
        %p1492 = scmp.lt.s32.totalorder %s105, 1
        %s1493 = scalar_select %p1492, %s105, 1
        %s1494 = scalar_lea.vmem %s9, %s1493
        %p1495 = scmp.lt.s32.totalorder %s105, 1
        %s1496 = scalar_select %p1495, %s105, 1
        %s1497 = smul.addr %s1496, 8
        %s1498 = scalar_lea.vmem %s11, %s1497
        %v1500 = vld [vmem:[%s1281] sm:$0xf]
        %v1501 = vld [vmem:[%s1483] sm:$0xff]
        %v1502 = vld [vmem:[%s1498] sm:$0xff]
        %v1503 = vld [vmem:[#allocation8] sm:$0xf]
        %v1504 = vld [vmem:[#allocation8 + $0x4] sm:$0xf]
        %v1505 = vld [vmem:[#allocation8 + $0x8] sm:$0xf]
        %v1506 = vld [vmem:[#allocation8 + $0xc] sm:$0xf]
        %v1507 = vld [vmem:[#allocation9] sm:$0x1]
        %v1512 = vunpack.c.l.b16 %v1503
        %v1513 = vunpack.c.l.b16 %v1504
        %v1514 = vunpack.c.l.b16 %v1505
        %v1515 = vunpack.c.l.b16 %v1506
        %v1516 = vpack.c.b16 %v1513, %v1512
        %v1517 = vpack.c.b16 %v1515, %v1514
        %vm1520 = vcmask 261120
        %v1522 = vsel %vm1520, %v1500, 0
        %1524 = vmatprep.subr.bf16.mxu0 0
        %1525 = vmatpush1.bf16.msra.mxu0 0
        %1526 = vmatprep.subr.bf16.mxu0 0
        %1527 = vmatpush1.bf16.msra.mxu0 0
        %1528 = vmatprep.subr.bf16.mxu0 0
        %1529 = vmatpush1.bf16.msra.mxu0 0
        %1530 = vmatprep.subr.bf16.mxu0 0
        %1531 = vmatpush1.bf16.msra.mxu0 0
        %1532 = vmatprep.subr.bf16.mxu0 0
        %1533 = vmatpush1.bf16.msra.mxu0 0
        %1534 = vmatprep.subr.bf16.mxu0 0
        %1535 = vmatpush1.bf16.msra.mxu0 0
        %1536 = vmatprep.subr.bf16.mxu0 0
        %1537 = vmatpush1.bf16.msra.mxu0 %v1517
        %1538 = vmatprep.subr.bf16.mxu0 0
        %1539 = vmatpush1.bf16.msra.mxu0 %v1516
        %1540 = vmatprep.subr.bf16.mxu0 0
        %1541 = vmatpush2.bf16.msra.mxu0 0
        %1542 = vmatprep.subr.bf16.mxu0 0
        %1543 = vmatpush2.bf16.msra.mxu0 0
        %1544 = vmatprep.subr.bf16.mxu0 0
        %1545 = vmatpush2.bf16.msra.mxu0 0
        %1546 = vmatprep.subr.bf16.mxu0 0
        %1547 = vmatpush2.bf16.msra.mxu0 0
        %1548 = vmatprep.subr.bf16.mxu0 0
        %1549 = vmatpush2.bf16.msra.mxu0 0
        %1550 = vmatprep.subr.bf16.mxu0 0
        %1551 = vmatpush2.bf16.msra.mxu0 0
        %1552 = vmatprep.subr.bf16.mxu0 0
        %1553 = vmatpush2.bf16.msra.mxu0 0
        %1554 = vmatprep.subr.bf16.mxu0 0
        %1555 = vmatpush2.bf16.msra.mxu0 0
        %1556 = vmatprep.mubr.bf16.mxu0 0
        %1557 = vmatmul.mubr.bf16.gmra.mxu0 %v1522
        %v1558 = vpop.f32.mrf.mxu0
        %v1559 = vadd.f32 %v1507, %v1558
        %v1560 = vpop.f32.mrf.mxu0
        %v1561 = vpop.f32.mrf.mxu0
        %v1562 = vpop.f32.mrf.mxu0
        %1563 = vdwg.mxu0
        %v1564 = vtanh.pop %v1559
        %v1565 = vunpack.c.l.bf16 %v1500
        %vm1566 = vcmp.eq.f32.partialorder %v1501, 0.0
        %v1567 = vsel %vm1566, 1, 0
        %1568 = vset.pattern.permute.xlu0 0
        %1569 = vperm.xlu0 %1568, %v1567
        %v1570 = vpop.permute.xlu0 %1569
        %vm1571 = vcmp.eq.s32.totalorder %v1570, 1
        %v1572 = vsel %vm1571, -1e+09, %v1565
        %v1573 = vsel %vm1520, %v1572, -inf
        %v1574 = vrot.slane %v1573, 4
        %v1575 = vmax.f32 %v1573, %v1574
        %v1576 = vrot.slane %v1575, 2
        %v1577 = vmax.f32 %v1575, %v1576
        %v1578 = vrot.slane %v1577, 1
        %v1579 = vmax.f32 %v1577, %v1578
        %v1580 = vpack.c.bf16 %v1579, %v1579
        %v1581 = vld [vmem:[#allocation11] sm:$0xf]
        %v1582 = vld [vmem:[#allocation11 + $0x4] sm:$0xf]
        %v1583 = vld [vmem:[#allocation11 + $0x8] sm:$0xf]
        %v1584 = vld [vmem:[#allocation11 + $0xc] sm:$0xf]
        %v1585 = vld [vmem:[#allocation12] sm:$0x1]
        %v1590 = vunpack.c.l.b16 %v1581
        %v1591 = vunpack.c.l.b16 %v1582
        %v1592 = vunpack.c.l.b16 %v1583
        %v1593 = vunpack.c.l.b16 %v1584
        %v1594 = vpack.c.b16 %v1591, %v1590
        %v1595 = vpack.c.b16 %v1593, %v1592
        %v1599 = vsel %vm1520, %v1580, 0
        %1601 = vmatprep.subr.bf16.mxu0 0
        %1602 = vmatpush1.bf16.msra.mxu0 0
        %1603 = vmatprep.subr.bf16.mxu0 0
        %1604 = vmatpush1.bf16.msra.mxu0 0
        %1605 = vmatprep.subr.bf16.mxu0 0
        %1606 = vmatpush1.bf16.msra.mxu0 0
        %1607 = vmatprep.subr.bf16.mxu0 0
        %1608 = vmatpush1.bf16.msra.mxu0 0
        %1609 = vmatprep.subr.bf16.mxu0 0
        %1610 = vmatpush1.bf16.msra.mxu0 0
        %1611 = vmatprep.subr.bf16.mxu0 0
        %1612 = vmatpush1.bf16.msra.mxu0 0
        %1613 = vmatprep.subr.bf16.mxu0 0
        %1614 = vmatpush1.bf16.msra.mxu0 %v1595
        %1615 = vmatprep.subr.bf16.mxu0 0
        %1616 = vmatpush1.bf16.msra.mxu0 %v1594
        %1617 = vmatprep.subr.bf16.mxu0 0
        %1618 = vmatpush2.bf16.msra.mxu0 0
        %1619 = vmatprep.subr.bf16.mxu0 0
        %1620 = vmatpush2.bf16.msra.mxu0 0
        %1621 = vmatprep.subr.bf16.mxu0 0
        %1622 = vmatpush2.bf16.msra.mxu0 0
        %1623 = vmatprep.subr.bf16.mxu0 0
        %1624 = vmatpush2.bf16.msra.mxu0 0
        %1625 = vmatprep.subr.bf16.mxu0 0
        %1626 = vmatpush2.bf16.msra.mxu0 0
        %1627 = vmatprep.subr.bf16.mxu0 0
        %1628 = vmatpush2.bf16.msra.mxu0 0
        %1629 = vmatprep.subr.bf16.mxu0 0
        %1630 = vmatpush2.bf16.msra.mxu0 0
        %1631 = vmatprep.subr.bf16.mxu0 0
        %1632 = vmatpush2.bf16.msra.mxu0 0
        %1633 = vmatprep.mubr.bf16.mxu0 0
        %1634 = vmatmul.mubr.bf16.gmra.mxu0 %v1599
        %v1635 = vpop.f32.mrf.mxu0
        %v1636 = vadd.f32 %v1585, %v1635
        %v1637 = vpop.f32.mrf.mxu0
        %v1638 = vpop.f32.mrf.mxu0
        %v1639 = vpop.f32.mrf.mxu0
        %1640 = vdwg.mxu0
        %v1641 = vtanh.pop %v1636
        %v1642 = vld [vmem:[#allocation14] sm:$0xff]
        %v1643 = vld [vmem:[#allocation14 + $0x8] sm:$0xff]
        %v1644 = vld [vmem:[#allocation14 + $0x10] sm:$0xff]
        %v1645 = vld [vmem:[#allocation14 + $0x18] sm:$0xff]
        %v1646 = vld [vmem:[#allocation14 + $0x20] sm:$0xff]
        %v1647 = vld [vmem:[#allocation14 + $0x28] sm:$0xff]
        %v1648 = vld [vmem:[#allocation14 + $0x30] sm:$0xff]
        %v1649 = vld [vmem:[#allocation14 + $0x38] sm:$0xff]
        %v1650 = vld [vmem:[#allocation15] sm:$0xf]
        %v1659 = vunpack.c.l.b16 %v1642
        %v1660 = vunpack.c.h.b16 %v1642
        %v1661 = vunpack.c.l.b16 %v1643
        %v1662 = vunpack.c.h.b16 %v1643
        %v1663 = vunpack.c.l.b16 %v1644
        %v1664 = vunpack.c.h.b16 %v1644
        %v1665 = vunpack.c.l.b16 %v1645
        %v1666 = vunpack.c.h.b16 %v1645
        %v1667 = vunpack.c.l.b16 %v1646
        %v1668 = vunpack.c.h.b16 %v1646
        %v1669 = vunpack.c.l.b16 %v1647
        %v1670 = vunpack.c.h.b16 %v1647
        %v1671 = vunpack.c.l.b16 %v1648
        %v1672 = vunpack.c.h.b16 %v1648
        %v1673 = vunpack.c.l.b16 %v1649
        %v1674 = vunpack.c.h.b16 %v1649
        %v1675 = vpack.c.b16 %v1663, %v1659
        %v1676 = vpack.c.b16 %v1664, %v1660
        %v1677 = vpack.c.b16 %v1665, %v1661
        %v1678 = vpack.c.b16 %v1666, %v1662
        %v1679 = vpack.c.b16 %v1671, %v1667
        %v1680 = vpack.c.b16 %v1672, %v1668
        %v1681 = vpack.c.b16 %v1673, %v1669
        %v1682 = vpack.c.b16 %v1674, %v1670
        %v1692 = vlaneseq
        %v1693 = vshrl.u32 %v1692, 7
        %v1694 = vsub.s32 0, %v1693
        %v1695 = vrot.slane %v1650, %v1694
        %v1696 = vlaneseq
        %v1697 = vshrl.u32 %v1696, 7
        %v1698 = vsub.s32 1, %v1697
        %v1699 = vrot.slane %v1650, %v1698
        %v1700 = vlaneseq
        %v1701 = vshrl.u32 %v1700, 7
        %v1702 = vsub.s32 2, %v1701
        %v1703 = vrot.slane %v1650, %v1702
        %v1704 = vlaneseq
        %v1705 = vshrl.u32 %v1704, 7
        %v1706 = vsub.s32 3, %v1705
        %v1707 = vrot.slane %v1650, %v1706
        %1712 = vmatprep.subr.bf16.mxu0 0
        %1713 = vmatpush1.bf16.msra.mxu0 0
        %1714 = vmatprep.subr.bf16.mxu0 0
        %1715 = vmatpush1.bf16.msra.mxu0 0
        %1716 = vmatprep.subr.bf16.mxu0 0
        %1717 = vmatpush1.bf16.msra.mxu0 0
        %1718 = vmatprep.subr.bf16.mxu0 0
        %1719 = vmatpush1.bf16.msra.mxu0 0
        %1720 = vmatprep.subr.bf16.mxu0 0
        %1721 = vmatpush1.bf16.msra.mxu0 0
        %1722 = vmatprep.subr.bf16.mxu0 0
        %1723 = vmatpush1.bf16.msra.mxu0 0
        %1724 = vmatprep.subr.bf16.mxu0 %v1680
        %1725 = vmatpush1.bf16.msra.mxu0 %v1679
        %1726 = vmatprep.subr.bf16.mxu0 %v1676
        %1727 = vmatpush1.bf16.msra.mxu0 %v1675
        %1728 = vmatprep.subr.bf16.mxu0 0
        %1729 = vmatpush2.bf16.msra.mxu0 0
        %1730 = vmatprep.subr.bf16.mxu0 0
        %1731 = vmatpush2.bf16.msra.mxu0 0
        %1732 = vmatprep.subr.bf16.mxu0 0
        %1733 = vmatpush2.bf16.msra.mxu0 0
        %1734 = vmatprep.subr.bf16.mxu0 0
        %1735 = vmatpush2.bf16.msra.mxu0 0
        %1736 = vmatprep.subr.bf16.mxu0 0
        %1737 = vmatpush2.bf16.msra.mxu0 0
        %1738 = vmatprep.subr.bf16.mxu0 0
        %1739 = vmatpush2.bf16.msra.mxu0 0
        %1740 = vmatprep.subr.bf16.mxu0 0
        %1741 = vmatpush2.bf16.msra.mxu0 0
        %1742 = vmatprep.subr.bf16.mxu0 0
        %1743 = vmatpush2.bf16.msra.mxu0 0
        %1744 = vmatprep.mubr.bf16.mxu0 0
        %1745 = vmatmul.mubr.bf16.gmra.mxu0 %v1522
        %v1746 = vpop.f32.mrf.mxu0
        %v1747 = vadd.f32 %v1695, %v1746
        %v1748 = vpop.f32.mrf.mxu0
        %v1749 = vadd.f32 %v1699, %v1748
        %v1750 = vpop.f32.mrf.mxu0
        %v1751 = vpop.f32.mrf.mxu0
        %1752 = vdwg.mxu0
        %1753 = vmatprep.subr.bf16.mxu0 0
        %1754 = vmatpush1.bf16.msra.mxu0 0
        %1755 = vmatprep.subr.bf16.mxu0 0
        %1756 = vmatpush1.bf16.msra.mxu0 0
        %1757 = vmatprep.subr.bf16.mxu0 0
        %1758 = vmatpush1.bf16.msra.mxu0 0
        %1759 = vmatprep.subr.bf16.mxu0 0
        %1760 = vmatpush1.bf16.msra.mxu0 0
        %1761 = vmatprep.subr.bf16.mxu0 0
        %1762 = vmatpush1.bf16.msra.mxu0 0
        %1763 = vmatprep.subr.bf16.mxu0 0
        %1764 = vmatpush1.bf16.msra.mxu0 0
        %1765 = vmatprep.subr.bf16.mxu0 %v1682
        %1766 = vmatpush1.bf16.msra.mxu0 %v1681
        %1767 = vmatprep.subr.bf16.mxu0 %v1678
        %1768 = vmatpush1.bf16.msra.mxu0 %v1677
        %1769 = vmatprep.subr.bf16.mxu0 0
        %1770 = vmatpush2.bf16.msra.mxu0 0
        %1771 = vmatprep.subr.bf16.mxu0 0
        %1772 = vmatpush2.bf16.msra.mxu0 0
        %1773 = vmatprep.subr.bf16.mxu0 0
        %1774 = vmatpush2.bf16.msra.mxu0 0
        %1775 = vmatprep.subr.bf16.mxu0 0
        %1776 = vmatpush2.bf16.msra.mxu0 0
        %1777 = vmatprep.subr.bf16.mxu0 0
        %1778 = vmatpush2.bf16.msra.mxu0 0
        %1779 = vmatprep.subr.bf16.mxu0 0
        %1780 = vmatpush2.bf16.msra.mxu0 0
        %1781 = vmatprep.subr.bf16.mxu0 0
        %1782 = vmatpush2.bf16.msra.mxu0 0
        %1783 = vmatprep.subr.bf16.mxu0 0
        %1784 = vmatpush2.bf16.msra.mxu0 0
        %1785 = vmatprep.mubr.bf16.mxu0 0
        %1786 = vmatmul.mubr.bf16.gmra.mxu0 %v1522
        %v1787 = vpop.f32.mrf.mxu0
        %v1788 = vadd.f32 %v1703, %v1787
        %v1789 = vpop.f32.mrf.mxu0
        %v1790 = vadd.f32 %v1707, %v1789
        %v1791 = vpop.f32.mrf.mxu0
        %v1792 = vpop.f32.mrf.mxu0
        %1793 = vdwg.mxu0
        %v1794 = vmax.f32 %v1747, 0.0
        %v1795 = vmax.f32 %v1749, 0.0
        %v1796 = vmax.f32 %v1788, 0.0
        %v1797 = vmax.f32 %v1790, 0.0
        %vm1798 = vcmask 1040384
        %v1799 = vsel %vm1798, %v1794, 0.0
        %v1800 = vsel %vm1798, %v1795, 0.0
        %v1801 = vadd.f32 %v1799, %v1800
        %v1802 = vsel %vm1798, %v1796, 0.0
        %v1803 = vadd.f32 %v1801, %v1802
        %v1804 = vsel %vm1798, %v1797, 0.0
        %v1805 = vadd.f32 %v1803, %v1804
        %1806 = vadd.xlane.f32.xlu0 %v1805
        %v1807 = vpop.xlane.xlu0 %1806
        %v1808 = vrcp.pop 512.0
        %v1809 = vmul.f32 %v1807, %v1808
        %v1810 = vsub.f32 %v1794, %v1809
        %v1811 = vsub.f32 %v1795, %v1809
        %v1812 = vsub.f32 %v1796, %v1809
        %v1813 = vsub.f32 %v1797, %v1809
        %v1814 = vmul.f32 %v1810, %v1810
        %v1815 = vmul.f32 %v1811, %v1811
        %v1816 = vmul.f32 %v1812, %v1812
        %v1817 = vmul.f32 %v1813, %v1813
        %v1818 = vsel %vm1798, %v1814, 0.0
        %v1819 = vsel %vm1798, %v1815, 0.0
        %v1820 = vadd.f32 %v1818, %v1819
        %v1821 = vsel %vm1798, %v1816, 0.0
        %v1822 = vadd.f32 %v1820, %v1821
        %v1823 = vsel %vm1798, %v1817, 0.0
        %v1824 = vadd.f32 %v1822, %v1823
        %1825 = vadd.xlane.f32.xlu0 %v1824
        %v1826 = vpop.xlane.xlu0 %1825
        %v1827 = vmul.f32 %v1826, %v1808
        %v1828 = vadd.f32 %v1827, 1e-05
        %v1829 = vrsqrt.pop %v1828
        %v1830 = vmul.f32 %v1810, %v1829
        %v1831 = vmul.f32 %v1811, %v1829
        %v1832 = vmul.f32 %v1812, %v1829
        %v1833 = vmul.f32 %v1813, %v1829
        %v1834 = vld [vmem:[#allocation17] sm:$0xf]
        %v1836 = vlaneseq
        %v1837 = vshrl.u32 %v1836, 7
        %v1838 = vsub.s32 0, %v1837
        %v1839 = vrot.slane %v1834, %v1838
        %v1840 = vlaneseq
        %v1841 = vshrl.u32 %v1840, 7
        %v1842 = vsub.s32 1, %v1841
        %v1843 = vrot.slane %v1834, %v1842
        %v1844 = vlaneseq
        %v1845 = vshrl.u32 %v1844, 7
        %v1846 = vsub.s32 2, %v1845
        %v1847 = vrot.slane %v1834, %v1846
        %v1848 = vlaneseq
        %v1849 = vshrl.u32 %v1848, 7
        %v1850 = vsub.s32 3, %v1849
        %v1851 = vrot.slane %v1834, %v1850
        %v1856 = vmul.f32 %v1830, %v1839
        %v1857 = vmul.f32 %v1831, %v1843
        %v1858 = vmul.f32 %v1832, %v1847
        %v1859 = vmul.f32 %v1833, %v1851
        %v1860 = vld [vmem:[#allocation18] sm:$0xf]
        %v1862 = vlaneseq
        %v1863 = vshrl.u32 %v1862, 7
        %v1864 = vsub.s32 0, %v1863
        %v1865 = vrot.slane %v1860, %v1864
        %v1866 = vlaneseq
        %v1867 = vshrl.u32 %v1866, 7
        %v1868 = vsub.s32 1, %v1867
        %v1869 = vrot.slane %v1860, %v1868
        %v1870 = vlaneseq
        %v1871 = vshrl.u32 %v1870, 7
        %v1872 = vsub.s32 2, %v1871
        %v1873 = vrot.slane %v1860, %v1872
        %v1874 = vlaneseq
        %v1875 = vshrl.u32 %v1874, 7
        %v1876 = vsub.s32 3, %v1875
        %v1877 = vrot.slane %v1860, %v1876
        %v1882 = vadd.f32 %v1856, %v1865
        %v1883 = vadd.f32 %v1857, %v1869
        %v1884 = vadd.f32 %v1858, %v1873
        %v1885 = vadd.f32 %v1859, %v1877
        %v1886 = vpack.c.bf16 %v1882, %v1882
        %v1887 = vpack.c.bf16 %v1883, %v1883
        %v1888 = vpack.c.bf16 %v1884, %v1884
        %v1889 = vpack.c.bf16 %v1885, %v1885
        %v1890 = vld [vmem:[%s33] sm:$0xf]
        %v1891 = vld [vmem:[%s33 + $0x4] sm:$0xf]
        %v1892 = vld [vmem:[%s33 + $0x8] sm:$0xf]
        %v1893 = vld [vmem:[%s33 + $0xc] sm:$0xf]
        %v1894 = vld [vmem:[%s33 + $0x10] sm:$0xf]
        %v1895 = vld [vmem:[%s33 + $0x14] sm:$0xf]
        %v1896 = vld [vmem:[%s33 + $0x18] sm:$0xf]
        %v1897 = vld [vmem:[%s33 + $0x1c] sm:$0xf]
        %v1898 = vld [vmem:[%s33 + $0x20] sm:$0xf]
        %v1899 = vld [vmem:[%s33 + $0x24] sm:$0xf]
        %v1900 = vld [vmem:[%s33 + $0x28] sm:$0xf]
        %v1901 = vld [vmem:[%s33 + $0x2c] sm:$0xf]
        %v1902 = vld [vmem:[%s33 + $0x30] sm:$0xf]
        %v1903 = vld [vmem:[%s33 + $0x34] sm:$0xf]
        %v1904 = vld [vmem:[%s33 + $0x38] sm:$0xf]
        %v1905 = vld [vmem:[%s33 + $0x3c] sm:$0xf]
        %v1906 = vld [vmem:[%s33 + $0x40] sm:$0xf]
        %v1907 = vld [vmem:[%s33 + $0x44] sm:$0xf]
        %v1908 = vld [vmem:[%s33 + $0x48] sm:$0xf]
        %v1909 = vld [vmem:[%s33 + $0x4c] sm:$0xf]
        %v1910 = vld [vmem:[%s33 + $0x50] sm:$0xf]
        %v1911 = vld [vmem:[%s33 + $0x54] sm:$0xf]
        %v1912 = vld [vmem:[%s33 + $0x58] sm:$0xf]
        %v1913 = vld [vmem:[%s33 + $0x5c] sm:$0xf]
        %v1914 = vld [vmem:[%s33 + $0x60] sm:$0xf]
        %v1915 = vld [vmem:[%s33 + $0x64] sm:$0xf]
        %v1916 = vld [vmem:[%s33 + $0x68] sm:$0xf]
        %v1917 = vld [vmem:[%s33 + $0x6c] sm:$0xf]
        %v1918 = vld [vmem:[%s33 + $0x70] sm:$0xf]
        %v1919 = vld [vmem:[%s33 + $0x74] sm:$0xf]
        %v1920 = vld [vmem:[%s33 + $0x78] sm:$0xf]
        %v1921 = vld [vmem:[%s33 + $0x7c] sm:$0xf]
        %v1922 = vld [vmem:[%s33 + $0x80] sm:$0xf]
        %v1923 = vld [vmem:[%s33 + $0x84] sm:$0xf]
        %v1924 = vld [vmem:[%s33 + $0x88] sm:$0xf]
        %v1925 = vld [vmem:[%s33 + $0x8c] sm:$0xf]
        %v1926 = vld [vmem:[%s33 + $0x90] sm:$0xf]
        %v1927 = vld [vmem:[%s33 + $0x94] sm:$0xf]
        %v1928 = vld [vmem:[%s33 + $0x98] sm:$0xf]
        %v1929 = vld [vmem:[%s33 + $0x9c] sm:$0xf]
        %v1930 = vld [vmem:[%s33 + $0xa0] sm:$0xf]
        %v1931 = vld [vmem:[%s33 + $0xa4] sm:$0xf]
        %v1932 = vld [vmem:[%s33 + $0xa8] sm:$0xf]
        %v1933 = vld [vmem:[%s33 + $0xac] sm:$0xf]
        %v1934 = vld [vmem:[%s33 + $0xb0] sm:$0xf]
        %v1935 = vld [vmem:[%s33 + $0xb4] sm:$0xf]
        %v1936 = vld [vmem:[%s33 + $0xb8] sm:$0xf]
        %v1937 = vld [vmem:[%s33 + $0xbc] sm:$0xf]
        %v1938 = vld [vmem:[%s33 + $0xc0] sm:$0xf]
        %v1939 = vld [vmem:[%s33 + $0xc4] sm:$0xf]
        %v1940 = vld [vmem:[%s33 + $0xc8] sm:$0xf]
        %v1941 = vld [vmem:[%s33 + $0xcc] sm:$0xf]
        %v1942 = vld [vmem:[%s33 + $0xd0] sm:$0xf]
        %v1943 = vld [vmem:[%s33 + $0xd4] sm:$0xf]
        %v1944 = vld [vmem:[%s33 + $0xd8] sm:$0xf]
        %v1945 = vld [vmem:[%s33 + $0xdc] sm:$0xf]
        %v1946 = vld [vmem:[%s33 + $0xe0] sm:$0xf]
        %v1947 = vld [vmem:[%s33 + $0xe4] sm:$0xf]
        %v1948 = vld [vmem:[%s33 + $0xe8] sm:$0xf]
        %v1949 = vld [vmem:[%s33 + $0xec] sm:$0xf]
        %v1950 = vld [vmem:[%s33 + $0xf0] sm:$0xf]
        %v1951 = vld [vmem:[%s33 + $0xf4] sm:$0xf]
        %v1952 = vld [vmem:[%s33 + $0xf8] sm:$0xf]
        %v1953 = vld [vmem:[%s33 + $0xfc] sm:$0xf]
        %v1954 = vld [vmem:[#allocation20] sm:$0x1]
        %v2019 = vunpack.c.l.b16 %v1890
        %v2020 = vunpack.c.l.b16 %v1891
        %v2021 = vunpack.c.l.b16 %v1892
        %v2022 = vunpack.c.l.b16 %v1893
        %v2023 = vunpack.c.l.b16 %v1894
        %v2024 = vunpack.c.l.b16 %v1895
        %v2025 = vunpack.c.l.b16 %v1896
        %v2026 = vunpack.c.l.b16 %v1897
        %v2027 = vunpack.c.l.b16 %v1898
        %v2028 = vunpack.c.l.b16 %v1899
        %v2029 = vunpack.c.l.b16 %v1900
        %v2030 = vunpack.c.l.b16 %v1901
        %v2031 = vunpack.c.l.b16 %v1902
        %v2032 = vunpack.c.l.b16 %v1903
        %v2033 = vunpack.c.l.b16 %v1904
        %v2034 = vunpack.c.l.b16 %v1905
        %v2035 = vunpack.c.l.b16 %v1906
        %v2036 = vunpack.c.l.b16 %v1907
        %v2037 = vunpack.c.l.b16 %v1908
        %v2038 = vunpack.c.l.b16 %v1909
        %v2039 = vunpack.c.l.b16 %v1910
        %v2040 = vunpack.c.l.b16 %v1911
        %v2041 = vunpack.c.l.b16 %v1912
        %v2042 = vunpack.c.l.b16 %v1913
        %v2043 = vunpack.c.l.b16 %v1914
        %v2044 = vunpack.c.l.b16 %v1915
        %v2045 = vunpack.c.l.b16 %v1916
        %v2046 = vunpack.c.l.b16 %v1917
        %v2047 = vunpack.c.l.b16 %v1918
        %v2048 = vunpack.c.l.b16 %v1919
        %v2049 = vunpack.c.l.b16 %v1920
        %v2050 = vunpack.c.l.b16 %v1921
        %v2051 = vunpack.c.l.b16 %v1922
        %v2052 = vunpack.c.l.b16 %v1923
        %v2053 = vunpack.c.l.b16 %v1924
        %v2054 = vunpack.c.l.b16 %v1925
        %v2055 = vunpack.c.l.b16 %v1926
        %v2056 = vunpack.c.l.b16 %v1927
        %v2057 = vunpack.c.l.b16 %v1928
        %v2058 = vunpack.c.l.b16 %v1929
        %v2059 = vunpack.c.l.b16 %v1930
        %v2060 = vunpack.c.l.b16 %v1931
        %v2061 = vunpack.c.l.b16 %v1932
        %v2062 = vunpack.c.l.b16 %v1933
        %v2063 = vunpack.c.l.b16 %v1934
        %v2064 = vunpack.c.l.b16 %v1935
        %v2065 = vunpack.c.l.b16 %v1936
        %v2066 = vunpack.c.l.b16 %v1937
        %v2067 = vunpack.c.l.b16 %v1938
        %v2068 = vunpack.c.l.b16 %v1939
        %v2069 = vunpack.c.l.b16 %v1940
        %v2070 = vunpack.c.l.b16 %v1941
        %v2071 = vunpack.c.l.b16 %v1942
        %v2072 = vunpack.c.l.b16 %v1943
        %v2073 = vunpack.c.l.b16 %v1944
        %v2074 = vunpack.c.l.b16 %v1945
        %v2075 = vunpack.c.l.b16 %v1946
        %v2076 = vunpack.c.l.b16 %v1947
        %v2077 = vunpack.c.l.b16 %v1948
        %v2078 = vunpack.c.l.b16 %v1949
        %v2079 = vunpack.c.l.b16 %v1950
        %v2080 = vunpack.c.l.b16 %v1951
        %v2081 = vunpack.c.l.b16 %v1952
        %v2082 = vunpack.c.l.b16 %v1953
        %v2083 = vpack.c.b16 %v2020, %v2019
        %v2084 = vpack.c.b16 %v2022, %v2021
        %v2085 = vpack.c.b16 %v2024, %v2023
        %v2086 = vpack.c.b16 %v2026, %v2025
        %v2087 = vpack.c.b16 %v2028, %v2027
        %v2088 = vpack.c.b16 %v2030, %v2029
        %v2089 = vpack.c.b16 %v2032, %v2031
        %v2090 = vpack.c.b16 %v2034, %v2033
        %v2091 = vpack.c.b16 %v2036, %v2035
        %v2092 = vpack.c.b16 %v2038, %v2037
        %v2093 = vpack.c.b16 %v2040, %v2039
        %v2094 = vpack.c.b16 %v2042, %v2041
        %v2095 = vpack.c.b16 %v2044, %v2043
        %v2096 = vpack.c.b16 %v2046, %v2045
        %v2097 = vpack.c.b16 %v2048, %v2047
        %v2098 = vpack.c.b16 %v2050, %v2049
        %v2099 = vpack.c.b16 %v2052, %v2051
        %v2100 = vpack.c.b16 %v2054, %v2053
        %v2101 = vpack.c.b16 %v2056, %v2055
        %v2102 = vpack.c.b16 %v2058, %v2057
        %v2103 = vpack.c.b16 %v2060, %v2059
        %v2104 = vpack.c.b16 %v2062, %v2061
        %v2105 = vpack.c.b16 %v2064, %v2063
        %v2106 = vpack.c.b16 %v2066, %v2065
        %v2107 = vpack.c.b16 %v2068, %v2067
        %v2108 = vpack.c.b16 %v2070, %v2069
        %v2109 = vpack.c.b16 %v2072, %v2071
        %v2110 = vpack.c.b16 %v2074, %v2073
        %v2111 = vpack.c.b16 %v2076, %v2075
        %v2112 = vpack.c.b16 %v2078, %v2077
        %v2113 = vpack.c.b16 %v2080, %v2079
        %v2114 = vpack.c.b16 %v2082, %v2081
        %2147 = vmatprep.subr.bf16.mxu0 0
        %2148 = vmatpush1.bf16.msra.mxu0 %v2090
        %2149 = vmatprep.subr.bf16.mxu0 0
        %2150 = vmatpush1.bf16.msra.mxu0 %v2089
        %2151 = vmatprep.subr.bf16.mxu0 0
        %2152 = vmatpush1.bf16.msra.mxu0 %v2088
        %2153 = vmatprep.subr.bf16.mxu0 0
        %2154 = vmatpush1.bf16.msra.mxu0 %v2087
        %2155 = vmatprep.subr.bf16.mxu0 0
        %2156 = vmatpush1.bf16.msra.mxu0 %v2086
        %2157 = vmatprep.subr.bf16.mxu0 0
        %2158 = vmatpush1.bf16.msra.mxu0 %v2085
        %2159 = vmatprep.subr.bf16.mxu0 0
        %2160 = vmatpush1.bf16.msra.mxu0 %v2084
        %2161 = vmatprep.subr.bf16.mxu0 0
        %2162 = vmatpush1.bf16.msra.mxu0 %v2083
        %2163 = vmatprep.subr.bf16.mxu0 0
        %2164 = vmatpush2.bf16.msra.mxu0 %v2098
        %2165 = vmatprep.subr.bf16.mxu0 0
        %2166 = vmatpush2.bf16.msra.mxu0 %v2097
        %2167 = vmatprep.subr.bf16.mxu0 0
        %2168 = vmatpush2.bf16.msra.mxu0 %v2096
        %2169 = vmatprep.subr.bf16.mxu0 0
        %2170 = vmatpush2.bf16.msra.mxu0 %v2095
        %2171 = vmatprep.subr.bf16.mxu0 0
        %2172 = vmatpush2.bf16.msra.mxu0 %v2094
        %2173 = vmatprep.subr.bf16.mxu0 0
        %2174 = vmatpush2.bf16.msra.mxu0 %v2093
        %2175 = vmatprep.subr.bf16.mxu0 0
        %2176 = vmatpush2.bf16.msra.mxu0 %v2092
        %2177 = vmatprep.subr.bf16.mxu0 0
        %2178 = vmatpush2.bf16.msra.mxu0 %v2091
        %2179 = vmatprep.mubr.bf16.mxu0 %v1887
        %2180 = vmatmul.mubr.bf16.gmra.mxu0 %v1886
        %v2181 = vpop.f32.mrf.mxu0
        %v2182 = vadd.f32 %v1954, %v2181
        %v2183 = vpop.f32.mrf.mxu0
        %v2184 = vpop.f32.mrf.mxu0
        %v2185 = vpop.f32.mrf.mxu0
        %2186 = vdwg.mxu0
        %2187 = vmatprep.subr.bf16.mxu0 0
        %2188 = vmatpush1.bf16.msra.mxu0 %v2106
        %2189 = vmatprep.subr.bf16.mxu0 0
        %2190 = vmatpush1.bf16.msra.mxu0 %v2105
        %2191 = vmatprep.subr.bf16.mxu0 0
        %2192 = vmatpush1.bf16.msra.mxu0 %v2104
        %2193 = vmatprep.subr.bf16.mxu0 0
        %2194 = vmatpush1.bf16.msra.mxu0 %v2103
        %2195 = vmatprep.subr.bf16.mxu0 0
        %2196 = vmatpush1.bf16.msra.mxu0 %v2102
        %2197 = vmatprep.subr.bf16.mxu0 0
        %2198 = vmatpush1.bf16.msra.mxu0 %v2101
        %2199 = vmatprep.subr.bf16.mxu0 0
        %2200 = vmatpush1.bf16.msra.mxu0 %v2100
        %2201 = vmatprep.subr.bf16.mxu0 0
        %2202 = vmatpush1.bf16.msra.mxu0 %v2099
        %2203 = vmatprep.subr.bf16.mxu0 0
        %2204 = vmatpush2.bf16.msra.mxu0 %v2114
        %2205 = vmatprep.subr.bf16.mxu0 0
        %2206 = vmatpush2.bf16.msra.mxu0 %v2113
        %2207 = vmatprep.subr.bf16.mxu0 0
        %2208 = vmatpush2.bf16.msra.mxu0 %v2112
        %2209 = vmatprep.subr.bf16.mxu0 0
        %2210 = vmatpush2.bf16.msra.mxu0 %v2111
        %2211 = vmatprep.subr.bf16.mxu0 0
        %2212 = vmatpush2.bf16.msra.mxu0 %v2110
        %2213 = vmatprep.subr.bf16.mxu0 0
        %2214 = vmatpush2.bf16.msra.mxu0 %v2109
        %2215 = vmatprep.subr.bf16.mxu0 0
        %2216 = vmatpush2.bf16.msra.mxu0 %v2108
        %2217 = vmatprep.subr.bf16.mxu0 0
        %2218 = vmatpush2.bf16.msra.mxu0 %v2107
        %2219 = vmatprep.mubr.bf16.mxu0 %v1889
        %2220 = vmatmul.mubr.bf16.gmra.mxu0 %v1888
        %v2221 = vpop.f32.mrf.mxu0
        %v2222 = vadd.f32 %v2182, %v2221
        %v2223 = vpop.f32.mrf.mxu0
        %v2224 = vpop.f32.mrf.mxu0
        %v2225 = vpop.f32.mrf.mxu0
        %2226 = vdwg.mxu0
        %v2227 = vld [vmem:[%s1487] sm:$0xff]
        %v2228 = vld [vmem:[%s1491] sm:$0xff]
        %vm2229 = vcmask 7168
        %v2230 = vsel %vm2229, %v2227, 0.0
        %v2231 = vrot.slane %v2230, 4
        %v2232 = vadd.f32 %v2230, %v2231
        %v2233 = vrot.slane %v2232, 2
        %v2234 = vadd.f32 %v2232, %v2233
        %v2235 = vrot.slane %v2234, 1
        %v2236 = vadd.f32 %v2234, %v2235
        %v2237 = vmax.f32 %v2236, 1.0
        %v2238 = vsel %vm2229, %v2228, 0.0
        %v2239 = vrot.slane %v2238, 4
        %v2240 = vadd.f32 %v2238, %v2239
        %v2241 = vrot.slane %v2240, 2
        %v2242 = vadd.f32 %v2240, %v2241
        %v2243 = vrot.slane %v2242, 1
        %v2244 = vadd.f32 %v2242, %v2243
        %v2245 = vmax.f32 %v2244, 1.0
        %v2246 = vrcp.pop %v2237
        %v2247 = vmul.f32 %v2227, %v2246
        %v2248 = vrcp.pop %v2245
        %v2249 = vmul.f32 %v2228, %v2248
        %v2250 = vsub.f32 %v2247, %v2249
        %2252 = vset.pattern.permute.xlu0 0
        %2253 = vperm.xlu0 %2252, %v2250
        %v2254 = vpop.permute.xlu0 %2253
        %v2256 = vmul.f32 %v1565, %v2254
        %v2257 = vsel %vm1520, %v2256, 0.0
        %v2258 = vrot.slane %v2257, 4
        %v2259 = vadd.f32 %v2257, %v2258
        %v2260 = vrot.slane %v2259, 2
        %v2261 = vadd.f32 %v2259, %v2260
        %v2262 = vrot.slane %v2261, 1
        %v2263 = vadd.f32 %v2261, %v2262
        %v2264 = vand.u32 2147483647, %v2263
        %v2265 = vld [vmem:[%s1494] sm:$0x1]
        %2267 = vset.pattern.permute.xlu0 0
        %2268 = vperm.xlu0 %2267, %v2265
        %v2269 = vpop.permute.xlu0 %2268
        %v2271 = vlaneseq
        %v2272 = vshrl.u32 %v2271, 7
        %v2273 = vsub.s32 0, %v2272
        %v2274 = vrot.slane %v2269, %v2273
        %v2275 = vmul.f32 %v2264, %v2274
        %v2276 = vpack.c.bf16 %v2275, %v2275
        %v2277 = vld [vmem:[#allocation21] sm:$0xf]
        %v2278 = vld [vmem:[#allocation21 + $0x4] sm:$0xf]
        %v2279 = vld [vmem:[#allocation21 + $0x8] sm:$0xf]
        %v2280 = vld [vmem:[#allocation21 + $0xc] sm:$0xf]
        %v2281 = vld [vmem:[#allocation23] sm:$0x1]
        %v2286 = vunpack.c.l.b16 %v2277
        %v2287 = vunpack.c.l.b16 %v2278
        %v2288 = vunpack.c.l.b16 %v2279
        %v2289 = vunpack.c.l.b16 %v2280
        %v2290 = vpack.c.b16 %v2287, %v2286
        %v2291 = vpack.c.b16 %v2289, %v2288
        %v2295 = vsel %vm1520, %v2276, 0
        %2297 = vmatprep.subr.bf16.mxu0 0
        %2298 = vmatpush1.bf16.msra.mxu0 0
        %2299 = vmatprep.subr.bf16.mxu0 0
        %2300 = vmatpush1.bf16.msra.mxu0 0
        %2301 = vmatprep.subr.bf16.mxu0 0
        %2302 = vmatpush1.bf16.msra.mxu0 0
        %2303 = vmatprep.subr.bf16.mxu0 0
        %2304 = vmatpush1.bf16.msra.mxu0 0
        %2305 = vmatprep.subr.bf16.mxu0 0
        %2306 = vmatpush1.bf16.msra.mxu0 0
        %2307 = vmatprep.subr.bf16.mxu0 0
        %2308 = vmatpush1.bf16.msra.mxu0 0
        %2309 = vmatprep.subr.bf16.mxu0 0
        %2310 = vmatpush1.bf16.msra.mxu0 %v2291
        %2311 = vmatprep.subr.bf16.mxu0 0
        %2312 = vmatpush1.bf16.msra.mxu0 %v2290
        %2313 = vmatprep.subr.bf16.mxu0 0
        %2314 = vmatpush2.bf16.msra.mxu0 0
        %2315 = vmatprep.subr.bf16.mxu0 0
        %2316 = vmatpush2.bf16.msra.mxu0 0
        %2317 = vmatprep.subr.bf16.mxu0 0
        %2318 = vmatpush2.bf16.msra.mxu0 0
        %2319 = vmatprep.subr.bf16.mxu0 0
        %2320 = vmatpush2.bf16.msra.mxu0 0
        %2321 = vmatprep.subr.bf16.mxu0 0
        %2322 = vmatpush2.bf16.msra.mxu0 0
        %2323 = vmatprep.subr.bf16.mxu0 0
        %2324 = vmatpush2.bf16.msra.mxu0 0
        %2325 = vmatprep.subr.bf16.mxu0 0
        %2326 = vmatpush2.bf16.msra.mxu0 0
        %2327 = vmatprep.subr.bf16.mxu0 0
        %2328 = vmatpush2.bf16.msra.mxu0 0
        %2329 = vmatprep.mubr.bf16.mxu0 0
        %2330 = vmatmul.mubr.bf16.gmra.mxu0 %v2295
        %v2331 = vpop.f32.mrf.mxu0
        %v2332 = vadd.f32 %v2281, %v2331
        %v2333 = vpop.f32.mrf.mxu0
        %v2334 = vpop.f32.mrf.mxu0
        %v2335 = vpop.f32.mrf.mxu0
        %2336 = vdwg.mxu0
        %v2337 = vtanh.pop %v2332
        %v2338 = vld [vmem:[%s1289] sm:$0x1]
        loop: start=0, step=1, limit=8
        $region253: #{tpu_custom_call.1} parent=163 // loop_pre_header
          _
        $region254: #{tpu_custom_call.1} parent=163 // loop_header
          %s2340 = sphi 0, %s2344
          %p2341 = scmp.ge.s32.totalorder %s2340, 8
          %v2345 = vphi 0.0, %v2707
        $region255: #{tpu_custom_call.1} parent=163 // loop_header_branch
          %2343 = sbr.rel (%p2341) target = $region259
        $region256: #{tpu_custom_call.1} parent=163 // loop_body
          %s2346 = smul.u32 %s2340, 12
          %s2347 = smul.addr %s2346, 4
          %s2348 = scalar_lea.vmem %s41, %s2347
          %v2349 = vld [vmem:[%s2348] sm:$0xff]
          %v2350 = vld [vmem:[%s2348 + $0x8] sm:$0xf]
          %v2351 = vld [vmem:[%s2348 + $0xc] sm:$0xff]
          %v2352 = vld [vmem:[%s2348 + $0x14] sm:$0xf]
          %v2353 = vld [vmem:[%s2348 + $0x18] sm:$0xff]
          %v2354 = vld [vmem:[%s2348 + $0x20] sm:$0xf]
          %v2355 = vld [vmem:[%s2348 + $0x24] sm:$0xff]
          %v2356 = vld [vmem:[%s2348 + $0x2c] sm:$0xf]
          %s2357 = smul.u32 %s2340, 3
          %s2358 = scalar_lea.vmem [#allocation24], %s2357
          %v2359 = vld [vmem:[%s2358] sm:$0x7]
          %v2361 = vlaneseq
          %v2362 = vshrl.u32 %v2361, 7
          %v2363 = vsub.s32 0, %v2362
          %v2364 = vrot.slane %v2359, %v2363
          %v2365 = vlaneseq
          %v2366 = vshrl.u32 %v2365, 7
          %v2367 = vsub.s32 1, %v2366
          %v2368 = vrot.slane %v2359, %v2367
          %v2369 = vlaneseq
          %v2370 = vshrl.u32 %v2369, 7
          %v2371 = vsub.s32 2, %v2370
          %v2372 = vrot.slane %v2359, %v2371
          %v2384 = vunpack.c.l.b16 %v2349
          %v2385 = vunpack.c.h.b16 %v2349
          %v2386 = vunpack.c.l.b16 %v2350
          %v2387 = vunpack.c.l.b16 %v2351
          %v2388 = vunpack.c.h.b16 %v2351
          %v2389 = vunpack.c.l.b16 %v2352
          %v2390 = vunpack.c.l.b16 %v2353
          %v2391 = vunpack.c.h.b16 %v2353
          %v2392 = vunpack.c.l.b16 %v2354
          %v2393 = vunpack.c.l.b16 %v2355
          %v2394 = vunpack.c.h.b16 %v2355
          %v2395 = vunpack.c.l.b16 %v2356
          %v2396 = vpack.c.b16 %v2387, %v2384
          %v2397 = vpack.c.b16 %v2388, %v2385
          %v2398 = vpack.c.b16 %v2389, %v2386
          %v2399 = vpack.c.b16 %v2393, %v2390
          %v2400 = vpack.c.b16 %v2394, %v2391
          %v2401 = vpack.c.b16 %v2395, %v2392
          %2408 = vmatprep.subr.bf16.mxu0 0
          %2409 = vmatpush1.bf16.msra.mxu0 0
          %2410 = vmatprep.subr.bf16.mxu0 0
          %2411 = vmatpush1.bf16.msra.mxu0 0
          %2412 = vmatprep.subr.bf16.mxu0 0
          %2413 = vmatpush1.bf16.msra.mxu0 0
          %2414 = vmatprep.subr.bf16.mxu0 0
          %2415 = vmatpush1.bf16.msra.mxu0 0
          %2416 = vmatprep.subr.bf16.mxu0 0
          %2417 = vmatpush1.bf16.msra.mxu0 0
          %2418 = vmatprep.subr.bf16.mxu0 0
          %2419 = vmatpush1.bf16.msra.mxu0 0
          %2420 = vmatprep.subr.bf16.mxu0 %v2400
          %2421 = vmatpush1.bf16.msra.mxu0 %v2399
          %2422 = vmatprep.subr.bf16.mxu0 %v2397
          %2423 = vmatpush1.bf16.msra.mxu0 %v2396
          %2424 = vmatprep.subr.bf16.mxu0 0
          %2425 = vmatpush2.bf16.msra.mxu0 0
          %2426 = vmatprep.subr.bf16.mxu0 0
          %2427 = vmatpush2.bf16.msra.mxu0 0
          %2428 = vmatprep.subr.bf16.mxu0 0
          %2429 = vmatpush2.bf16.msra.mxu0 0
          %2430 = vmatprep.subr.bf16.mxu0 0
          %2431 = vmatpush2.bf16.msra.mxu0 0
          %2432 = vmatprep.subr.bf16.mxu0 0
          %2433 = vmatpush2.bf16.msra.mxu0 0
          %2434 = vmatprep.subr.bf16.mxu0 0
          %2435 = vmatpush2.bf16.msra.mxu0 0
          %2436 = vmatprep.subr.bf16.mxu0 0
          %2437 = vmatpush2.bf16.msra.mxu0 0
          %2438 = vmatprep.subr.bf16.mxu0 0
          %2439 = vmatpush2.bf16.msra.mxu0 0
          %2440 = vmatprep.mubr.bf16.mxu0 0
          %2441 = vmatmul.mubr.bf16.gmra.mxu0 %v1522
          %v2442 = vpop.f32.mrf.mxu0
          %v2443 = vadd.f32 %v2364, %v2442
          %v2444 = vpop.f32.mrf.mxu0
          %v2445 = vadd.f32 %v2368, %v2444
          %v2446 = vpop.f32.mrf.mxu0
          %v2447 = vpop.f32.mrf.mxu0
          %2448 = vdwg.mxu0
          %2449 = vmatprep.subr.bf16.mxu0 0
          %2450 = vmatpush1.bf16.msra.mxu0 0
          %2451 = vmatprep.subr.bf16.mxu0 0
          %2452 = vmatpush1.bf16.msra.mxu0 0
          %2453 = vmatprep.subr.bf16.mxu0 0
          %2454 = vmatpush1.bf16.msra.mxu0 0
          %2455 = vmatprep.subr.bf16.mxu0 0
          %2456 = vmatpush1.bf16.msra.mxu0 0
          %2457 = vmatprep.subr.bf16.mxu0 0
          %2458 = vmatpush1.bf16.msra.mxu0 0
          %2459 = vmatprep.subr.bf16.mxu0 0
          %2460 = vmatpush1.bf16.msra.mxu0 0
          %2461 = vmatprep.subr.bf16.mxu0 0
          %2462 = vmatpush1.bf16.msra.mxu0 %v2401
          %2463 = vmatprep.subr.bf16.mxu0 0
          %2464 = vmatpush1.bf16.msra.mxu0 %v2398
          %2465 = vmatprep.subr.bf16.mxu0 0
          %2466 = vmatpush2.bf16.msra.mxu0 0
          %2467 = vmatprep.subr.bf16.mxu0 0
          %2468 = vmatpush2.bf16.msra.mxu0 0
          %2469 = vmatprep.subr.bf16.mxu0 0
          %2470 = vmatpush2.bf16.msra.mxu0 0
          %2471 = vmatprep.subr.bf16.mxu0 0
          %2472 = vmatpush2.bf16.msra.mxu0 0
          %2473 = vmatprep.subr.bf16.mxu0 0
          %2474 = vmatpush2.bf16.msra.mxu0 0
          %2475 = vmatprep.subr.bf16.mxu0 0
          %2476 = vmatpush2.bf16.msra.mxu0 0
          %2477 = vmatprep.subr.bf16.mxu0 0
          %2478 = vmatpush2.bf16.msra.mxu0 0
          %2479 = vmatprep.subr.bf16.mxu0 0
          %2480 = vmatpush2.bf16.msra.mxu0 0
          %2481 = vmatprep.mubr.bf16.mxu0 0
          %2482 = vmatmul.mubr.bf16.gmra.mxu0 %v1522
          %v2483 = vpop.f32.mrf.mxu0
          %v2484 = vadd.f32 %v2372, %v2483
          %v2485 = vpop.f32.mrf.mxu0
          %v2486 = vpop.f32.mrf.mxu0
          %v2487 = vpop.f32.mrf.mxu0
          %2488 = vdwg.mxu0
          %v2489 = vmul.f32 %v2443, 0.5
          %v2490 = vpack.c.bf16 %v2489, %v2489
          %v2491 = vpack.c.bf16 %v2445, %v2445
          %v2492 = vpack.c.bf16 %v2484, %v2484
          %v2494 = vlaneseq
          %v2495 = vshrl.u32 %v2494, 7
          %v2496 = vsub.s32 0, %v2495
          %v2497 = vrot.slane %v2338, %v2496
          %2499 = vmatprep.subr.bf16.mxu0 0
          %2500 = vmatpush1.bf16.xpose.msra.mxu0 0
          %2501 = vmatprep.subr.bf16.mxu0 0
          %2502 = vmatpush1.bf16.xpose.msra.mxu0 0
          %2503 = vmatprep.subr.bf16.mxu0 0
          %2504 = vmatpush1.bf16.xpose.msra.mxu0 0
          %2505 = vmatprep.subr.bf16.mxu0 0
          %2506 = vmatpush1.bf16.xpose.msra.mxu0 0
          %2507 = vmatprep.subr.bf16.mxu0 0
          %2508 = vmatpush1.bf16.xpose.msra.mxu0 0
          %2509 = vmatprep.subr.bf16.mxu0 0
          %2510 = vmatpush1.bf16.xpose.msra.mxu0 0
          %2511 = vmatprep.subr.bf16.mxu0 0
          %2512 = vmatpush1.bf16.xpose.msra.mxu0 0
          %2513 = vmatprep.subr.bf16.mxu0 0
          %2514 = vmatpush1.bf16.xpose.msra.mxu0 %v2491
          %2515 = vmatprep.subr.bf16.mxu0 0
          %2516 = vmatpush2.bf16.xpose.msra.mxu0 0
          %2517 = vmatprep.subr.bf16.mxu0 0
          %2518 = vmatpush2.bf16.xpose.msra.mxu0 0
          %2519 = vmatprep.subr.bf16.mxu0 0
          %2520 = vmatpush2.bf16.xpose.msra.mxu0 0
          %2521 = vmatprep.subr.bf16.mxu0 0
          %2522 = vmatpush2.bf16.xpose.msra.mxu0 0
          %2523 = vmatprep.subr.bf16.mxu0 0
          %2524 = vmatpush2.bf16.xpose.msra.mxu0 0
          %2525 = vmatprep.subr.bf16.mxu0 0
          %2526 = vmatpush2.bf16.xpose.msra.mxu0 0
          %2527 = vmatprep.subr.bf16.mxu0 0
          %2528 = vmatpush2.bf16.xpose.msra.mxu0 0
          %2529 = vmatprep.subr.bf16.mxu0 0
          %2530 = vmatpush2.bf16.xpose.msra.mxu0 0
          %2531 = vmatprep.mubr.bf16.mxu0 0
          %2532 = vmatmul.mubr.bf16.gmra.mxu0 %v2490
          %v2533 = vpop.f32.mrf.mxu0
          %v2534 = vadd.f32 %v2497, %v2533
          %v2535 = vpop.f32.mrf.mxu0
          %v2536 = vpop.f32.mrf.mxu0
          %v2537 = vpop.f32.mrf.mxu0
          %2538 = vdwg.mxu0
          %vm2539 = vcmask 64512
          %v2540 = vsel %vm2539, %v2534, -inf
          %2541 = vmax.xlane.f32.xlu0 %v2540
          %v2542 = vpop.xlane.xlu0 %2541
          %v2543 = vsub.f32 %v2534, %v2542
          %v2544 = vmul.f32 %v2543, 1.442695
          %v2545 = vpow.pop %v2544
          %v2546 = vsel %vm2539, %v2545, 0.0
          %2547 = vadd.xlane.f32.xlu0 %v2546
          %v2548 = vpop.xlane.xlu0 %2547
          %v2549 = vrcp.pop %v2548
          %v2550 = vmul.f32 %v2545, %v2549
          %v2551 = vpack.c.bf16 %v2550, %v2550
          %v2553 = vsel %vm2539, %v2551, 0
          %vm2555 = vcmask 1043456
          %v2557 = vsel %vm2555, %v2492, 0
          %2559 = vmatprep.subr.bf16.mxu0 0
          %2560 = vmatpush1.bf16.msra.mxu0 0
          %2561 = vmatprep.subr.bf16.mxu0 0
          %2562 = vmatpush1.bf16.msra.mxu0 0
          %2563 = vmatprep.subr.bf16.mxu0 0
          %2564 = vmatpush1.bf16.msra.mxu0 0
          %2565 = vmatprep.subr.bf16.mxu0 0
          %2566 = vmatpush1.bf16.msra.mxu0 0
          %2567 = vmatprep.subr.bf16.mxu0 0
          %2568 = vmatpush1.bf16.msra.mxu0 0
          %2569 = vmatprep.subr.bf16.mxu0 0
          %2570 = vmatpush1.bf16.msra.mxu0 0
          %2571 = vmatprep.subr.bf16.mxu0 0
          %2572 = vmatpush1.bf16.msra.mxu0 0
          %2573 = vmatprep.subr.bf16.mxu0 0
          %2574 = vmatpush1.bf16.msra.mxu0 %v2557
          %2575 = vmatprep.subr.bf16.mxu0 0
          %2576 = vmatpush2.bf16.msra.mxu0 0
          %2577 = vmatprep.subr.bf16.mxu0 0
          %2578 = vmatpush2.bf16.msra.mxu0 0
          %2579 = vmatprep.subr.bf16.mxu0 0
          %2580 = vmatpush2.bf16.msra.mxu0 0
          %2581 = vmatprep.subr.bf16.mxu0 0
          %2582 = vmatpush2.bf16.msra.mxu0 0
          %2583 = vmatprep.subr.bf16.mxu0 0
          %2584 = vmatpush2.bf16.msra.mxu0 0
          %2585 = vmatprep.subr.bf16.mxu0 0
          %2586 = vmatpush2.bf16.msra.mxu0 0
          %2587 = vmatprep.subr.bf16.mxu0 0
          %2588 = vmatpush2.bf16.msra.mxu0 0
          %2589 = vmatprep.subr.bf16.mxu0 0
          %2590 = vmatpush2.bf16.msra.mxu0 0
          %2591 = vmatprep.mubr.bf16.mxu0 0
          %2592 = vmatmul.mubr.bf16.gmra.mxu0 %v2553
          %v2593 = vpop.f32.mrf.mxu0
          %v2594 = vadd.f32 0.0, %v2593
          %v2595 = vpop.f32.mrf.mxu0
          %v2596 = vpop.f32.mrf.mxu0
          %v2597 = vpop.f32.mrf.mxu0
          %2598 = vdwg.mxu0
          %v2599 = vpack.c.bf16 %v2594, %v2594
          %s2600 = smul.u32 %s2340, 16
          %s2601 = smul.addr %s2600, 4
          %s2602 = scalar_lea.vmem %s45, %s2601
          %v2603 = vld [vmem:[%s2602] sm:$0xf]
          %v2604 = vld [vmem:[%s2602 + $0x4] sm:$0xf]
          %v2605 = vld [vmem:[%s2602 + $0x8] sm:$0xf]
          %v2606 = vld [vmem:[%s2602 + $0xc] sm:$0xf]
          %v2607 = vld [vmem:[%s2602 + $0x10] sm:$0xf]
          %v2608 = vld [vmem:[%s2602 + $0x14] sm:$0xf]
          %v2609 = vld [vmem:[%s2602 + $0x18] sm:$0xf]
          %v2610 = vld [vmem:[%s2602 + $0x1c] sm:$0xf]
          %v2611 = vld [vmem:[%s2602 + $0x20] sm:$0xf]
          %v2612 = vld [vmem:[%s2602 + $0x24] sm:$0xf]
          %v2613 = vld [vmem:[%s2602 + $0x28] sm:$0xf]
          %v2614 = vld [vmem:[%s2602 + $0x2c] sm:$0xf]
          %v2615 = vld [vmem:[%s2602 + $0x30] sm:$0xf]
          %v2616 = vld [vmem:[%s2602 + $0x34] sm:$0xf]
          %v2617 = vld [vmem:[%s2602 + $0x38] sm:$0xf]
          %v2618 = vld [vmem:[%s2602 + $0x3c] sm:$0xf]
          %v2635 = vunpack.c.l.b16 %v2603
          %v2636 = vunpack.c.l.b16 %v2604
          %v2637 = vunpack.c.l.b16 %v2605
          %v2638 = vunpack.c.l.b16 %v2606
          %v2639 = vunpack.c.l.b16 %v2607
          %v2640 = vunpack.c.l.b16 %v2608
          %v2641 = vunpack.c.l.b16 %v2609
          %v2642 = vunpack.c.l.b16 %v2610
          %v2643 = vunpack.c.l.b16 %v2611
          %v2644 = vunpack.c.l.b16 %v2612
          %v2645 = vunpack.c.l.b16 %v2613
          %v2646 = vunpack.c.l.b16 %v2614
          %v2647 = vunpack.c.l.b16 %v2615
          %v2648 = vunpack.c.l.b16 %v2616
          %v2649 = vunpack.c.l.b16 %v2617
          %v2650 = vunpack.c.l.b16 %v2618
          %v2651 = vpack.c.b16 %v2636, %v2635
          %v2652 = vpack.c.b16 %v2638, %v2637
          %v2653 = vpack.c.b16 %v2640, %v2639
          %v2654 = vpack.c.b16 %v2642, %v2641
          %v2655 = vpack.c.b16 %v2644, %v2643
          %v2656 = vpack.c.b16 %v2646, %v2645
          %v2657 = vpack.c.b16 %v2648, %v2647
          %v2658 = vpack.c.b16 %v2650, %v2649
          %2667 = vmatprep.subr.bf16.mxu0 0
          %2668 = vmatpush1.bf16.msra.mxu0 %v2658
          %2669 = vmatprep.subr.bf16.mxu0 0
          %2670 = vmatpush1.bf16.msra.mxu0 %v2657
          %2671 = vmatprep.subr.bf16.mxu0 0
          %2672 = vmatpush1.bf16.msra.mxu0 %v2656
          %2673 = vmatprep.subr.bf16.mxu0 0
          %2674 = vmatpush1.bf16.msra.mxu0 %v2655
          %2675 = vmatprep.subr.bf16.mxu0 0
          %2676 = vmatpush1.bf16.msra.mxu0 %v2654
          %2677 = vmatprep.subr.bf16.mxu0 0
          %2678 = vmatpush1.bf16.msra.mxu0 %v2653
          %2679 = vmatprep.subr.bf16.mxu0 0
          %2680 = vmatpush1.bf16.msra.mxu0 %v2652
          %2681 = vmatprep.subr.bf16.mxu0 0
          %2682 = vmatpush1.bf16.msra.mxu0 %v2651
          %2683 = vmatprep.subr.bf16.mxu0 0
          %2684 = vmatpush2.bf16.msra.mxu0 0
          %2685 = vmatprep.subr.bf16.mxu0 0
          %2686 = vmatpush2.bf16.msra.mxu0 0
          %2687 = vmatprep.subr.bf16.mxu0 0
          %2688 = vmatpush2.bf16.msra.mxu0 0
          %2689 = vmatprep.subr.bf16.mxu0 0
          %2690 = vmatpush2.bf16.msra.mxu0 0
          %2691 = vmatprep.subr.bf16.mxu0 0
          %2692 = vmatpush2.bf16.msra.mxu0 0
          %2693 = vmatprep.subr.bf16.mxu0 0
          %2694 = vmatpush2.bf16.msra.mxu0 0
          %2695 = vmatprep.subr.bf16.mxu0 0
          %2696 = vmatpush2.bf16.msra.mxu0 0
          %2697 = vmatprep.subr.bf16.mxu0 0
          %2698 = vmatpush2.bf16.msra.mxu0 0
          %2699 = vmatprep.mubr.bf16.mxu0 0
          %2700 = vmatmul.mubr.bf16.gmra.mxu0 %v2599
          %v2701 = vpop.f32.mrf.mxu0
          %v2702 = vadd.f32 0.0, %v2701
          %v2703 = vpop.f32.mrf.mxu0
          %v2704 = vpop.f32.mrf.mxu0
          %v2705 = vpop.f32.mrf.mxu0
          %2706 = vdwg.mxu0
          %v2707 = vadd.f32 %v2345, %v2702
        $region257: #{tpu_custom_call.1} parent=163 // loop_footer
          %s2344 = sadd.s32 1, %s2340
        $region258: #{tpu_custom_call.1} parent=163 // loop_footer_branch
          %2339 = sbr.rel target = $region254
        $region259: #{tpu_custom_call.1} parent=163 // loop_exit
          _
        %v2708 = vld [vmem:[#allocation26] sm:$0x1]
        %v2710 = vlaneseq
        %v2711 = vshrl.u32 %v2710, 7
        %v2712 = vsub.s32 0, %v2711
        %v2713 = vrot.slane %v2708, %v2712
        %v2715 = vadd.f32 %v2345, %v2713
        %v2716 = vsel %vm2229, %v1502, 0.0
        %v2717 = vrot.slane %v2716, 4
        %v2718 = vadd.f32 %v2716, %v2717
        %v2719 = vrot.slane %v2718, 2
        %v2720 = vadd.f32 %v2718, %v2719
        %v2721 = vrot.slane %v2720, 1
        %v2722 = vadd.f32 %v2720, %v2721
        %2724 = vset.pattern.permute.xlu0 0
        %2725 = vperm.xlu0 %2724, %v1502
        %v2726 = vpop.permute.xlu0 %2725
        %v2728 = vmul.f32 %v2715, %v2726
        %v2729 = vsel %vm1520, %v2728, 0.0
        %v2730 = vrot.slane %v2729, 4
        %v2731 = vadd.f32 %v2729, %v2730
        %v2732 = vrot.slane %v2731, 2
        %v2733 = vadd.f32 %v2731, %v2732
        %v2734 = vrot.slane %v2733, 1
        %v2735 = vadd.f32 %v2733, %v2734
        %v2736 = vadd.f32 %v2722, 1e-08
        %2738 = vset.pattern.permute.xlu0 0
        %2739 = vperm.xlu0 %2738, %v2736
        %v2740 = vpop.permute.xlu0 %2739
        %v2742 = vrcp.pop %v2740
        %v2743 = vmul.f32 %v2735, %v2742
        %v2744 = vsel %vm1520, %v2715, 0.0
        %v2745 = vrot.slane %v2744, 4
        %v2746 = vadd.f32 %v2744, %v2745
        %v2747 = vrot.slane %v2746, 2
        %v2748 = vadd.f32 %v2746, %v2747
        %v2749 = vrot.slane %v2748, 1
        %v2750 = vadd.f32 %v2748, %v2749
        %v2751 = vrcp.pop 8.0
        %v2752 = vmul.f32 %v2750, %v2751
        %v2753 = vld [vmem:[#allocation2] sm:$0x1]
        %vm2754 = vcmp.gt.f32.partialorder %v2753, 0.0
        %v2755 = vsel %vm2754, 1, 0
        %2756 = vset.pattern.permute.xlu0 0
        %2757 = vperm.xlu0 %2756, %v2755
        %v2758 = vpop.permute.xlu0 %2757
        %v2759 = vlaneseq
        %v2760 = vshrl.u32 %v2759, 7
        %v2761 = vsub.s32 0, %v2760
        %v2762 = vrot.slane %v2758, %v2761
        %vm2763 = vcmp.eq.s32.totalorder %v2762, 1
        %v2764 = vsel %vm2763, %v2743, %v2752
        %v2765 = vpack.c.bf16 %v2764, %v2764
        %v2766 = vld [vmem:[#allocation27] sm:$0xf]
        %v2767 = vld [vmem:[#allocation27 + $0x4] sm:$0xf]
        %v2768 = vld [vmem:[#allocation27 + $0x8] sm:$0xf]
        %v2769 = vld [vmem:[#allocation27 + $0xc] sm:$0xf]
        %v2770 = vld [vmem:[#allocation29] sm:$0x1]
        %v2775 = vunpack.c.l.b16 %v2766
        %v2776 = vunpack.c.l.b16 %v2767
        %v2777 = vunpack.c.l.b16 %v2768
        %v2778 = vunpack.c.l.b16 %v2769
        %v2779 = vpack.c.b16 %v2776, %v2775
        %v2780 = vpack.c.b16 %v2778, %v2777
        %v2784 = vsel %vm1520, %v2765, 0
        %2786 = vmatprep.subr.bf16.mxu0 0
        %2787 = vmatpush1.bf16.msra.mxu0 0
        %2788 = vmatprep.subr.bf16.mxu0 0
        %2789 = vmatpush1.bf16.msra.mxu0 0
        %2790 = vmatprep.subr.bf16.mxu0 0
        %2791 = vmatpush1.bf16.msra.mxu0 0
        %2792 = vmatprep.subr.bf16.mxu0 0
        %2793 = vmatpush1.bf16.msra.mxu0 0
        %2794 = vmatprep.subr.bf16.mxu0 0
        %2795 = vmatpush1.bf16.msra.mxu0 0
        %2796 = vmatprep.subr.bf16.mxu0 0
        %2797 = vmatpush1.bf16.msra.mxu0 0
        %2798 = vmatprep.subr.bf16.mxu0 0
        %2799 = vmatpush1.bf16.msra.mxu0 %v2780
        %2800 = vmatprep.subr.bf16.mxu0 0
        %2801 = vmatpush1.bf16.msra.mxu0 %v2779
        %2802 = vmatprep.subr.bf16.mxu0 0
        %2803 = vmatpush2.bf16.msra.mxu0 0
        %2804 = vmatprep.subr.bf16.mxu0 0
        %2805 = vmatpush2.bf16.msra.mxu0 0
        %2806 = vmatprep.subr.bf16.mxu0 0
        %2807 = vmatpush2.bf16.msra.mxu0 0
        %2808 = vmatprep.subr.bf16.mxu0 0
        %2809 = vmatpush2.bf16.msra.mxu0 0
        %2810 = vmatprep.subr.bf16.mxu0 0
        %2811 = vmatpush2.bf16.msra.mxu0 0
        %2812 = vmatprep.subr.bf16.mxu0 0
        %2813 = vmatpush2.bf16.msra.mxu0 0
        %2814 = vmatprep.subr.bf16.mxu0 0
        %2815 = vmatpush2.bf16.msra.mxu0 0
        %2816 = vmatprep.subr.bf16.mxu0 0
        %2817 = vmatpush2.bf16.msra.mxu0 0
        %2818 = vmatprep.mubr.bf16.mxu0 0
        %2819 = vmatmul.mubr.bf16.gmra.mxu0 %v2784
        %v2820 = vpop.f32.mrf.mxu0
        %v2821 = vadd.f32 %v2770, %v2820
        %v2822 = vpop.f32.mrf.mxu0
        %v2823 = vpop.f32.mrf.mxu0
        %v2824 = vpop.f32.mrf.mxu0
        %2825 = vdwg.mxu0
        %v2826 = vtanh.pop %v2821
        %v2827 = vpack.c.bf16 %v1564, %v1564
        %v2828 = vld [vmem:[%s53] sm:$0xff]
        %v2829 = vld [vmem:[%s53 + $0x8] sm:$0xf]
        %v2830 = vld [vmem:[%s53 + $0xc] sm:$0xff]
        %v2831 = vld [vmem:[%s53 + $0x14] sm:$0xf]
        %v2832 = vld [vmem:[%s53 + $0x18] sm:$0xff]
        %v2833 = vld [vmem:[%s53 + $0x20] sm:$0xf]
        %v2834 = vld [vmem:[%s53 + $0x24] sm:$0xff]
        %v2835 = vld [vmem:[%s53 + $0x2c] sm:$0xf]
        %v2836 = vld [vmem:[%s53 + $0x30] sm:$0xff]
        %v2837 = vld [vmem:[%s53 + $0x38] sm:$0xf]
        %v2838 = vld [vmem:[%s53 + $0x3c] sm:$0xff]
        %v2839 = vld [vmem:[%s53 + $0x44] sm:$0xf]
        %v2840 = vld [vmem:[%s53 + $0x48] sm:$0xff]
        %v2841 = vld [vmem:[%s53 + $0x50] sm:$0xf]
        %v2842 = vld [vmem:[%s53 + $0x54] sm:$0xff]
        %v2843 = vld [vmem:[%s53 + $0x5c] sm:$0xf]
        %v2844 = vld [vmem:[%s53 + $0x60] sm:$0xff]
        %v2845 = vld [vmem:[%s53 + $0x68] sm:$0xf]
        %v2846 = vld [vmem:[%s53 + $0x6c] sm:$0xff]
        %v2847 = vld [vmem:[%s53 + $0x74] sm:$0xf]
        %v2848 = vld [vmem:[%s53 + $0x78] sm:$0xff]
        %v2849 = vld [vmem:[%s53 + $0x80] sm:$0xf]
        %v2850 = vld [vmem:[%s53 + $0x84] sm:$0xff]
        %v2851 = vld [vmem:[%s53 + $0x8c] sm:$0xf]
        %v2852 = vld [vmem:[%s53 + $0x90] sm:$0xff]
        %v2853 = vld [vmem:[%s53 + $0x98] sm:$0xf]
        %v2854 = vld [vmem:[%s53 + $0x9c] sm:$0xff]
        %v2855 = vld [vmem:[%s53 + $0xa4] sm:$0xf]
        %v2856 = vld [vmem:[%s53 + $0xa8] sm:$0xff]
        %v2857 = vld [vmem:[%s53 + $0xb0] sm:$0xf]
        %v2858 = vld [vmem:[%s53 + $0xb4] sm:$0xff]
        %v2859 = vld [vmem:[%s53 + $0xbc] sm:$0xf]
        %v2860 = vpack.c.bf16 %v1641, %v1641
        %v2861 = vld [vmem:[%s55] sm:$0xff]
        %v2862 = vld [vmem:[%s55 + $0x8] sm:$0xf]
        %v2863 = vld [vmem:[%s55 + $0xc] sm:$0xff]
        %v2864 = vld [vmem:[%s55 + $0x14] sm:$0xf]
        %v2865 = vld [vmem:[%s55 + $0x18] sm:$0xff]
        %v2866 = vld [vmem:[%s55 + $0x20] sm:$0xf]
        %v2867 = vld [vmem:[%s55 + $0x24] sm:$0xff]
        %v2868 = vld [vmem:[%s55 + $0x2c] sm:$0xf]
        %v2869 = vld [vmem:[%s55 + $0x30] sm:$0xff]
        %v2870 = vld [vmem:[%s55 + $0x38] sm:$0xf]
        %v2871 = vld [vmem:[%s55 + $0x3c] sm:$0xff]
        %v2872 = vld [vmem:[%s55 + $0x44] sm:$0xf]
        %v2873 = vld [vmem:[%s55 + $0x48] sm:$0xff]
        %v2874 = vld [vmem:[%s55 + $0x50] sm:$0xf]
        %v2875 = vld [vmem:[%s55 + $0x54] sm:$0xff]
        %v2876 = vld [vmem:[%s55 + $0x5c] sm:$0xf]
        %v2877 = vld [vmem:[%s55 + $0x60] sm:$0xff]
        %v2878 = vld [vmem:[%s55 + $0x68] sm:$0xf]
        %v2879 = vld [vmem:[%s55 + $0x6c] sm:$0xff]
        %v2880 = vld [vmem:[%s55 + $0x74] sm:$0xf]
        %v2881 = vld [vmem:[%s55 + $0x78] sm:$0xff]
        %v2882 = vld [vmem:[%s55 + $0x80] sm:$0xf]
        %v2883 = vld [vmem:[%s55 + $0x84] sm:$0xff]
        %v2884 = vld [vmem:[%s55 + $0x8c] sm:$0xf]
        %v2885 = vld [vmem:[%s55 + $0x90] sm:$0xff]
        %v2886 = vld [vmem:[%s55 + $0x98] sm:$0xf]
        %v2887 = vld [vmem:[%s55 + $0x9c] sm:$0xff]
        %v2888 = vld [vmem:[%s55 + $0xa4] sm:$0xf]
        %v2889 = vld [vmem:[%s55 + $0xa8] sm:$0xff]
        %v2890 = vld [vmem:[%s55 + $0xb0] sm:$0xf]
        %v2891 = vld [vmem:[%s55 + $0xb4] sm:$0xff]
        %v2892 = vld [vmem:[%s55 + $0xbc] sm:$0xf]
        %v2925 = vunpack.c.l.b16 %v2861
        %v2926 = vunpack.c.h.b16 %v2861
        %v2927 = vunpack.c.l.b16 %v2862
        %v2928 = vunpack.c.l.b16 %v2863
        %v2929 = vunpack.c.h.b16 %v2863
        %v2930 = vunpack.c.l.b16 %v2864
        %v2931 = vunpack.c.l.b16 %v2865
        %v2932 = vunpack.c.h.b16 %v2865
        %v2933 = vunpack.c.l.b16 %v2866
        %v2934 = vunpack.c.l.b16 %v2867
        %v2935 = vunpack.c.h.b16 %v2867
        %v2936 = vunpack.c.l.b16 %v2868
        %v2937 = vunpack.c.l.b16 %v2869
        %v2938 = vunpack.c.h.b16 %v2869
        %v2939 = vunpack.c.l.b16 %v2870
        %v2940 = vunpack.c.l.b16 %v2871
        %v2941 = vunpack.c.h.b16 %v2871
        %v2942 = vunpack.c.l.b16 %v2872
        %v2943 = vunpack.c.l.b16 %v2873
        %v2944 = vunpack.c.h.b16 %v2873
        %v2945 = vunpack.c.l.b16 %v2874
        %v2946 = vunpack.c.l.b16 %v2875
        %v2947 = vunpack.c.h.b16 %v2875
        %v2948 = vunpack.c.l.b16 %v2876
        %v2949 = vunpack.c.l.b16 %v2877
        %v2950 = vunpack.c.h.b16 %v2877
        %v2951 = vunpack.c.l.b16 %v2878
        %v2952 = vunpack.c.l.b16 %v2879
        %v2953 = vunpack.c.h.b16 %v2879
        %v2954 = vunpack.c.l.b16 %v2880
        %v2955 = vunpack.c.l.b16 %v2881
        %v2956 = vunpack.c.h.b16 %v2881
        %v2957 = vunpack.c.l.b16 %v2882
        %v2958 = vunpack.c.l.b16 %v2883
        %v2959 = vunpack.c.h.b16 %v2883
        %v2960 = vunpack.c.l.b16 %v2884
        %v2961 = vunpack.c.l.b16 %v2885
        %v2962 = vunpack.c.h.b16 %v2885
        %v2963 = vunpack.c.l.b16 %v2886
        %v2964 = vunpack.c.l.b16 %v2887
        %v2965 = vunpack.c.h.b16 %v2887
        %v2966 = vunpack.c.l.b16 %v2888
        %v2967 = vunpack.c.l.b16 %v2889
        %v2968 = vunpack.c.h.b16 %v2889
        %v2969 = vunpack.c.l.b16 %v2890
        %v2970 = vunpack.c.l.b16 %v2891
        %v2971 = vunpack.c.h.b16 %v2891
        %v2972 = vunpack.c.l.b16 %v2892
        %v2973 = vpack.c.b16 %v2928, %v2925
        %v2974 = vpack.c.b16 %v2929, %v2926
        %v2975 = vpack.c.b16 %v2930, %v2927
        %v2976 = vpack.c.b16 %v2934, %v2931
        %v2977 = vpack.c.b16 %v2935, %v2932
        %v2978 = vpack.c.b16 %v2936, %v2933
        %v2979 = vpack.c.b16 %v2940, %v2937
        %v2980 = vpack.c.b16 %v2941, %v2938
        %v2981 = vpack.c.b16 %v2942, %v2939
        %v2982 = vpack.c.b16 %v2946, %v2943
        %v2983 = vpack.c.b16 %v2947, %v2944
        %v2984 = vpack.c.b16 %v2948, %v2945
        %v2985 = vpack.c.b16 %v2952, %v2949
        %v2986 = vpack.c.b16 %v2953, %v2950
        %v2987 = vpack.c.b16 %v2954, %v2951
        %v2988 = vpack.c.b16 %v2958, %v2955
        %v2989 = vpack.c.b16 %v2959, %v2956
        %v2990 = vpack.c.b16 %v2960, %v2957
        %v2991 = vpack.c.b16 %v2964, %v2961
        %v2992 = vpack.c.b16 %v2965, %v2962
        %v2993 = vpack.c.b16 %v2966, %v2963
        %v2994 = vpack.c.b16 %v2970, %v2967
        %v2995 = vpack.c.b16 %v2971, %v2968
        %v2996 = vpack.c.b16 %v2972, %v2969
        %3021 = vmatprep.subr.bf16.mxu0 %v2995
        %3022 = vmatpush1.bf16.msra.mxu0 %v2994
        %3023 = vmatprep.subr.bf16.mxu0 %v2992
        %3024 = vmatpush1.bf16.msra.mxu0 %v2991
        %3025 = vmatprep.subr.bf16.mxu0 %v2989
        %3026 = vmatpush1.bf16.msra.mxu0 %v2988
        %3027 = vmatprep.subr.bf16.mxu0 %v2986
        %3028 = vmatpush1.bf16.msra.mxu0 %v2985
        %3029 = vmatprep.subr.bf16.mxu0 %v2983
        %3030 = vmatpush1.bf16.msra.mxu0 %v2982
        %3031 = vmatprep.subr.bf16.mxu0 %v2980
        %3032 = vmatpush1.bf16.msra.mxu0 %v2979
        %3033 = vmatprep.subr.bf16.mxu0 %v2977
        %3034 = vmatpush1.bf16.msra.mxu0 %v2976
        %3035 = vmatprep.subr.bf16.mxu0 %v2974
        %3036 = vmatpush1.bf16.msra.mxu0 %v2973
        %3037 = vmatprep.subr.bf16.mxu0 0
        %3038 = vmatpush2.bf16.msra.mxu0 0
        %3039 = vmatprep.subr.bf16.mxu0 0
        %3040 = vmatpush2.bf16.msra.mxu0 0
        %3041 = vmatprep.subr.bf16.mxu0 0
        %3042 = vmatpush2.bf16.msra.mxu0 0
        %3043 = vmatprep.subr.bf16.mxu0 0
        %3044 = vmatpush2.bf16.msra.mxu0 0
        %3045 = vmatprep.subr.bf16.mxu0 0
        %3046 = vmatpush2.bf16.msra.mxu0 0
        %3047 = vmatprep.subr.bf16.mxu0 0
        %3048 = vmatpush2.bf16.msra.mxu0 0
        %3049 = vmatprep.subr.bf16.mxu0 0
        %3050 = vmatpush2.bf16.msra.mxu0 0
        %3051 = vmatprep.subr.bf16.mxu0 0
        %3052 = vmatpush2.bf16.msra.mxu0 0
        %3053 = vmatprep.mubr.bf16.mxu0 0
        %3054 = vmatmul.mubr.bf16.gmra.mxu0 %v2860
        %v3055 = vpop.f32.mrf.mxu0
        %v3056 = vadd.f32 0.0, %v3055
        %v3057 = vpop.f32.mrf.mxu0
        %v3058 = vadd.f32 0.0, %v3057
        %v3059 = vpop.f32.mrf.mxu0
        %v3060 = vpop.f32.mrf.mxu0
        %3061 = vdwg.mxu0
        %3062 = vmatprep.subr.bf16.mxu0 0
        %3063 = vmatpush1.bf16.msra.mxu0 %v2996
        %3064 = vmatprep.subr.bf16.mxu0 0
        %3065 = vmatpush1.bf16.msra.mxu0 %v2993
        %3066 = vmatprep.subr.bf16.mxu0 0
        %3067 = vmatpush1.bf16.msra.mxu0 %v2990
        %3068 = vmatprep.subr.bf16.mxu0 0
        %3069 = vmatpush1.bf16.msra.mxu0 %v2987
        %3070 = vmatprep.subr.bf16.mxu0 0
        %3071 = vmatpush1.bf16.msra.mxu0 %v2984
        %3072 = vmatprep.subr.bf16.mxu0 0
        %3073 = vmatpush1.bf16.msra.mxu0 %v2981
        %3074 = vmatprep.subr.bf16.mxu0 0
        %3075 = vmatpush1.bf16.msra.mxu0 %v2978
        %3076 = vmatprep.subr.bf16.mxu0 0
        %3077 = vmatpush1.bf16.msra.mxu0 %v2975
        %3078 = vmatprep.subr.bf16.mxu0 0
        %3079 = vmatpush2.bf16.msra.mxu0 0
        %3080 = vmatprep.subr.bf16.mxu0 0
        %3081 = vmatpush2.bf16.msra.mxu0 0
        %3082 = vmatprep.subr.bf16.mxu0 0
        %3083 = vmatpush2.bf16.msra.mxu0 0
        %3084 = vmatprep.subr.bf16.mxu0 0
        %3085 = vmatpush2.bf16.msra.mxu0 0
        %3086 = vmatprep.subr.bf16.mxu0 0
        %3087 = vmatpush2.bf16.msra.mxu0 0
        %3088 = vmatprep.subr.bf16.mxu0 0
        %3089 = vmatpush2.bf16.msra.mxu0 0
        %3090 = vmatprep.subr.bf16.mxu0 0
        %3091 = vmatpush2.bf16.msra.mxu0 0
        %3092 = vmatprep.subr.bf16.mxu0 0
        %3093 = vmatpush2.bf16.msra.mxu0 0
        %3094 = vmatprep.mubr.bf16.mxu0 0
        %3095 = vmatmul.mubr.bf16.gmra.mxu0 %v2860
        %v3096 = vpop.f32.mrf.mxu0
        %v3097 = vadd.f32 0.0, %v3096
        %v3098 = vpop.f32.mrf.mxu0
        %v3099 = vpop.f32.mrf.mxu0
        %v3100 = vpop.f32.mrf.mxu0
        %3101 = vdwg.mxu0
        %v3134 = vunpack.c.l.b16 %v2828
        %v3135 = vunpack.c.h.b16 %v2828
        %v3136 = vunpack.c.l.b16 %v2829
        %v3137 = vunpack.c.l.b16 %v2830
        %v3138 = vunpack.c.h.b16 %v2830
        %v3139 = vunpack.c.l.b16 %v2831
        %v3140 = vunpack.c.l.b16 %v2832
        %v3141 = vunpack.c.h.b16 %v2832
        %v3142 = vunpack.c.l.b16 %v2833
        %v3143 = vunpack.c.l.b16 %v2834
        %v3144 = vunpack.c.h.b16 %v2834
        %v3145 = vunpack.c.l.b16 %v2835
        %v3146 = vunpack.c.l.b16 %v2836
        %v3147 = vunpack.c.h.b16 %v2836
        %v3148 = vunpack.c.l.b16 %v2837
        %v3149 = vunpack.c.l.b16 %v2838
        %v3150 = vunpack.c.h.b16 %v2838
        %v3151 = vunpack.c.l.b16 %v2839
        %v3152 = vunpack.c.l.b16 %v2840
        %v3153 = vunpack.c.h.b16 %v2840
        %v3154 = vunpack.c.l.b16 %v2841
        %v3155 = vunpack.c.l.b16 %v2842
        %v3156 = vunpack.c.h.b16 %v2842
        %v3157 = vunpack.c.l.b16 %v2843
        %v3158 = vunpack.c.l.b16 %v2844
        %v3159 = vunpack.c.h.b16 %v2844
        %v3160 = vunpack.c.l.b16 %v2845
        %v3161 = vunpack.c.l.b16 %v2846
        %v3162 = vunpack.c.h.b16 %v2846
        %v3163 = vunpack.c.l.b16 %v2847
        %v3164 = vunpack.c.l.b16 %v2848
        %v3165 = vunpack.c.h.b16 %v2848
        %v3166 = vunpack.c.l.b16 %v2849
        %v3167 = vunpack.c.l.b16 %v2850
        %v3168 = vunpack.c.h.b16 %v2850
        %v3169 = vunpack.c.l.b16 %v2851
        %v3170 = vunpack.c.l.b16 %v2852
        %v3171 = vunpack.c.h.b16 %v2852
        %v3172 = vunpack.c.l.b16 %v2853
        %v3173 = vunpack.c.l.b16 %v2854
        %v3174 = vunpack.c.h.b16 %v2854
        %v3175 = vunpack.c.l.b16 %v2855
        %v3176 = vunpack.c.l.b16 %v2856
        %v3177 = vunpack.c.h.b16 %v2856
        %v3178 = vunpack.c.l.b16 %v2857
        %v3179 = vunpack.c.l.b16 %v2858
        %v3180 = vunpack.c.h.b16 %v2858
        %v3181 = vunpack.c.l.b16 %v2859
        %v3182 = vpack.c.b16 %v3137, %v3134
        %v3183 = vpack.c.b16 %v3138, %v3135
        %v3184 = vpack.c.b16 %v3139, %v3136
        %v3185 = vpack.c.b16 %v3143, %v3140
        %v3186 = vpack.c.b16 %v3144, %v3141
        %v3187 = vpack.c.b16 %v3145, %v3142
        %v3188 = vpack.c.b16 %v3149, %v3146
        %v3189 = vpack.c.b16 %v3150, %v3147
        %v3190 = vpack.c.b16 %v3151, %v3148
        %v3191 = vpack.c.b16 %v3155, %v3152
        %v3192 = vpack.c.b16 %v3156, %v3153
        %v3193 = vpack.c.b16 %v3157, %v3154
        %v3194 = vpack.c.b16 %v3161, %v3158
        %v3195 = vpack.c.b16 %v3162, %v3159
        %v3196 = vpack.c.b16 %v3163, %v3160
        %v3197 = vpack.c.b16 %v3167, %v3164
        %v3198 = vpack.c.b16 %v3168, %v3165
        %v3199 = vpack.c.b16 %v3169, %v3166
        %v3200 = vpack.c.b16 %v3173, %v3170
        %v3201 = vpack.c.b16 %v3174, %v3171
        %v3202 = vpack.c.b16 %v3175, %v3172
        %v3203 = vpack.c.b16 %v3179, %v3176
        %v3204 = vpack.c.b16 %v3180, %v3177
        %v3205 = vpack.c.b16 %v3181, %v3178
        %3230 = vmatprep.subr.bf16.mxu0 %v3204
        %3231 = vmatpush1.bf16.msra.mxu0 %v3203
        %3232 = vmatprep.subr.bf16.mxu0 %v3201
        %3233 = vmatpush1.bf16.msra.mxu0 %v3200
        %3234 = vmatprep.subr.bf16.mxu0 %v3198
        %3235 = vmatpush1.bf16.msra.mxu0 %v3197
        %3236 = vmatprep.subr.bf16.mxu0 %v3195
        %3237 = vmatpush1.bf16.msra.mxu0 %v3194
        %3238 = vmatprep.subr.bf16.mxu0 %v3192
        %3239 = vmatpush1.bf16.msra.mxu0 %v3191
        %3240 = vmatprep.subr.bf16.mxu0 %v3189
        %3241 = vmatpush1.bf16.msra.mxu0 %v3188
        %3242 = vmatprep.subr.bf16.mxu0 %v3186
        %3243 = vmatpush1.bf16.msra.mxu0 %v3185
        %3244 = vmatprep.subr.bf16.mxu0 %v3183
        %3245 = vmatpush1.bf16.msra.mxu0 %v3182
        %3246 = vmatprep.subr.bf16.mxu0 0
        %3247 = vmatpush2.bf16.msra.mxu0 0
        %3248 = vmatprep.subr.bf16.mxu0 0
        %3249 = vmatpush2.bf16.msra.mxu0 0
        %3250 = vmatprep.subr.bf16.mxu0 0
        %3251 = vmatpush2.bf16.msra.mxu0 0
        %3252 = vmatprep.subr.bf16.mxu0 0
        %3253 = vmatpush2.bf16.msra.mxu0 0
        %3254 = vmatprep.subr.bf16.mxu0 0
        %3255 = vmatpush2.bf16.msra.mxu0 0
        %3256 = vmatprep.subr.bf16.mxu0 0
        %3257 = vmatpush2.bf16.msra.mxu0 0
        %3258 = vmatprep.subr.bf16.mxu0 0
        %3259 = vmatpush2.bf16.msra.mxu0 0
        %3260 = vmatprep.subr.bf16.mxu0 0
        %3261 = vmatpush2.bf16.msra.mxu0 0
        %3262 = vmatprep.mubr.bf16.mxu0 0
        %3263 = vmatmul.mubr.bf16.gmra.mxu0 %v2827
        %v3264 = vpop.f32.mrf.mxu0
        %v3265 = vadd.f32 %v3056, %v3264
        %v3266 = vpop.f32.mrf.mxu0
        %v3267 = vadd.f32 %v3058, %v3266
        %v3268 = vpop.f32.mrf.mxu0
        %v3269 = vpop.f32.mrf.mxu0
        %3270 = vdwg.mxu0
        %3271 = vmatprep.subr.bf16.mxu0 0
        %3272 = vmatpush1.bf16.msra.mxu0 %v3205
        %3273 = vmatprep.subr.bf16.mxu0 0
        %3274 = vmatpush1.bf16.msra.mxu0 %v3202
        %3275 = vmatprep.subr.bf16.mxu0 0
        %3276 = vmatpush1.bf16.msra.mxu0 %v3199
        %3277 = vmatprep.subr.bf16.mxu0 0
        %3278 = vmatpush1.bf16.msra.mxu0 %v3196
        %3279 = vmatprep.subr.bf16.mxu0 0
        %3280 = vmatpush1.bf16.msra.mxu0 %v3193
        %3281 = vmatprep.subr.bf16.mxu0 0
        %3282 = vmatpush1.bf16.msra.mxu0 %v3190
        %3283 = vmatprep.subr.bf16.mxu0 0
        %3284 = vmatpush1.bf16.msra.mxu0 %v3187
        %3285 = vmatprep.subr.bf16.mxu0 0
        %3286 = vmatpush1.bf16.msra.mxu0 %v3184
        %3287 = vmatprep.subr.bf16.mxu0 0
        %3288 = vmatpush2.bf16.msra.mxu0 0
        %3289 = vmatprep.subr.bf16.mxu0 0
        %3290 = vmatpush2.bf16.msra.mxu0 0
        %3291 = vmatprep.subr.bf16.mxu0 0
        %3292 = vmatpush2.bf16.msra.mxu0 0
        %3293 = vmatprep.subr.bf16.mxu0 0
        %3294 = vmatpush2.bf16.msra.mxu0 0
        %3295 = vmatprep.subr.bf16.mxu0 0
        %3296 = vmatpush2.bf16.msra.mxu0 0
        %3297 = vmatprep.subr.bf16.mxu0 0
        %3298 = vmatpush2.bf16.msra.mxu0 0
        %3299 = vmatprep.subr.bf16.mxu0 0
        %3300 = vmatpush2.bf16.msra.mxu0 0
        %3301 = vmatprep.subr.bf16.mxu0 0
        %3302 = vmatpush2.bf16.msra.mxu0 0
        %3303 = vmatprep.mubr.bf16.mxu0 0
        %3304 = vmatmul.mubr.bf16.gmra.mxu0 %v2827
        %v3305 = vpop.f32.mrf.mxu0
        %v3306 = vadd.f32 %v3097, %v3305
        %v3307 = vpop.f32.mrf.mxu0
        %v3308 = vpop.f32.mrf.mxu0
        %v3309 = vpop.f32.mrf.mxu0
        %3310 = vdwg.mxu0
        %v3311 = vpack.c.bf16 %v2222, %v2222
        %v3312 = vld [vmem:[#allocation30] sm:$0xff]
        %v3313 = vld [vmem:[#allocation30 + $0x8] sm:$0xf]
        %v3314 = vld [vmem:[#allocation30 + $0xc] sm:$0xff]
        %v3315 = vld [vmem:[#allocation30 + $0x14] sm:$0xf]
        %v3316 = vld [vmem:[#allocation30 + $0x18] sm:$0xff]
        %v3317 = vld [vmem:[#allocation30 + $0x20] sm:$0xf]
        %v3318 = vld [vmem:[#allocation30 + $0x24] sm:$0xff]
        %v3319 = vld [vmem:[#allocation30 + $0x2c] sm:$0xf]
        %v3320 = vld [vmem:[#allocation30 + $0x30] sm:$0xff]
        %v3321 = vld [vmem:[#allocation30 + $0x38] sm:$0xf]
        %v3322 = vld [vmem:[#allocation30 + $0x3c] sm:$0xff]
        %v3323 = vld [vmem:[#allocation30 + $0x44] sm:$0xf]
        %v3324 = vld [vmem:[#allocation30 + $0x48] sm:$0xff]
        %v3325 = vld [vmem:[#allocation30 + $0x50] sm:$0xf]
        %v3326 = vld [vmem:[#allocation30 + $0x54] sm:$0xff]
        %v3327 = vld [vmem:[#allocation30 + $0x5c] sm:$0xf]
        %v3328 = vld [vmem:[#allocation30 + $0x60] sm:$0xff]
        %v3329 = vld [vmem:[#allocation30 + $0x68] sm:$0xf]
        %v3330 = vld [vmem:[#allocation30 + $0x6c] sm:$0xff]
        %v3331 = vld [vmem:[#allocation30 + $0x74] sm:$0xf]
        %v3332 = vld [vmem:[#allocation30 + $0x78] sm:$0xff]
        %v3333 = vld [vmem:[#allocation30 + $0x80] sm:$0xf]
        %v3334 = vld [vmem:[#allocation30 + $0x84] sm:$0xff]
        %v3335 = vld [vmem:[#allocation30 + $0x8c] sm:$0xf]
        %v3336 = vld [vmem:[#allocation30 + $0x90] sm:$0xff]
        %v3337 = vld [vmem:[#allocation30 + $0x98] sm:$0xf]
        %v3338 = vld [vmem:[#allocation30 + $0x9c] sm:$0xff]
        %v3339 = vld [vmem:[#allocation30 + $0xa4] sm:$0xf]
        %v3340 = vld [vmem:[#allocation30 + $0xa8] sm:$0xff]
        %v3341 = vld [vmem:[#allocation30 + $0xb0] sm:$0xf]
        %v3342 = vld [vmem:[#allocation30 + $0xb4] sm:$0xff]
        %v3343 = vld [vmem:[#allocation30 + $0xbc] sm:$0xf]
        %v3376 = vunpack.c.l.b16 %v3312
        %v3377 = vunpack.c.h.b16 %v3312
        %v3378 = vunpack.c.l.b16 %v3313
        %v3379 = vunpack.c.l.b16 %v3314
        %v3380 = vunpack.c.h.b16 %v3314
        %v3381 = vunpack.c.l.b16 %v3315
        %v3382 = vunpack.c.l.b16 %v3316
        %v3383 = vunpack.c.h.b16 %v3316
        %v3384 = vunpack.c.l.b16 %v3317
        %v3385 = vunpack.c.l.b16 %v3318
        %v3386 = vunpack.c.h.b16 %v3318
        %v3387 = vunpack.c.l.b16 %v3319
        %v3388 = vunpack.c.l.b16 %v3320
        %v3389 = vunpack.c.h.b16 %v3320
        %v3390 = vunpack.c.l.b16 %v3321
        %v3391 = vunpack.c.l.b16 %v3322
        %v3392 = vunpack.c.h.b16 %v3322
        %v3393 = vunpack.c.l.b16 %v3323
        %v3394 = vunpack.c.l.b16 %v3324
        %v3395 = vunpack.c.h.b16 %v3324
        %v3396 = vunpack.c.l.b16 %v3325
        %v3397 = vunpack.c.l.b16 %v3326
        %v3398 = vunpack.c.h.b16 %v3326
        %v3399 = vunpack.c.l.b16 %v3327
        %v3400 = vunpack.c.l.b16 %v3328
        %v3401 = vunpack.c.h.b16 %v3328
        %v3402 = vunpack.c.l.b16 %v3329
        %v3403 = vunpack.c.l.b16 %v3330
        %v3404 = vunpack.c.h.b16 %v3330
        %v3405 = vunpack.c.l.b16 %v3331
        %v3406 = vunpack.c.l.b16 %v3332
        %v3407 = vunpack.c.h.b16 %v3332
        %v3408 = vunpack.c.l.b16 %v3333
        %v3409 = vunpack.c.l.b16 %v3334
        %v3410 = vunpack.c.h.b16 %v3334
        %v3411 = vunpack.c.l.b16 %v3335
        %v3412 = vunpack.c.l.b16 %v3336
        %v3413 = vunpack.c.h.b16 %v3336
        %v3414 = vunpack.c.l.b16 %v3337
        %v3415 = vunpack.c.l.b16 %v3338
        %v3416 = vunpack.c.h.b16 %v3338
        %v3417 = vunpack.c.l.b16 %v3339
        %v3418 = vunpack.c.l.b16 %v3340
        %v3419 = vunpack.c.h.b16 %v3340
        %v3420 = vunpack.c.l.b16 %v3341
        %v3421 = vunpack.c.l.b16 %v3342
        %v3422 = vunpack.c.h.b16 %v3342
        %v3423 = vunpack.c.l.b16 %v3343
        %v3424 = vpack.c.b16 %v3379, %v3376
        %v3425 = vpack.c.b16 %v3380, %v3377
        %v3426 = vpack.c.b16 %v3381, %v3378
        %v3427 = vpack.c.b16 %v3385, %v3382
        %v3428 = vpack.c.b16 %v3386, %v3383
        %v3429 = vpack.c.b16 %v3387, %v3384
        %v3430 = vpack.c.b16 %v3391, %v3388
        %v3431 = vpack.c.b16 %v3392, %v3389
        %v3432 = vpack.c.b16 %v3393, %v3390
        %v3433 = vpack.c.b16 %v3397, %v3394
        %v3434 = vpack.c.b16 %v3398, %v3395
        %v3435 = vpack.c.b16 %v3399, %v3396
        %v3436 = vpack.c.b16 %v3403, %v3400
        %v3437 = vpack.c.b16 %v3404, %v3401
        %v3438 = vpack.c.b16 %v3405, %v3402
        %v3439 = vpack.c.b16 %v3409, %v3406
        %v3440 = vpack.c.b16 %v3410, %v3407
        %v3441 = vpack.c.b16 %v3411, %v3408
        %v3442 = vpack.c.b16 %v3415, %v3412
        %v3443 = vpack.c.b16 %v3416, %v3413
        %v3444 = vpack.c.b16 %v3417, %v3414
        %v3445 = vpack.c.b16 %v3421, %v3418
        %v3446 = vpack.c.b16 %v3422, %v3419
        %v3447 = vpack.c.b16 %v3423, %v3420
        %3472 = vmatprep.subr.bf16.mxu0 %v3446
        %3473 = vmatpush1.bf16.msra.mxu0 %v3445
        %3474 = vmatprep.subr.bf16.mxu0 %v3443
        %3475 = vmatpush1.bf16.msra.mxu0 %v3442
        %3476 = vmatprep.subr.bf16.mxu0 %v3440
        %3477 = vmatpush1.bf16.msra.mxu0 %v3439
        %3478 = vmatprep.subr.bf16.mxu0 %v3437
        %3479 = vmatpush1.bf16.msra.mxu0 %v3436
        %3480 = vmatprep.subr.bf16.mxu0 %v3434
        %3481 = vmatpush1.bf16.msra.mxu0 %v3433
        %3482 = vmatprep.subr.bf16.mxu0 %v3431
        %3483 = vmatpush1.bf16.msra.mxu0 %v3430
        %3484 = vmatprep.subr.bf16.mxu0 %v3428
        %3485 = vmatpush1.bf16.msra.mxu0 %v3427
        %3486 = vmatprep.subr.bf16.mxu0 %v3425
        %3487 = vmatpush1.bf16.msra.mxu0 %v3424
        %3488 = vmatprep.subr.bf16.mxu0 0
        %3489 = vmatpush2.bf16.msra.mxu0 0
        %3490 = vmatprep.subr.bf16.mxu0 0
        %3491 = vmatpush2.bf16.msra.mxu0 0
        %3492 = vmatprep.subr.bf16.mxu0 0
        %3493 = vmatpush2.bf16.msra.mxu0 0
        %3494 = vmatprep.subr.bf16.mxu0 0
        %3495 = vmatpush2.bf16.msra.mxu0 0
        %3496 = vmatprep.subr.bf16.mxu0 0
        %3497 = vmatpush2.bf16.msra.mxu0 0
        %3498 = vmatprep.subr.bf16.mxu0 0
        %3499 = vmatpush2.bf16.msra.mxu0 0
        %3500 = vmatprep.subr.bf16.mxu0 0
        %3501 = vmatpush2.bf16.msra.mxu0 0
        %3502 = vmatprep.subr.bf16.mxu0 0
        %3503 = vmatpush2.bf16.msra.mxu0 0
        %3504 = vmatprep.mubr.bf16.mxu0 0
        %3505 = vmatmul.mubr.bf16.gmra.mxu0 %v3311
        %v3506 = vpop.f32.mrf.mxu0
        %v3507 = vadd.f32 0.0, %v3506
        %v3508 = vpop.f32.mrf.mxu0
        %v3509 = vadd.f32 0.0, %v3508
        %v3510 = vpop.f32.mrf.mxu0
        %v3511 = vpop.f32.mrf.mxu0
        %3512 = vdwg.mxu0
        %3513 = vmatprep.subr.bf16.mxu0 0
        %3514 = vmatpush1.bf16.msra.mxu0 %v3447
        %3515 = vmatprep.subr.bf16.mxu0 0
        %3516 = vmatpush1.bf16.msra.mxu0 %v3444
        %3517 = vmatprep.subr.bf16.mxu0 0
        %3518 = vmatpush1.bf16.msra.mxu0 %v3441
        %3519 = vmatprep.subr.bf16.mxu0 0
        %3520 = vmatpush1.bf16.msra.mxu0 %v3438
        %3521 = vmatprep.subr.bf16.mxu0 0
        %3522 = vmatpush1.bf16.msra.mxu0 %v3435
        %3523 = vmatprep.subr.bf16.mxu0 0
        %3524 = vmatpush1.bf16.msra.mxu0 %v3432
        %3525 = vmatprep.subr.bf16.mxu0 0
        %3526 = vmatpush1.bf16.msra.mxu0 %v3429
        %3527 = vmatprep.subr.bf16.mxu0 0
        %3528 = vmatpush1.bf16.msra.mxu0 %v3426
        %3529 = vmatprep.subr.bf16.mxu0 0
        %3530 = vmatpush2.bf16.msra.mxu0 0
        %3531 = vmatprep.subr.bf16.mxu0 0
        %3532 = vmatpush2.bf16.msra.mxu0 0
        %3533 = vmatprep.subr.bf16.mxu0 0
        %3534 = vmatpush2.bf16.msra.mxu0 0
        %3535 = vmatprep.subr.bf16.mxu0 0
        %3536 = vmatpush2.bf16.msra.mxu0 0
        %3537 = vmatprep.subr.bf16.mxu0 0
        %3538 = vmatpush2.bf16.msra.mxu0 0
        %3539 = vmatprep.subr.bf16.mxu0 0
        %3540 = vmatpush2.bf16.msra.mxu0 0
        %3541 = vmatprep.subr.bf16.mxu0 0
        %3542 = vmatpush2.bf16.msra.mxu0 0
        %3543 = vmatprep.subr.bf16.mxu0 0
        %3544 = vmatpush2.bf16.msra.mxu0 0
        %3545 = vmatprep.mubr.bf16.mxu0 0
        %3546 = vmatmul.mubr.bf16.gmra.mxu0 %v3311
        %v3547 = vpop.f32.mrf.mxu0
        %v3548 = vadd.f32 0.0, %v3547
        %v3549 = vpop.f32.mrf.mxu0
        %v3550 = vpop.f32.mrf.mxu0
        %v3551 = vpop.f32.mrf.mxu0
        %3552 = vdwg.mxu0
        %v3553 = vadd.f32 %v3265, %v3507
        %v3554 = vadd.f32 %v3267, %v3509
        %v3555 = vadd.f32 %v3306, %v3548
        %v3556 = vpack.c.bf16 %v2337, %v2337
        %v3557 = vld [vmem:[#allocation32] sm:$0xff]
        %v3558 = vld [vmem:[#allocation32 + $0x8] sm:$0xf]
        %v3559 = vld [vmem:[#allocation32 + $0xc] sm:$0xff]
        %v3560 = vld [vmem:[#allocation32 + $0x14] sm:$0xf]
        %v3561 = vld [vmem:[#allocation32 + $0x18] sm:$0xff]
        %v3562 = vld [vmem:[#allocation32 + $0x20] sm:$0xf]
        %v3563 = vld [vmem:[#allocation32 + $0x24] sm:$0xff]
        %v3564 = vld [vmem:[#allocation32 + $0x2c] sm:$0xf]
        %v3565 = vld [vmem:[#allocation32 + $0x30] sm:$0xff]
        %v3566 = vld [vmem:[#allocation32 + $0x38] sm:$0xf]
        %v3567 = vld [vmem:[#allocation32 + $0x3c] sm:$0xff]
        %v3568 = vld [vmem:[#allocation32 + $0x44] sm:$0xf]
        %v3569 = vld [vmem:[#allocation32 + $0x48] sm:$0xff]
        %v3570 = vld [vmem:[#allocation32 + $0x50] sm:$0xf]
        %v3571 = vld [vmem:[#allocation32 + $0x54] sm:$0xff]
        %v3572 = vld [vmem:[#allocation32 + $0x5c] sm:$0xf]
        %v3573 = vld [vmem:[#allocation32 + $0x60] sm:$0xff]
        %v3574 = vld [vmem:[#allocation32 + $0x68] sm:$0xf]
        %v3575 = vld [vmem:[#allocation32 + $0x6c] sm:$0xff]
        %v3576 = vld [vmem:[#allocation32 + $0x74] sm:$0xf]
        %v3577 = vld [vmem:[#allocation32 + $0x78] sm:$0xff]
        %v3578 = vld [vmem:[#allocation32 + $0x80] sm:$0xf]
        %v3579 = vld [vmem:[#allocation32 + $0x84] sm:$0xff]
        %v3580 = vld [vmem:[#allocation32 + $0x8c] sm:$0xf]
        %v3581 = vld [vmem:[#allocation32 + $0x90] sm:$0xff]
        %v3582 = vld [vmem:[#allocation32 + $0x98] sm:$0xf]
        %v3583 = vld [vmem:[#allocation32 + $0x9c] sm:$0xff]
        %v3584 = vld [vmem:[#allocation32 + $0xa4] sm:$0xf]
        %v3585 = vld [vmem:[#allocation32 + $0xa8] sm:$0xff]
        %v3586 = vld [vmem:[#allocation32 + $0xb0] sm:$0xf]
        %v3587 = vld [vmem:[#allocation32 + $0xb4] sm:$0xff]
        %v3588 = vld [vmem:[#allocation32 + $0xbc] sm:$0xf]
        %v3621 = vunpack.c.l.b16 %v3557
        %v3622 = vunpack.c.h.b16 %v3557
        %v3623 = vunpack.c.l.b16 %v3558
        %v3624 = vunpack.c.l.b16 %v3559
        %v3625 = vunpack.c.h.b16 %v3559
        %v3626 = vunpack.c.l.b16 %v3560
        %v3627 = vunpack.c.l.b16 %v3561
        %v3628 = vunpack.c.h.b16 %v3561
        %v3629 = vunpack.c.l.b16 %v3562
        %v3630 = vunpack.c.l.b16 %v3563
        %v3631 = vunpack.c.h.b16 %v3563
        %v3632 = vunpack.c.l.b16 %v3564
        %v3633 = vunpack.c.l.b16 %v3565
        %v3634 = vunpack.c.h.b16 %v3565
        %v3635 = vunpack.c.l.b16 %v3566
        %v3636 = vunpack.c.l.b16 %v3567
        %v3637 = vunpack.c.h.b16 %v3567
        %v3638 = vunpack.c.l.b16 %v3568
        %v3639 = vunpack.c.l.b16 %v3569
        %v3640 = vunpack.c.h.b16 %v3569
        %v3641 = vunpack.c.l.b16 %v3570
        %v3642 = vunpack.c.l.b16 %v3571
        %v3643 = vunpack.c.h.b16 %v3571
        %v3644 = vunpack.c.l.b16 %v3572
        %v3645 = vunpack.c.l.b16 %v3573
        %v3646 = vunpack.c.h.b16 %v3573
        %v3647 = vunpack.c.l.b16 %v3574
        %v3648 = vunpack.c.l.b16 %v3575
        %v3649 = vunpack.c.h.b16 %v3575
        %v3650 = vunpack.c.l.b16 %v3576
        %v3651 = vunpack.c.l.b16 %v3577
        %v3652 = vunpack.c.h.b16 %v3577
        %v3653 = vunpack.c.l.b16 %v3578
        %v3654 = vunpack.c.l.b16 %v3579
        %v3655 = vunpack.c.h.b16 %v3579
        %v3656 = vunpack.c.l.b16 %v3580
        %v3657 = vunpack.c.l.b16 %v3581
        %v3658 = vunpack.c.h.b16 %v3581
        %v3659 = vunpack.c.l.b16 %v3582
        %v3660 = vunpack.c.l.b16 %v3583
        %v3661 = vunpack.c.h.b16 %v3583
        %v3662 = vunpack.c.l.b16 %v3584
        %v3663 = vunpack.c.l.b16 %v3585
        %v3664 = vunpack.c.h.b16 %v3585
        %v3665 = vunpack.c.l.b16 %v3586
        %v3666 = vunpack.c.l.b16 %v3587
        %v3667 = vunpack.c.h.b16 %v3587
        %v3668 = vunpack.c.l.b16 %v3588
        %v3669 = vpack.c.b16 %v3624, %v3621
        %v3670 = vpack.c.b16 %v3625, %v3622
        %v3671 = vpack.c.b16 %v3626, %v3623
        %v3672 = vpack.c.b16 %v3630, %v3627
        %v3673 = vpack.c.b16 %v3631, %v3628
        %v3674 = vpack.c.b16 %v3632, %v3629
        %v3675 = vpack.c.b16 %v3636, %v3633
        %v3676 = vpack.c.b16 %v3637, %v3634
        %v3677 = vpack.c.b16 %v3638, %v3635
        %v3678 = vpack.c.b16 %v3642, %v3639
        %v3679 = vpack.c.b16 %v3643, %v3640
        %v3680 = vpack.c.b16 %v3644, %v3641
        %v3681 = vpack.c.b16 %v3648, %v3645
        %v3682 = vpack.c.b16 %v3649, %v3646
        %v3683 = vpack.c.b16 %v3650, %v3647
        %v3684 = vpack.c.b16 %v3654, %v3651
        %v3685 = vpack.c.b16 %v3655, %v3652
        %v3686 = vpack.c.b16 %v3656, %v3653
        %v3687 = vpack.c.b16 %v3660, %v3657
        %v3688 = vpack.c.b16 %v3661, %v3658
        %v3689 = vpack.c.b16 %v3662, %v3659
        %v3690 = vpack.c.b16 %v3666, %v3663
        %v3691 = vpack.c.b16 %v3667, %v3664
        %v3692 = vpack.c.b16 %v3668, %v3665
        %3717 = vmatprep.subr.bf16.mxu0 %v3691
        %3718 = vmatpush1.bf16.msra.mxu0 %v3690
        %3719 = vmatprep.subr.bf16.mxu0 %v3688
        %3720 = vmatpush1.bf16.msra.mxu0 %v3687
        %3721 = vmatprep.subr.bf16.mxu0 %v3685
        %3722 = vmatpush1.bf16.msra.mxu0 %v3684
        %3723 = vmatprep.subr.bf16.mxu0 %v3682
        %3724 = vmatpush1.bf16.msra.mxu0 %v3681
        %3725 = vmatprep.subr.bf16.mxu0 %v3679
        %3726 = vmatpush1.bf16.msra.mxu0 %v3678
        %3727 = vmatprep.subr.bf16.mxu0 %v3676
        %3728 = vmatpush1.bf16.msra.mxu0 %v3675
        %3729 = vmatprep.subr.bf16.mxu0 %v3673
        %3730 = vmatpush1.bf16.msra.mxu0 %v3672
        %3731 = vmatprep.subr.bf16.mxu0 %v3670
        %3732 = vmatpush1.bf16.msra.mxu0 %v3669
        %3733 = vmatprep.subr.bf16.mxu0 0
        %3734 = vmatpush2.bf16.msra.mxu0 0
        %3735 = vmatprep.subr.bf16.mxu0 0
        %3736 = vmatpush2.bf16.msra.mxu0 0
        %3737 = vmatprep.subr.bf16.mxu0 0
        %3738 = vmatpush2.bf16.msra.mxu0 0
        %3739 = vmatprep.subr.bf16.mxu0 0
        %3740 = vmatpush2.bf16.msra.mxu0 0
        %3741 = vmatprep.subr.bf16.mxu0 0
        %3742 = vmatpush2.bf16.msra.mxu0 0
        %3743 = vmatprep.subr.bf16.mxu0 0
        %3744 = vmatpush2.bf16.msra.mxu0 0
        %3745 = vmatprep.subr.bf16.mxu0 0
        %3746 = vmatpush2.bf16.msra.mxu0 0
        %3747 = vmatprep.subr.bf16.mxu0 0
        %3748 = vmatpush2.bf16.msra.mxu0 0
        %3749 = vmatprep.mubr.bf16.mxu0 0
        %3750 = vmatmul.mubr.bf16.gmra.mxu0 %v3556
        %v3751 = vpop.f32.mrf.mxu0
        %v3752 = vadd.f32 0.0, %v3751
        %v3753 = vpop.f32.mrf.mxu0
        %v3754 = vadd.f32 0.0, %v3753
        %v3755 = vpop.f32.mrf.mxu0
        %v3756 = vpop.f32.mrf.mxu0
        %3757 = vdwg.mxu0
        %3758 = vmatprep.subr.bf16.mxu0 0
        %3759 = vmatpush1.bf16.msra.mxu0 %v3692
        %3760 = vmatprep.subr.bf16.mxu0 0
        %3761 = vmatpush1.bf16.msra.mxu0 %v3689
        %3762 = vmatprep.subr.bf16.mxu0 0
        %3763 = vmatpush1.bf16.msra.mxu0 %v3686
        %3764 = vmatprep.subr.bf16.mxu0 0
        %3765 = vmatpush1.bf16.msra.mxu0 %v3683
        %3766 = vmatprep.subr.bf16.mxu0 0
        %3767 = vmatpush1.bf16.msra.mxu0 %v3680
        %3768 = vmatprep.subr.bf16.mxu0 0
        %3769 = vmatpush1.bf16.msra.mxu0 %v3677
        %3770 = vmatprep.subr.bf16.mxu0 0
        %3771 = vmatpush1.bf16.msra.mxu0 %v3674
        %3772 = vmatprep.subr.bf16.mxu0 0
        %3773 = vmatpush1.bf16.msra.mxu0 %v3671
        %3774 = vmatprep.subr.bf16.mxu0 0
        %3775 = vmatpush2.bf16.msra.mxu0 0
        %3776 = vmatprep.subr.bf16.mxu0 0
        %3777 = vmatpush2.bf16.msra.mxu0 0
        %3778 = vmatprep.subr.bf16.mxu0 0
        %3779 = vmatpush2.bf16.msra.mxu0 0
        %3780 = vmatprep.subr.bf16.mxu0 0
        %3781 = vmatpush2.bf16.msra.mxu0 0
        %3782 = vmatprep.subr.bf16.mxu0 0
        %3783 = vmatpush2.bf16.msra.mxu0 0
        %3784 = vmatprep.subr.bf16.mxu0 0
        %3785 = vmatpush2.bf16.msra.mxu0 0
        %3786 = vmatprep.subr.bf16.mxu0 0
        %3787 = vmatpush2.bf16.msra.mxu0 0
        %3788 = vmatprep.subr.bf16.mxu0 0
        %3789 = vmatpush2.bf16.msra.mxu0 0
        %3790 = vmatprep.mubr.bf16.mxu0 0
        %3791 = vmatmul.mubr.bf16.gmra.mxu0 %v3556
        %v3792 = vpop.f32.mrf.mxu0
        %v3793 = vadd.f32 0.0, %v3792
        %v3794 = vpop.f32.mrf.mxu0
        %v3795 = vpop.f32.mrf.mxu0
        %v3796 = vpop.f32.mrf.mxu0
        %3797 = vdwg.mxu0
        %v3798 = vadd.f32 %v3553, %v3752
        %v3799 = vadd.f32 %v3554, %v3754
        %v3800 = vadd.f32 %v3555, %v3793
        %v3801 = vpack.c.bf16 %v2826, %v2826
        %v3802 = vld [vmem:[#allocation33] sm:$0xff]
        %v3803 = vld [vmem:[#allocation33 + $0x8] sm:$0xf]
        %v3804 = vld [vmem:[#allocation33 + $0xc] sm:$0xff]
        %v3805 = vld [vmem:[#allocation33 + $0x14] sm:$0xf]
        %v3806 = vld [vmem:[#allocation33 + $0x18] sm:$0xff]
        %v3807 = vld [vmem:[#allocation33 + $0x20] sm:$0xf]
        %v3808 = vld [vmem:[#allocation33 + $0x24] sm:$0xff]
        %v3809 = vld [vmem:[#allocation33 + $0x2c] sm:$0xf]
        %v3810 = vld [vmem:[#allocation33 + $0x30] sm:$0xff]
        %v3811 = vld [vmem:[#allocation33 + $0x38] sm:$0xf]
        %v3812 = vld [vmem:[#allocation33 + $0x3c] sm:$0xff]
        %v3813 = vld [vmem:[#allocation33 + $0x44] sm:$0xf]
        %v3814 = vld [vmem:[#allocation33 + $0x48] sm:$0xff]
        %v3815 = vld [vmem:[#allocation33 + $0x50] sm:$0xf]
        %v3816 = vld [vmem:[#allocation33 + $0x54] sm:$0xff]
        %v3817 = vld [vmem:[#allocation33 + $0x5c] sm:$0xf]
        %v3818 = vld [vmem:[#allocation33 + $0x60] sm:$0xff]
        %v3819 = vld [vmem:[#allocation33 + $0x68] sm:$0xf]
        %v3820 = vld [vmem:[#allocation33 + $0x6c] sm:$0xff]
        %v3821 = vld [vmem:[#allocation33 + $0x74] sm:$0xf]
        %v3822 = vld [vmem:[#allocation33 + $0x78] sm:$0xff]
        %v3823 = vld [vmem:[#allocation33 + $0x80] sm:$0xf]
        %v3824 = vld [vmem:[#allocation33 + $0x84] sm:$0xff]
        %v3825 = vld [vmem:[#allocation33 + $0x8c] sm:$0xf]
        %v3826 = vld [vmem:[#allocation33 + $0x90] sm:$0xff]
        %v3827 = vld [vmem:[#allocation33 + $0x98] sm:$0xf]
        %v3828 = vld [vmem:[#allocation33 + $0x9c] sm:$0xff]
        %v3829 = vld [vmem:[#allocation33 + $0xa4] sm:$0xf]
        %v3830 = vld [vmem:[#allocation33 + $0xa8] sm:$0xff]
        %v3831 = vld [vmem:[#allocation33 + $0xb0] sm:$0xf]
        %v3832 = vld [vmem:[#allocation33 + $0xb4] sm:$0xff]
        %v3833 = vld [vmem:[#allocation33 + $0xbc] sm:$0xf]
        %v3866 = vunpack.c.l.b16 %v3802
        %v3867 = vunpack.c.h.b16 %v3802
        %v3868 = vunpack.c.l.b16 %v3803
        %v3869 = vunpack.c.l.b16 %v3804
        %v3870 = vunpack.c.h.b16 %v3804
        %v3871 = vunpack.c.l.b16 %v3805
        %v3872 = vunpack.c.l.b16 %v3806
        %v3873 = vunpack.c.h.b16 %v3806
        %v3874 = vunpack.c.l.b16 %v3807
        %v3875 = vunpack.c.l.b16 %v3808
        %v3876 = vunpack.c.h.b16 %v3808
        %v3877 = vunpack.c.l.b16 %v3809
        %v3878 = vunpack.c.l.b16 %v3810
        %v3879 = vunpack.c.h.b16 %v3810
        %v3880 = vunpack.c.l.b16 %v3811
        %v3881 = vunpack.c.l.b16 %v3812
        %v3882 = vunpack.c.h.b16 %v3812
        %v3883 = vunpack.c.l.b16 %v3813
        %v3884 = vunpack.c.l.b16 %v3814
        %v3885 = vunpack.c.h.b16 %v3814
        %v3886 = vunpack.c.l.b16 %v3815
        %v3887 = vunpack.c.l.b16 %v3816
        %v3888 = vunpack.c.h.b16 %v3816
        %v3889 = vunpack.c.l.b16 %v3817
        %v3890 = vunpack.c.l.b16 %v3818
        %v3891 = vunpack.c.h.b16 %v3818
        %v3892 = vunpack.c.l.b16 %v3819
        %v3893 = vunpack.c.l.b16 %v3820
        %v3894 = vunpack.c.h.b16 %v3820
        %v3895 = vunpack.c.l.b16 %v3821
        %v3896 = vunpack.c.l.b16 %v3822
        %v3897 = vunpack.c.h.b16 %v3822
        %v3898 = vunpack.c.l.b16 %v3823
        %v3899 = vunpack.c.l.b16 %v3824
        %v3900 = vunpack.c.h.b16 %v3824
        %v3901 = vunpack.c.l.b16 %v3825
        %v3902 = vunpack.c.l.b16 %v3826
        %v3903 = vunpack.c.h.b16 %v3826
        %v3904 = vunpack.c.l.b16 %v3827
        %v3905 = vunpack.c.l.b16 %v3828
        %v3906 = vunpack.c.h.b16 %v3828
        %v3907 = vunpack.c.l.b16 %v3829
        %v3908 = vunpack.c.l.b16 %v3830
        %v3909 = vunpack.c.h.b16 %v3830
        %v3910 = vunpack.c.l.b16 %v3831
        %v3911 = vunpack.c.l.b16 %v3832
        %v3912 = vunpack.c.h.b16 %v3832
        %v3913 = vunpack.c.l.b16 %v3833
        %v3914 = vpack.c.b16 %v3869, %v3866
        %v3915 = vpack.c.b16 %v3870, %v3867
        %v3916 = vpack.c.b16 %v3871, %v3868
        %v3917 = vpack.c.b16 %v3875, %v3872
        %v3918 = vpack.c.b16 %v3876, %v3873
        %v3919 = vpack.c.b16 %v3877, %v3874
        %v3920 = vpack.c.b16 %v3881, %v3878
        %v3921 = vpack.c.b16 %v3882, %v3879
        %v3922 = vpack.c.b16 %v3883, %v3880
        %v3923 = vpack.c.b16 %v3887, %v3884
        %v3924 = vpack.c.b16 %v3888, %v3885
        %v3925 = vpack.c.b16 %v3889, %v3886
        %v3926 = vpack.c.b16 %v3893, %v3890
        %v3927 = vpack.c.b16 %v3894, %v3891
        %v3928 = vpack.c.b16 %v3895, %v3892
        %v3929 = vpack.c.b16 %v3899, %v3896
        %v3930 = vpack.c.b16 %v3900, %v3897
        %v3931 = vpack.c.b16 %v3901, %v3898
        %v3932 = vpack.c.b16 %v3905, %v3902
        %v3933 = vpack.c.b16 %v3906, %v3903
        %v3934 = vpack.c.b16 %v3907, %v3904
        %v3935 = vpack.c.b16 %v3911, %v3908
        %v3936 = vpack.c.b16 %v3912, %v3909
        %v3937 = vpack.c.b16 %v3913, %v3910
        %3962 = vmatprep.subr.bf16.mxu0 %v3936
        %3963 = vmatpush1.bf16.msra.mxu0 %v3935
        %3964 = vmatprep.subr.bf16.mxu0 %v3933
        %3965 = vmatpush1.bf16.msra.mxu0 %v3932
        %3966 = vmatprep.subr.bf16.mxu0 %v3930
        %3967 = vmatpush1.bf16.msra.mxu0 %v3929
        %3968 = vmatprep.subr.bf16.mxu0 %v3927
        %3969 = vmatpush1.bf16.msra.mxu0 %v3926
        %3970 = vmatprep.subr.bf16.mxu0 %v3924
        %3971 = vmatpush1.bf16.msra.mxu0 %v3923
        %3972 = vmatprep.subr.bf16.mxu0 %v3921
        %3973 = vmatpush1.bf16.msra.mxu0 %v3920
        %3974 = vmatprep.subr.bf16.mxu0 %v3918
        %3975 = vmatpush1.bf16.msra.mxu0 %v3917
        %3976 = vmatprep.subr.bf16.mxu0 %v3915
        %3977 = vmatpush1.bf16.msra.mxu0 %v3914
        %3978 = vmatprep.subr.bf16.mxu0 0
        %3979 = vmatpush2.bf16.msra.mxu0 0
        %3980 = vmatprep.subr.bf16.mxu0 0
        %3981 = vmatpush2.bf16.msra.mxu0 0
        %3982 = vmatprep.subr.bf16.mxu0 0
        %3983 = vmatpush2.bf16.msra.mxu0 0
        %3984 = vmatprep.subr.bf16.mxu0 0
        %3985 = vmatpush2.bf16.msra.mxu0 0
        %3986 = vmatprep.subr.bf16.mxu0 0
        %3987 = vmatpush2.bf16.msra.mxu0 0
        %3988 = vmatprep.subr.bf16.mxu0 0
        %3989 = vmatpush2.bf16.msra.mxu0 0
        %3990 = vmatprep.subr.bf16.mxu0 0
        %3991 = vmatpush2.bf16.msra.mxu0 0
        %3992 = vmatprep.subr.bf16.mxu0 0
        %3993 = vmatpush2.bf16.msra.mxu0 0
        %3994 = vmatprep.mubr.bf16.mxu0 0
        %3995 = vmatmul.mubr.bf16.gmra.mxu0 %v3801
        %v3996 = vpop.f32.mrf.mxu0
        %v3997 = vadd.f32 0.0, %v3996
        %v3998 = vpop.f32.mrf.mxu0
        %v3999 = vadd.f32 0.0, %v3998
        %v4000 = vpop.f32.mrf.mxu0
        %v4001 = vpop.f32.mrf.mxu0
        %4002 = vdwg.mxu0
        %4003 = vmatprep.subr.bf16.mxu0 0
        %4004 = vmatpush1.bf16.msra.mxu0 %v3937
        %4005 = vmatprep.subr.bf16.mxu0 0
        %4006 = vmatpush1.bf16.msra.mxu0 %v3934
        %4007 = vmatprep.subr.bf16.mxu0 0
        %4008 = vmatpush1.bf16.msra.mxu0 %v3931
        %4009 = vmatprep.subr.bf16.mxu0 0
        %4010 = vmatpush1.bf16.msra.mxu0 %v3928
        %4011 = vmatprep.subr.bf16.mxu0 0
        %4012 = vmatpush1.bf16.msra.mxu0 %v3925
        %4013 = vmatprep.subr.bf16.mxu0 0
        %4014 = vmatpush1.bf16.msra.mxu0 %v3922
        %4015 = vmatprep.subr.bf16.mxu0 0
        %4016 = vmatpush1.bf16.msra.mxu0 %v3919
        %4017 = vmatprep.subr.bf16.mxu0 0
        %4018 = vmatpush1.bf16.msra.mxu0 %v3916
        %4019 = vmatprep.subr.bf16.mxu0 0
        %4020 = vmatpush2.bf16.msra.mxu0 0
        %4021 = vmatprep.subr.bf16.mxu0 0
        %4022 = vmatpush2.bf16.msra.mxu0 0
        %4023 = vmatprep.subr.bf16.mxu0 0
        %4024 = vmatpush2.bf16.msra.mxu0 0
        %4025 = vmatprep.subr.bf16.mxu0 0
        %4026 = vmatpush2.bf16.msra.mxu0 0
        %4027 = vmatprep.subr.bf16.mxu0 0
        %4028 = vmatpush2.bf16.msra.mxu0 0
        %4029 = vmatprep.subr.bf16.mxu0 0
        %4030 = vmatpush2.bf16.msra.mxu0 0
        %4031 = vmatprep.subr.bf16.mxu0 0
        %4032 = vmatpush2.bf16.msra.mxu0 0
        %4033 = vmatprep.subr.bf16.mxu0 0
        %4034 = vmatpush2.bf16.msra.mxu0 0
        %4035 = vmatprep.mubr.bf16.mxu0 0
        %4036 = vmatmul.mubr.bf16.gmra.mxu0 %v3801
        %v4037 = vpop.f32.mrf.mxu0
        %v4038 = vadd.f32 0.0, %v4037
        %v4039 = vpop.f32.mrf.mxu0
        %v4040 = vpop.f32.mrf.mxu0
        %v4041 = vpop.f32.mrf.mxu0
        %4042 = vdwg.mxu0
        %v4043 = vadd.f32 %v3798, %v3997
        %v4044 = vadd.f32 %v3799, %v3999
        %v4045 = vadd.f32 %v3800, %v4038
        %v4046 = vld [vmem:[#allocation35] sm:$0x7]
        %v4048 = vlaneseq
        %v4049 = vshrl.u32 %v4048, 7
        %v4050 = vsub.s32 0, %v4049
        %v4051 = vrot.slane %v4046, %v4050
        %v4052 = vlaneseq
        %v4053 = vshrl.u32 %v4052, 7
        %v4054 = vsub.s32 1, %v4053
        %v4055 = vrot.slane %v4046, %v4054
        %v4056 = vlaneseq
        %v4057 = vshrl.u32 %v4056, 7
        %v4058 = vsub.s32 2, %v4057
        %v4059 = vrot.slane %v4046, %v4058
        %v4063 = vadd.f32 %v4043, %v4051
        %v4064 = vadd.f32 %v4044, %v4055
        %v4065 = vadd.f32 %v4045, %v4059
        %v4066 = vmax.f32 %v4063, 0.0
        %v4067 = vmax.f32 %v4064, 0.0
        %v4068 = vmax.f32 %v4065, 0.0
        %v4069 = vpack.c.bf16 %v4066, %v4066
        %v4070 = vpack.c.bf16 %v4067, %v4067
        %v4071 = vpack.c.bf16 %v4068, %v4068
        %v4072 = vld [vmem:[%s65] sm:$0xf]
        %v4073 = vld [vmem:[%s65 + $0x4] sm:$0xf]
        %v4074 = vld [vmem:[%s65 + $0x8] sm:$0xf]
        %v4075 = vld [vmem:[%s65 + $0xc] sm:$0xf]
        %v4076 = vld [vmem:[%s65 + $0x10] sm:$0xf]
        %v4077 = vld [vmem:[%s65 + $0x14] sm:$0xf]
        %v4078 = vld [vmem:[%s65 + $0x18] sm:$0xf]
        %v4079 = vld [vmem:[%s65 + $0x1c] sm:$0xf]
        %v4080 = vld [vmem:[%s65 + $0x20] sm:$0xf]
        %v4081 = vld [vmem:[%s65 + $0x24] sm:$0xf]
        %v4082 = vld [vmem:[%s65 + $0x28] sm:$0xf]
        %v4083 = vld [vmem:[%s65 + $0x2c] sm:$0xf]
        %v4084 = vld [vmem:[%s65 + $0x30] sm:$0xf]
        %v4085 = vld [vmem:[%s65 + $0x34] sm:$0xf]
        %v4086 = vld [vmem:[%s65 + $0x38] sm:$0xf]
        %v4087 = vld [vmem:[%s65 + $0x3c] sm:$0xf]
        %v4088 = vld [vmem:[%s65 + $0x40] sm:$0xf]
        %v4089 = vld [vmem:[%s65 + $0x44] sm:$0xf]
        %v4090 = vld [vmem:[%s65 + $0x48] sm:$0xf]
        %v4091 = vld [vmem:[%s65 + $0x4c] sm:$0xf]
        %v4092 = vld [vmem:[%s65 + $0x50] sm:$0xf]
        %v4093 = vld [vmem:[%s65 + $0x54] sm:$0xf]
        %v4094 = vld [vmem:[%s65 + $0x58] sm:$0xf]
        %v4095 = vld [vmem:[%s65 + $0x5c] sm:$0xf]
        %v4096 = vld [vmem:[%s65 + $0x60] sm:$0xf]
        %v4097 = vld [vmem:[%s65 + $0x64] sm:$0xf]
        %v4098 = vld [vmem:[%s65 + $0x68] sm:$0xf]
        %v4099 = vld [vmem:[%s65 + $0x6c] sm:$0xf]
        %v4100 = vld [vmem:[%s65 + $0x70] sm:$0xf]
        %v4101 = vld [vmem:[%s65 + $0x74] sm:$0xf]
        %v4102 = vld [vmem:[%s65 + $0x78] sm:$0xf]
        %v4103 = vld [vmem:[%s65 + $0x7c] sm:$0xf]
        %v4104 = vld [vmem:[%s65 + $0x80] sm:$0xf]
        %v4105 = vld [vmem:[%s65 + $0x84] sm:$0xf]
        %v4106 = vld [vmem:[%s65 + $0x88] sm:$0xf]
        %v4107 = vld [vmem:[%s65 + $0x8c] sm:$0xf]
        %v4108 = vld [vmem:[%s65 + $0x90] sm:$0xf]
        %v4109 = vld [vmem:[%s65 + $0x94] sm:$0xf]
        %v4110 = vld [vmem:[%s65 + $0x98] sm:$0xf]
        %v4111 = vld [vmem:[%s65 + $0x9c] sm:$0xf]
        %v4112 = vld [vmem:[%s65 + $0xa0] sm:$0xf]
        %v4113 = vld [vmem:[%s65 + $0xa4] sm:$0xf]
        %v4114 = vld [vmem:[%s65 + $0xa8] sm:$0xf]
        %v4115 = vld [vmem:[%s65 + $0xac] sm:$0xf]
        %v4116 = vld [vmem:[%s65 + $0xb0] sm:$0xf]
        %v4117 = vld [vmem:[%s65 + $0xb4] sm:$0xf]
        %v4118 = vld [vmem:[%s65 + $0xb8] sm:$0xf]
        %v4119 = vld [vmem:[%s65 + $0xbc] sm:$0xf]
        %v4120 = vld [vmem:[#allocation36] sm:$0x1]
        %v4169 = vunpack.c.l.b16 %v4072
        %v4170 = vunpack.c.l.b16 %v4073
        %v4171 = vunpack.c.l.b16 %v4074
        %v4172 = vunpack.c.l.b16 %v4075
        %v4173 = vunpack.c.l.b16 %v4076
        %v4174 = vunpack.c.l.b16 %v4077
        %v4175 = vunpack.c.l.b16 %v4078
        %v4176 = vunpack.c.l.b16 %v4079
        %v4177 = vunpack.c.l.b16 %v4080
        %v4178 = vunpack.c.l.b16 %v4081
        %v4179 = vunpack.c.l.b16 %v4082
        %v4180 = vunpack.c.l.b16 %v4083
        %v4181 = vunpack.c.l.b16 %v4084
        %v4182 = vunpack.c.l.b16 %v4085
        %v4183 = vunpack.c.l.b16 %v4086
        %v4184 = vunpack.c.l.b16 %v4087
        %v4185 = vunpack.c.l.b16 %v4088
        %v4186 = vunpack.c.l.b16 %v4089
        %v4187 = vunpack.c.l.b16 %v4090
        %v4188 = vunpack.c.l.b16 %v4091
        %v4189 = vunpack.c.l.b16 %v4092
        %v4190 = vunpack.c.l.b16 %v4093
        %v4191 = vunpack.c.l.b16 %v4094
        %v4192 = vunpack.c.l.b16 %v4095
        %v4193 = vunpack.c.l.b16 %v4096
        %v4194 = vunpack.c.l.b16 %v4097
        %v4195 = vunpack.c.l.b16 %v4098
        %v4196 = vunpack.c.l.b16 %v4099
        %v4197 = vunpack.c.l.b16 %v4100
        %v4198 = vunpack.c.l.b16 %v4101
        %v4199 = vunpack.c.l.b16 %v4102
        %v4200 = vunpack.c.l.b16 %v4103
        %v4201 = vunpack.c.l.b16 %v4104
        %v4202 = vunpack.c.l.b16 %v4105
        %v4203 = vunpack.c.l.b16 %v4106
        %v4204 = vunpack.c.l.b16 %v4107
        %v4205 = vunpack.c.l.b16 %v4108
        %v4206 = vunpack.c.l.b16 %v4109
        %v4207 = vunpack.c.l.b16 %v4110
        %v4208 = vunpack.c.l.b16 %v4111
        %v4209 = vunpack.c.l.b16 %v4112
        %v4210 = vunpack.c.l.b16 %v4113
        %v4211 = vunpack.c.l.b16 %v4114
        %v4212 = vunpack.c.l.b16 %v4115
        %v4213 = vunpack.c.l.b16 %v4116
        %v4214 = vunpack.c.l.b16 %v4117
        %v4215 = vunpack.c.l.b16 %v4118
        %v4216 = vunpack.c.l.b16 %v4119
        %v4217 = vpack.c.b16 %v4170, %v4169
        %v4218 = vpack.c.b16 %v4172, %v4171
        %v4219 = vpack.c.b16 %v4174, %v4173
        %v4220 = vpack.c.b16 %v4176, %v4175
        %v4221 = vpack.c.b16 %v4178, %v4177
        %v4222 = vpack.c.b16 %v4180, %v4179
        %v4223 = vpack.c.b16 %v4182, %v4181
        %v4224 = vpack.c.b16 %v4184, %v4183
        %v4225 = vpack.c.b16 %v4186, %v4185
        %v4226 = vpack.c.b16 %v4188, %v4187
        %v4227 = vpack.c.b16 %v4190, %v4189
        %v4228 = vpack.c.b16 %v4192, %v4191
        %v4229 = vpack.c.b16 %v4194, %v4193
        %v4230 = vpack.c.b16 %v4196, %v4195
        %v4231 = vpack.c.b16 %v4198, %v4197
        %v4232 = vpack.c.b16 %v4200, %v4199
        %v4233 = vpack.c.b16 %v4202, %v4201
        %v4234 = vpack.c.b16 %v4204, %v4203
        %v4235 = vpack.c.b16 %v4206, %v4205
        %v4236 = vpack.c.b16 %v4208, %v4207
        %v4237 = vpack.c.b16 %v4210, %v4209
        %v4238 = vpack.c.b16 %v4212, %v4211
        %v4239 = vpack.c.b16 %v4214, %v4213
        %v4240 = vpack.c.b16 %v4216, %v4215
        %4265 = vmatprep.subr.bf16.mxu0 0
        %4266 = vmatpush1.bf16.msra.mxu0 %v4224
        %4267 = vmatprep.subr.bf16.mxu0 0
        %4268 = vmatpush1.bf16.msra.mxu0 %v4223
        %4269 = vmatprep.subr.bf16.mxu0 0
        %4270 = vmatpush1.bf16.msra.mxu0 %v4222
        %4271 = vmatprep.subr.bf16.mxu0 0
        %4272 = vmatpush1.bf16.msra.mxu0 %v4221
        %4273 = vmatprep.subr.bf16.mxu0 0
        %4274 = vmatpush1.bf16.msra.mxu0 %v4220
        %4275 = vmatprep.subr.bf16.mxu0 0
        %4276 = vmatpush1.bf16.msra.mxu0 %v4219
        %4277 = vmatprep.subr.bf16.mxu0 0
        %4278 = vmatpush1.bf16.msra.mxu0 %v4218
        %4279 = vmatprep.subr.bf16.mxu0 0
        %4280 = vmatpush1.bf16.msra.mxu0 %v4217
        %4281 = vmatprep.subr.bf16.mxu0 0
        %4282 = vmatpush2.bf16.msra.mxu0 %v4232
        %4283 = vmatprep.subr.bf16.mxu0 0
        %4284 = vmatpush2.bf16.msra.mxu0 %v4231
        %4285 = vmatprep.subr.bf16.mxu0 0
        %4286 = vmatpush2.bf16.msra.mxu0 %v4230
        %4287 = vmatprep.subr.bf16.mxu0 0
        %4288 = vmatpush2.bf16.msra.mxu0 %v4229
        %4289 = vmatprep.subr.bf16.mxu0 0
        %4290 = vmatpush2.bf16.msra.mxu0 %v4228
        %4291 = vmatprep.subr.bf16.mxu0 0
        %4292 = vmatpush2.bf16.msra.mxu0 %v4227
        %4293 = vmatprep.subr.bf16.mxu0 0
        %4294 = vmatpush2.bf16.msra.mxu0 %v4226
        %4295 = vmatprep.subr.bf16.mxu0 0
        %4296 = vmatpush2.bf16.msra.mxu0 %v4225
        %4297 = vmatprep.mubr.bf16.mxu0 %v4070
        %4298 = vmatmul.mubr.bf16.gmra.mxu0 %v4069
        %v4299 = vpop.f32.mrf.mxu0
        %v4300 = vadd.f32 %v4120, %v4299
        %v4301 = vpop.f32.mrf.mxu0
        %v4302 = vpop.f32.mrf.mxu0
        %v4303 = vpop.f32.mrf.mxu0
        %4304 = vdwg.mxu0
        %4305 = vmatprep.subr.bf16.mxu0 0
        %4306 = vmatpush1.bf16.msra.mxu0 %v4240
        %4307 = vmatprep.subr.bf16.mxu0 0
        %4308 = vmatpush1.bf16.msra.mxu0 %v4239
        %4309 = vmatprep.subr.bf16.mxu0 0
        %4310 = vmatpush1.bf16.msra.mxu0 %v4238
        %4311 = vmatprep.subr.bf16.mxu0 0
        %4312 = vmatpush1.bf16.msra.mxu0 %v4237
        %4313 = vmatprep.subr.bf16.mxu0 0
        %4314 = vmatpush1.bf16.msra.mxu0 %v4236
        %4315 = vmatprep.subr.bf16.mxu0 0
        %4316 = vmatpush1.bf16.msra.mxu0 %v4235
        %4317 = vmatprep.subr.bf16.mxu0 0
        %4318 = vmatpush1.bf16.msra.mxu0 %v4234
        %4319 = vmatprep.subr.bf16.mxu0 0
        %4320 = vmatpush1.bf16.msra.mxu0 %v4233
        %4321 = vmatprep.subr.bf16.mxu0 0
        %4322 = vmatpush2.bf16.msra.mxu0 0
        %4323 = vmatprep.subr.bf16.mxu0 0
        %4324 = vmatpush2.bf16.msra.mxu0 0
        %4325 = vmatprep.subr.bf16.mxu0 0
        %4326 = vmatpush2.bf16.msra.mxu0 0
        %4327 = vmatprep.subr.bf16.mxu0 0
        %4328 = vmatpush2.bf16.msra.mxu0 0
        %4329 = vmatprep.subr.bf16.mxu0 0
        %4330 = vmatpush2.bf16.msra.mxu0 0
        %4331 = vmatprep.subr.bf16.mxu0 0
        %4332 = vmatpush2.bf16.msra.mxu0 0
        %4333 = vmatprep.subr.bf16.mxu0 0
        %4334 = vmatpush2.bf16.msra.mxu0 0
        %4335 = vmatprep.subr.bf16.mxu0 0
        %4336 = vmatpush2.bf16.msra.mxu0 0
        %4337 = vmatprep.mubr.bf16.mxu0 0
        %4338 = vmatmul.mubr.bf16.gmra.mxu0 %v4071
        %v4339 = vpop.f32.mrf.mxu0
        %v4340 = vadd.f32 %v4300, %v4339
        %v4341 = vpop.f32.mrf.mxu0
        %v4342 = vpop.f32.mrf.mxu0
        %v4343 = vpop.f32.mrf.mxu0
        %4344 = vdwg.mxu0
        %v4345 = vmax.f32 %v4340, 0.0
        %v4346 = vpack.c.bf16 %v4345, %v4345
        %v4347 = vld [vmem:[%s69] sm:$0xf]
        %v4348 = vld [vmem:[%s69 + $0x4] sm:$0xf]
        %v4349 = vld [vmem:[%s69 + $0x8] sm:$0xf]
        %v4350 = vld [vmem:[%s69 + $0xc] sm:$0xf]
        %v4351 = vld [vmem:[%s69 + $0x10] sm:$0xf]
        %v4352 = vld [vmem:[%s69 + $0x14] sm:$0xf]
        %v4353 = vld [vmem:[%s69 + $0x18] sm:$0xf]
        %v4354 = vld [vmem:[%s69 + $0x1c] sm:$0xf]
        %v4355 = vld [vmem:[%s71] sm:$0x1]
        %v4364 = vunpack.c.l.b16 %v4347
        %v4365 = vunpack.c.l.b16 %v4348
        %v4366 = vunpack.c.l.b16 %v4349
        %v4367 = vunpack.c.l.b16 %v4350
        %v4368 = vunpack.c.l.b16 %v4351
        %v4369 = vunpack.c.l.b16 %v4352
        %v4370 = vunpack.c.l.b16 %v4353
        %v4371 = vunpack.c.l.b16 %v4354
        %v4372 = vpack.c.b16 %v4365, %v4364
        %v4373 = vpack.c.b16 %v4367, %v4366
        %v4374 = vpack.c.b16 %v4369, %v4368
        %v4375 = vpack.c.b16 %v4371, %v4370
        %vm4380 = vcmask 523264
        %v4382 = vsel %vm4380, %v4346, 0
        %4384 = vmatprep.subr.bf16.mxu0 0
        %4385 = vmatpush1.bf16.msra.mxu0 0
        %4386 = vmatprep.subr.bf16.mxu0 0
        %4387 = vmatpush1.bf16.msra.mxu0 0
        %4388 = vmatprep.subr.bf16.mxu0 0
        %4389 = vmatpush1.bf16.msra.mxu0 0
        %4390 = vmatprep.subr.bf16.mxu0 0
        %4391 = vmatpush1.bf16.msra.mxu0 0
        %4392 = vmatprep.subr.bf16.mxu0 0
        %4393 = vmatpush1.bf16.msra.mxu0 %v4375
        %4394 = vmatprep.subr.bf16.mxu0 0
        %4395 = vmatpush1.bf16.msra.mxu0 %v4374
        %4396 = vmatprep.subr.bf16.mxu0 0
        %4397 = vmatpush1.bf16.msra.mxu0 %v4373
        %4398 = vmatprep.subr.bf16.mxu0 0
        %4399 = vmatpush1.bf16.msra.mxu0 %v4372
        %4400 = vmatprep.subr.bf16.mxu0 0
        %4401 = vmatpush2.bf16.msra.mxu0 0
        %4402 = vmatprep.subr.bf16.mxu0 0
        %4403 = vmatpush2.bf16.msra.mxu0 0
        %4404 = vmatprep.subr.bf16.mxu0 0
        %4405 = vmatpush2.bf16.msra.mxu0 0
        %4406 = vmatprep.subr.bf16.mxu0 0
        %4407 = vmatpush2.bf16.msra.mxu0 0
        %4408 = vmatprep.subr.bf16.mxu0 0
        %4409 = vmatpush2.bf16.msra.mxu0 0
        %4410 = vmatprep.subr.bf16.mxu0 0
        %4411 = vmatpush2.bf16.msra.mxu0 0
        %4412 = vmatprep.subr.bf16.mxu0 0
        %4413 = vmatpush2.bf16.msra.mxu0 0
        %4414 = vmatprep.subr.bf16.mxu0 0
        %4415 = vmatpush2.bf16.msra.mxu0 0
        %4416 = vmatprep.mubr.bf16.mxu0 0
        %4417 = vmatmul.mubr.bf16.gmra.mxu0 %v4382
        %v4418 = vpop.f32.mrf.mxu0
        %v4419 = vadd.f32 %v4355, %v4418
        %v4420 = vpop.f32.mrf.mxu0
        %v4421 = vpop.f32.mrf.mxu0
        %v4422 = vpop.f32.mrf.mxu0
        %4423 = vdwg.mxu0
        %4424 = vst [vmem:[%s1479] sm:$0x1] %v4419
        %s4425 = sand.u32 %s904, 1
        %s4426 = scalar_lea.sflag [#allocation5], %s4425
        %s4427 = sand.u32 %s904, 1
        %s4428 = scalar_lea.vmem [#allocation38], %s4427
        // Predicated region
        $region260: #{tpu_custom_call.1} parent=163 // pred_check
          %p4429 = pneg %p914
        $region261: #{tpu_custom_call.1} parent=163 // pred_check_branch
          %4431 = sbr.rel (%p4429) target = $region263
        $region262: #{tpu_custom_call.1} parent=163 // pred_region
          %s4433 = ssub.s32 16, 16
          %4434 = vsyncadd %s4426, %s4433
          %s4435 = smul.addr %s105, 16
          %s4436 = scalar_lea.hbm %s73, %s4435
          %s4438 = sshll.u32 %s4428, 4
          %s4439 = int_to_ptr.vmem [resolvable:$true] %s4438
          %4441 = dma.vmem_to_hbm [thread:$0]  %s4439, 16, %s4436, %s4426
        $region263: #{tpu_custom_call.1} parent=163 // pred_fallthru
          _
      $region164: #{tpu_custom_call.1} parent=5 // pred_fallthru
        _
      %p4442 = scmp.le.s32.totalorder 2, %s100
      // Predicated region
      $region264: #{tpu_custom_call.1} parent=5 // pred_check
        %p4443 = pneg %p4442
      $region265: #{tpu_custom_call.1} parent=5 // pred_check_branch
        %4445 = sbr.rel (%p4443) target = $region267
      $region266: #{tpu_custom_call.1} parent=5 // pred_region
        %s4446 = ssub.s32 %s100, 2
        // Predicated region
        $region268: #{tpu_custom_call.1} parent=266 // pred_check
          %p4447 = pneg %p920
        $region269: #{tpu_custom_call.1} parent=266 // pred_check_branch
          %4449 = sbr.rel (%p4447) target = $region271
        $region270: #{tpu_custom_call.1} parent=266 // pred_region
          %s4450 = sand.u32 %s905, 1
          %s4451 = scalar_lea.sflag [#allocation5], %s4450
          %s4452 = sand.u32 %s905, 1
          %s4453 = scalar_lea.vmem [#allocation38], %s4452
          %4454 = dma.done %s4451, 16
        $region271: #{tpu_custom_call.1} parent=266 // pred_fallthru
          _
      $region267: #{tpu_custom_call.1} parent=5 // pred_fallthru
        _
    $region6: #{tpu_custom_call.1} parent=1 // loop_footer
      %s104 = sadd.s32 1, %s100
    $region7: #{tpu_custom_call.1} parent=1 // loop_footer_branch
      %99 = sbr.rel target = $region3
    $region8: #{tpu_custom_call.1} parent=1 // loop_exit
      _
    %4455 = vsyncpa [#allocation4], 1
    %s4456 = scalar_lea.sflag [#allocation4], 1
    %4457 = vsyncpa %s4456, 1
    %4458 = vsyncpa [#allocation7], 1
    %s4459 = scalar_lea.sflag [#allocation7], 1
    %4460 = vsyncpa %s4459, 1
    %4461 = vsyncpa [#allocation10], 1
    %4462 = vsyncpa [#allocation13], 1
    %4463 = vsyncpa [#allocation16], 1
    %4464 = vsyncpa [#allocation19], 1
    %4465 = vsyncpa [#allocation22], 1
    %4466 = vsyncpa [#allocation25], 1
    %4467 = vsyncpa [#allocation28], 1
    %4468 = vsyncpa [#allocation31], 1
    %4469 = vsyncpa [#allocation34], 1
    %4470 = vsyncpa [#allocation37], 1
    %4471 = vsyncpa [#allocation5], 1
    %s4472 = scalar_lea.sflag [#allocation5], 1
    %4473 = vsyncpa %s4472, 1

</llo_original>
